<compile_context>
chip_gen: v7x
topology: tpu7x:2x2x1
jax: 0.10.0
libtpu: 0.0.40
codegen_flags: <defaults>
</compile_context>

<pallas_src>
import functools

import jax
import jax.numpy as jnp
from jax.experimental import pallas as pl
from jax.experimental.pallas import tpu as pltpu

_VMEM_LIMIT = 48 * 1024 * 1024


# ------------------------------ helpers ------------------------------------


def _round_up(x, m):
    return ((x + m - 1) // m) * m


def _rows_plan(M, block_m):
    """Row tile tm and padded row count Mp (multiple of tm).

    Never returns a single full-M mega-block for large M: if no clean divisor
    of M exists we pad rows up to a multiple of block_m instead.
    """
    block_m = max(8, block_m - block_m % 8)
    if M <= block_m:
        tm = _round_up(max(M, 1), 8)
        return tm, tm
    if M % block_m == 0:
        return block_m, M
    t = block_m
    while t >= 64:
        if M % t == 0:
            return t, M
        t -= 8
    return block_m, _round_up(M, block_m)


def _pad_rows(x, Mp):
    M = x.shape[0]
    if Mp == M:
        return x
    pad = [(0, Mp - M)] + [(0, 0)] * (x.ndim - 1)
    return jnp.pad(x, pad)


def _pick_seq_tile(N, target):
    if N <= target:
        return N
    t = target - target % 8
    while t >= 8:
        if N % t == 0:
            return t
        t -= 8
    # TODO(synk): pad + mask the query axis for node counts with no multiple-
    # of-8 divisor; fall back to a single full-N query block.
    return N


def _pick_batch_tile(B):
    """Smallest-reasonable batch tile giving >=2 grid steps when possible."""
    if B <= 1:
        return 1
    for t in (8, 4, 2, 1):
        if t <= B // 2 and B % t == 0:
            return t
    return 1


def _ln_f32(x, g, b, eps):
    mu = jnp.mean(x, axis=-1, keepdims=True)
    var = jnp.mean(jnp.square(x - mu), axis=-1, keepdims=True)
    return (x - mu) * jax.lax.rsqrt(var + eps) * g + b


def _params(semantics):
    return pltpu.CompilerParams(dimension_semantics=semantics,
                                vmem_limit_bytes=_VMEM_LIMIT)


# --------------------------- Pallas kernels ---------------------------------


def _linear_kernel(x_ref, w_ref, b_ref, o_ref):
    y = jnp.dot(x_ref[...], w_ref[...], preferred_element_type=jnp.float32)
    o_ref[...] = (y + b_ref[...].astype(jnp.float32)).astype(o_ref.dtype)


def linear(x, w, b, *, block_m=512):
    """x: [M, K] (bf16), w: [K, N] (bf16), b: [N] (f32) -> [M, N] bf16."""
    M, K = x.shape
    _, N = w.shape
    tm, Mp = _rows_plan(M, block_m)
    xp = _pad_rows(x, Mp)
    out = pl.pallas_call(
        _linear_kernel,
        out_shape=jax.ShapeDtypeStruct((Mp, N), x.dtype),
        grid=(Mp // tm,),
        in_specs=[
            pl.BlockSpec((tm, K), lambda i: (i, 0)),
            pl.BlockSpec((K, N), lambda i: (0, 0)),
            pl.BlockSpec((1, N), lambda i: (0, 0)),
        ],
        out_specs=pl.BlockSpec((tm, N), lambda i: (i, 0)),
        compiler_params=_params(("parallel",)),
    )(xp, w, b.reshape(1, N))
    return out[:M] if Mp != M else out


def _ln_linear_kernel(x_ref, g_ref, beta_ref, w_ref, b_ref, o_ref, *, eps):
    x = x_ref[...].astype(jnp.float32)
    xn = _ln_f32(x, g_ref[...].astype(jnp.float32),
                 beta_ref[...].astype(jnp.float32), eps)
    y = jnp.dot(xn.astype(w_ref.dtype), w_ref[...],
                preferred_element_type=jnp.float32)
    o_ref[...] = (y + b_ref[...].astype(jnp.float32)).astype(o_ref.dtype)


def ln_linear(x, g, beta, w, b, *, eps=1e-5, block_m=512):
    """LayerNorm(x) @ w + b, fused.  x: [M, D], w: [D, N]."""
    M, D = x.shape
    _, N = w.shape
    tm, Mp = _rows_plan(M, block_m)
    xp = _pad_rows(x, Mp)
    kern = functools.partial(_ln_linear_kernel, eps=eps)
    out = pl.pallas_call(
        kern,
        out_shape=jax.ShapeDtypeStruct((Mp, N), x.dtype),
        grid=(Mp // tm,),
        in_specs=[
            pl.BlockSpec((tm, D), lambda i: (i, 0)),
            pl.BlockSpec((1, D), lambda i: (0, 0)),
            pl.BlockSpec((1, D), lambda i: (0, 0)),
            pl.BlockSpec((D, N), lambda i: (0, 0)),
            pl.BlockSpec((1, N), lambda i: (0, 0)),
        ],
        out_specs=pl.BlockSpec((tm, N), lambda i: (i, 0)),
        compiler_params=_params(("parallel",)),
    )(xp, g.reshape(1, D), beta.reshape(1, D), w, b.reshape(1, N))
    return out[:M] if Mp != M else out


def _attn_kernel(q_ref, k_ref, v_ref, o_ref, acc_ref, *, n_heads, scale):
    d = q_ref.shape[-1]
    hd = d // n_heads
    # Fold the softmax scale into q once ([tq, D] VPU work instead of a
    # per-head [tq, N] multiply), then keep bf16 operands for the MXU.
    q = (q_ref[0].astype(jnp.float32) * scale).astype(k_ref.dtype)  # [tq, D]
    k = k_ref[0]                                                     # [N, D]
    v = v_ref[0]                                                     # [N, D]
    for h in range(n_heads):
        sl = slice(h * hd, (h + 1) * hd)
        s = jax.lax.dot_general(q[:, sl], k[:, sl], (((1,), (1,)), ((), ())),
                                preferred_element_type=jnp.float32)  # [tq, N]
        mx = jnp.max(s, axis=-1, keepdims=True)
        p = jnp.exp(s - mx)
        inv = 1.0 / jnp.sum(p, axis=-1, keepdims=True)   # exact softmax denom
        p = p * inv
        acc_ref[:, sl] = jnp.dot(p.astype(v.dtype), v[:, sl],
                                 preferred_element_type=jnp.float32)
    # One lane-dense (full-D) store per q-block.
    o_ref[0] = acc_ref[...].astype(o_ref.dtype)


def attention(qkv, n_heads, *, block_q=128):
    """qkv: [B, N, 3*D] (fused q|k|v along the lane axis) -> [B, N, D]."""
    B, N, three_d = qkv.shape
    d = three_d // 3
    assert d % n_heads == 0
    hd = d // n_heads
    tq = _pick_seq_tile(N, block_q)
    scale = 1.0 / float(hd) ** 0.5
    kern = functools.partial(_attn_kernel, n_heads=n_heads, scale=scale)
    # qkv is passed three times; the q view tiles over query blocks while the
    # K and V views select constant lane-blocks 1 and 2 for the full sequence
    # (constant index in qi -> fetched once per batch row).
    return pl.pallas_call(
        kern,
        out_shape=jax.ShapeDtypeStruct((B, N, d), qkv.dtype),
        grid=(B, N // tq),
        in_specs=[
            pl.BlockSpec((1, tq, d), lambda b, qi: (b, qi, 0)),
            pl.BlockSpec((1, N, d), lambda b, qi: (b, 0, 1)),
            pl.BlockSpec((1, N, d), lambda b, qi: (b, 0, 2)),
        ],
        out_specs=pl.BlockSpec((1, tq, d), lambda b, qi: (b, qi, 0)),
        scratch_shapes=[pltpu.VMEM((tq, d), jnp.float32)],
        compiler_params=_params(("parallel", "parallel")),
    )(qkv, qkv, qkv)


def _proj_mlp_kernel(a_ref, wo_ref, bo_ref, h_ref, g_ref, beta_ref,
                     w1_ref, b1_ref, w2_ref, b2_ref, o_ref, *, eps):
    # h1 = h + attn @ Wo + bo        (attention residual)
    y = jnp.dot(a_ref[...], wo_ref[...], preferred_element_type=jnp.float32)
    h1 = y + bo_ref[...].astype(jnp.float32) + h_ref[...].astype(jnp.float32)
    # out = h1 + W2(GELU(W1(LN(h1))))  (MLP residual)
    xn = _ln_f32(h1, g_ref[...].astype(jnp.float32),
                 beta_ref[...].astype(jnp.float32), eps)
    m = jnp.dot(xn.astype(w1_ref.dtype), w1_ref[...],
                preferred_element_type=jnp.float32)
    m = jax.nn.gelu(m + b1_ref[...].astype(jnp.float32))
    m = jnp.dot(m.astype(w2_ref.dtype), w2_ref[...],
                preferred_element_type=jnp.float32)
    o_ref[...] = (h1 + m + b2_ref[...].astype(jnp.float32)).astype(o_ref.dtype)


def attn_out_mlp_block(a, wo, bo, h, g, beta, w1, b1, w2, b2, *, eps=1e-5,
                       block_m=512):
    """Fused Wo-projection + residual + LN2 + MLP + residual (one call)."""
    M, D = h.shape
    _, F = w1.shape
    tm, Mp = _rows_plan(M, block_m)
    ap = _pad_rows(a, Mp)
    hp = _pad_rows(h, Mp)
    kern = functools.partial(_proj_mlp_kernel, eps=eps)
    out = pl.pallas_call(
        kern,
        out_shape=jax.ShapeDtypeStruct((Mp, D), h.dtype),
        grid=(Mp // tm,),
        in_specs=[
            pl.BlockSpec((tm, D), lambda i: (i, 0)),
            pl.BlockSpec((D, D), lambda i: (0, 0)),
            pl.BlockSpec((1, D), lambda i: (0, 0)),
            pl.BlockSpec((tm, D), lambda i: (i, 0)),
            pl.BlockSpec((1, D), lambda i: (0, 0)),
            pl.BlockSpec((1, D), lambda i: (0, 0)),
            pl.BlockSpec((D, F), lambda i: (0, 0)),
            pl.BlockSpec((1, F), lambda i: (0, 0)),
            pl.BlockSpec((F, D), lambda i: (0, 0)),
            pl.BlockSpec((1, D), lambda i: (0, 0)),
        ],
        out_specs=pl.BlockSpec((tm, D), lambda i: (i, 0)),
        compiler_params=_params(("parallel",)),
    )(ap, wo, bo.reshape(1, D), hp, g.reshape(1, D), beta.reshape(1, D),
      w1, b1.reshape(1, F), w2, b2.reshape(1, D))
    return out[:M] if Mp != M else out


def _ln_pool_proj_kernel(h_ref, g_ref, beta_ref, w_ref, b_ref, o_ref,
                         *, eps, l2_eps):
    h = h_ref[...].astype(jnp.float32)                      # [tb, N, D]
    xn = _ln_f32(h, g_ref[...].astype(jnp.float32),
                 beta_ref[...].astype(jnp.float32), eps)
    pooled = jnp.mean(xn, axis=1)                           # [tb, D]
    z = jnp.dot(pooled.astype(w_ref.dtype), w_ref[...],
                preferred_element_type=jnp.float32)
    z = z + b_ref[...].astype(jnp.float32)                  # [tb, P]
    inv = jax.lax.rsqrt(jnp.sum(z * z, axis=-1, keepdims=True) + l2_eps)
    o_ref[...] = (z * inv)[:, None, :].astype(o_ref.dtype)  # [tb, 1, P]


def ln_pool_project_normalize(h3, g, beta, w, b, *, eps=1e-5, l2_eps=1e-12):
    """Final LN -> mean over nodes -> projection -> L2 normalize, fused.

    The output is kept 3-D ([B, 1, P]) so the batch axis can be tiled with
    tb < 8 (>=2 grid steps even for tiny B) without violating the (8, 128)
    block-shape constraint on the last two dims.
    """
    B, N, D = h3.shape
    _, P = w.shape
    tb = _pick_batch_tile(B)
    kern = functools.partial(_ln_pool_proj_kernel, eps=eps, l2_eps=l2_eps)
    out = pl.pallas_call(
        kern,
        out_shape=jax.ShapeDtypeStruct((B, 1, P), jnp.float32),
        grid=(B // tb,),
        in_specs=[
            pl.BlockSpec((tb, N, D), lambda i: (i, 0, 0)),
            pl.BlockSpec((1, D), lambda i: (0, 0)),
            pl.BlockSpec((1, D), lambda i: (0, 0)),
            pl.BlockSpec((D, P), lambda i: (0, 0)),
            pl.BlockSpec((1, P), lambda i: (0, 0)),
        ],
        out_specs=pl.BlockSpec((tb, 1, P), lambda i: (i, 0, 0)),
        compiler_params=_params(("parallel",)),
    )(h3, g.reshape(1, D), beta.reshape(1, D), w, b.reshape(1, P))
    return out.reshape(B, P)


# --------------------------- model (glue / params) ---------------------------


def init_params(key, f_in, d_model, d_ff, d_proj, n_layers):
    def dense(k, fan_in, fan_out):
        scale = 1.0 / jnp.sqrt(jnp.float32(fan_in))
        w = jax.random.normal(k, (fan_in, fan_out), jnp.float32) * scale
        # Weights feed the MXU -> bf16; biases / LN params stay f32.
        return w.astype(jnp.bfloat16), jnp.zeros((fan_out,), jnp.float32)

    keys = jax.random.split(key, 2 + 4 * n_layers)
    params = {}
    params["embed_w"], params["embed_b"] = dense(keys[0], f_in, d_model)
    params["layers"] = []
    for l in range(n_layers):
        k0, k1, k2, k3 = keys[2 + 4 * l: 6 + 4 * l]
        wqkv, bqkv = dense(k0, d_model, 3 * d_model)
        wo, bo = dense(k1, d_model, d_model)
        w1, b1 = dense(k2, d_model, d_ff)
        w2, b2 = dense(k3, d_ff, d_model)
        params["layers"].append({
            "ln1_g": jnp.ones((d_model,), jnp.float32),
            "ln1_b": jnp.zeros((d_model,), jnp.float32),
            "wqkv": wqkv, "bqkv": bqkv, "wo": wo, "bo": bo,
            "ln2_g": jnp.ones((d_model,), jnp.float32),
            "ln2_b": jnp.zeros((d_model,), jnp.float32),
            "w1": w1, "b1": b1, "w2": w2, "b2": b2,
        })
    params["lnf_g"] = jnp.ones((d_model,), jnp.float32)
    params["lnf_b"] = jnp.zeros((d_model,), jnp.float32)
    params["proj_w"], params["proj_b"] = dense(keys[1], d_model, d_proj)
    return params


def encode_graph(params, x, *, n_heads, block_m=512, block_q=128):
    """GCLIP.forward == GraphCLIP.encode_graph.  x: [B, N, F_in] node feats."""
    B, N, f_in = x.shape
    d_model = params["embed_w"].shape[1]
    M = B * N

    # Node-feature embedding (bf16 activations from here on).
    h = linear(x.reshape(M, f_in).astype(jnp.bfloat16),
               params["embed_w"], params["embed_b"], block_m=block_m)

    for lp in params["layers"]:
        # LN1 + fused QKV projection (one call, row-tiled).
        qkv = ln_linear(h, lp["ln1_g"], lp["ln1_b"], lp["wqkv"], lp["bqkv"],
                        block_m=block_m)                        # [M, 3D]
        # Flash-style q-tiled multi-head attention (one call).
        a = attention(qkv.reshape(B, N, 3 * d_model), n_heads,
                      block_q=block_q)                          # [B, N, D]
        # Wo proj + residual + LN2 + MLP + residual (one fused call).
        h = attn_out_mlp_block(a.reshape(M, d_model), lp["wo"], lp["bo"], h,
                               lp["ln2_g"], lp["ln2_b"],
                               lp["w1"], lp["b1"], lp["w2"], lp["b2"],
                               block_m=block_m)

    # Final LN -> mean pool over nodes -> project -> L2 normalize (fused).
    return ln_pool_project_normalize(h.reshape(B, N, d_model),
                                     params["lnf_g"], params["lnf_b"],
                                     params["proj_w"], params["proj_b"])


# --------------------------------- driver -----------------------------------


if __name__ == "__main__":
    # Small, module-consistent shapes (full model: d_model=384, 12 heads,
    # proj=1024, 12 layers; scaled down here for a synthetic run).
    B, N, F_IN = 2, 64, 32
    D_MODEL, N_HEADS, D_FF, D_PROJ, N_LAYERS = 128, 4, 512, 256, 2

    root = jax.random.PRNGKey(0)
    k_params, k_x = jax.random.split(root)
    params = init_params(k_params, F_IN, D_MODEL, D_FF, D_PROJ, N_LAYERS)
    x = jax.random.normal(k_x, (B, N, F_IN), jnp.float32)

    # block_m=64 / block_q=32 so every kernel runs a real multi-step
    # (pipelined) grid even at these small test shapes.
    fwd = jax.jit(functools.partial(encode_graph, n_heads=N_HEADS,
                                    block_m=64, block_q=32))
    out = jax.block_until_ready(fwd(params, x))

    assert out.shape == (B, D_PROJ), out.shape
    assert bool(jnp.all(jnp.isfinite(out)))
    norms = jnp.sqrt(jnp.sum(out * out, axis=-1))
    assert bool(jnp.all(jnp.abs(norms - 1.0) < 1e-3))
    print("KERNEL_OK")
</pallas_src>

<mosaic_0001>
module attributes {stable_mosaic.version = 11 : i64} {
  func.func @_linear_kernel(%arg0: i32, %arg1: memref<64x32xbf16, #tpu.memory_space<vmem>>, %arg2: memref<32x128xbf16, #tpu.memory_space<vmem>>, %arg3: memref<1x128xf32, #tpu.memory_space<vmem>>, %arg4: memref<64x128xbf16, #tpu.memory_space<vmem>>) attributes {dimension_semantics = [#tpu.dimension_semantics<parallel>], iteration_bounds = array<i64: 2>, scalar_prefetch = 0 : i64, scratch_operands = 0 : i64, tpu.core_type = #tpu.core_type<tc>, window_params = [{transform_indices = @transform_0, window_bounds = array<i64: 64, 32>}, {pipeline_mode = #tpu.pipeline_mode<synchronous>, transform_indices = @transform_1, window_bounds = array<i64: 32, 128>}, {pipeline_mode = #tpu.pipeline_mode<synchronous>, transform_indices = @transform_2, window_bounds = array<i64: 1, 128>}, {transform_indices = @transform_3, window_bounds = array<i64: 64, 128>}]} {
    %c0 = arith.constant 0 : index
    %c0_0 = arith.constant 0 : index
    %0 = vector.load %arg1[%c0, %c0_0] : memref<64x32xbf16, #tpu.memory_space<vmem>>, vector<64x32xbf16>
    %c0_1 = arith.constant 0 : index
    %c0_2 = arith.constant 0 : index
    %1 = vector.load %arg2[%c0_1, %c0_2] : memref<32x128xbf16, #tpu.memory_space<vmem>>, vector<32x128xbf16>
    %cst = arith.constant dense<0.000000e+00> : vector<64x128xf32>
    %2 = tpu.matmul %0, %1, %cst {dimension_numbers = #tpu.dot_dimension_numbers<[1], [0], [0], [1], [0, 0, 1, 1], [], []>} : vector<64x32xbf16>, vector<32x128xbf16>, vector<64x128xf32> -> vector<64x128xf32>
    %c0_3 = arith.constant 0 : index
    %c0_4 = arith.constant 0 : index
    %3 = vector.load %arg3[%c0_3, %c0_4] : memref<1x128xf32, #tpu.memory_space<vmem>>, vector<1x128xf32>
    %4 = vector.broadcast %3 : vector<1x128xf32> to vector<64x128xf32>
    %5 = arith.addf %2, %4 : vector<64x128xf32>
    %6 = arith.truncf %5 : vector<64x128xf32> to vector<64x128xbf16>
    %c0_5 = arith.constant 0 : index
    %c0_6 = arith.constant 0 : index
    %7 = vector.load %arg4[%c0_5, %c0_6] : memref<64x128xbf16, #tpu.memory_space<vmem>>, vector<64x128xbf16>
    tpu.vector_store %arg4[%c0_5, %c0_6], %6 {strides = array<i32>} : memref<64x128xbf16, #tpu.memory_space<vmem>>, vector<64x128xbf16>,
    return
  }
  func.func @transform_0(%arg0: i32) -> (i32, i32) {
    %c0_i32 = arith.constant 0 : i32
    %c0_i32_0 = arith.constant 0 : i32
    return %arg0, %c0_i32 : i32, i32
  }
  func.func @transform_1(%arg0: i32) -> (i32, i32) {
    %c0_i32 = arith.constant 0 : i32
    %c0_i32_0 = arith.constant 0 : i32
    %c0_i32_1 = arith.constant 0 : i32
    return %c0_i32, %c0_i32_0 : i32, i32
  }
  func.func @transform_2(%arg0: i32) -> (i32, i32) {
    %c0_i32 = arith.constant 0 : i32
    %c0_i32_0 = arith.constant 0 : i32
    %c0_i32_1 = arith.constant 0 : i32
    return %c0_i32, %c0_i32_0 : i32, i32
  }
  func.func @transform_3(%arg0: i32) -> (i32, i32) {
    %c0_i32 = arith.constant 0 : i32
    %c0_i32_0 = arith.constant 0 : i32
    return %arg0, %c0_i32 : i32, i32
  }
}

module attributes {stable_mosaic.version = 11 : i64} {
  func.func @_ln_linear_kernel(%arg0: i32, %arg1: memref<64x128xbf16, #tpu.memory_space<vmem>>, %arg2: memref<1x128xf32, #tpu.memory_space<vmem>>, %arg3: memref<1x128xf32, #tpu.memory_space<vmem>>, %arg4: memref<128x384xbf16, #tpu.memory_space<vmem>>, %arg5: memref<1x384xf32, #tpu.memory_space<vmem>>, %arg6: memref<64x384xbf16, #tpu.memory_space<vmem>>) attributes {dimension_semantics = [#tpu.dimension_semantics<parallel>], iteration_bounds = array<i64: 2>, scalar_prefetch = 0 : i64, scratch_operands = 0 : i64, tpu.core_type = #tpu.core_type<tc>, window_params = [{transform_indices = @transform_0, window_bounds = array<i64: 64, 128>}, {pipeline_mode = #tpu.pipeline_mode<synchronous>, transform_indices = @transform_1, window_bounds = array<i64: 1, 128>}, {pipeline_mode = #tpu.pipeline_mode<synchronous>, transform_indices = @transform_2, window_bounds = array<i64: 1, 128>}, {pipeline_mode = #tpu.pipeline_mode<synchronous>, transform_indices = @transform_3, window_bounds = array<i64: 128, 384>}, {pipeline_mode = #tpu.pipeline_mode<synchronous>, transform_indices = @transform_4, window_bounds = array<i64: 1, 384>}, {transform_indices = @transform_5, window_bounds = array<i64: 64, 384>}]} {
    %c0 = arith.constant 0 : index
    %c0_0 = arith.constant 0 : index
    %0 = vector.load %arg1[%c0, %c0_0] : memref<64x128xbf16, #tpu.memory_space<vmem>>, vector<64x128xbf16>
    %1 = arith.extf %0 : vector<64x128xbf16> to vector<64x128xf32>
    %c0_1 = arith.constant 0 : index
    %c0_2 = arith.constant 0 : index
    %2 = vector.load %arg2[%c0_1, %c0_2] : memref<1x128xf32, #tpu.memory_space<vmem>>, vector<1x128xf32>
    %c0_3 = arith.constant 0 : index
    %c0_4 = arith.constant 0 : index
    %3 = vector.load %arg3[%c0_3, %c0_4] : memref<1x128xf32, #tpu.memory_space<vmem>>, vector<1x128xf32>
    %cst = arith.constant dense<0.000000e+00> : vector<64xf32>
    %4 = vector.multi_reduction <add>, %1, %cst [1] : vector<64x128xf32> to vector<64xf32>
    %5 = vector.shape_cast %4 : vector<64xf32> to vector<64x1xf32>
    %cst_5 = arith.constant 1.280000e+02 : f32
    %6 = vector.broadcast %cst_5 : f32 to vector<64x1xf32>
    %7 = arith.divf %5, %6 : vector<64x1xf32>
    %8 = vector.broadcast %7 : vector<64x1xf32> to vector<64x128xf32>
    %9 = arith.subf %1, %8 : vector<64x128xf32>
    %10 = arith.mulf %9, %9 : vector<64x128xf32>
    %cst_6 = arith.constant dense<0.000000e+00> : vector<64xf32>
    %11 = vector.multi_reduction <add>, %10, %cst_6 [1] : vector<64x128xf32> to vector<64xf32>
    %12 = vector.shape_cast %11 : vector<64xf32> to vector<64x1xf32>
    %cst_7 = arith.constant 1.280000e+02 : f32
    %13 = vector.broadcast %cst_7 : f32 to vector<64x1xf32>
    %14 = arith.divf %12, %13 : vector<64x1xf32>
    %15 = vector.broadcast %7 : vector<64x1xf32> to vector<64x128xf32>
    %16 = arith.subf %1, %15 : vector<64x128xf32>
    %cst_8 = arith.constant 9.99999974E-6 : f32
    %17 = vector.broadcast %cst_8 : f32 to vector<64x1xf32>
    %18 = arith.addf %14, %17 : vector<64x1xf32>
    %19 = math.rsqrt %18 : vector<64x1xf32>
    %20 = vector.broadcast %19 : vector<64x1xf32> to vector<64x128xf32>
    %21 = arith.mulf %16, %20 : vector<64x128xf32>
    %22 = vector.broadcast %2 : vector<1x128xf32> to vector<64x128xf32>
    %23 = arith.mulf %21, %22 : vector<64x128xf32>
    %24 = vector.broadcast %3 : vector<1x128xf32> to vector<64x128xf32>
    %25 = arith.addf %23, %24 : vector<64x128xf32>
    %26 = arith.truncf %25 : vector<64x128xf32> to vector<64x128xbf16>
    %c0_9 = arith.constant 0 : index
    %c0_10 = arith.constant 0 : index
    %27 = vector.load %arg4[%c0_9, %c0_10] : memref<128x384xbf16, #tpu.memory_space<vmem>>, vector<128x384xbf16>
    %cst_11 = arith.constant dense<0.000000e+00> : vector<64x384xf32>
    %28 = tpu.matmul %26, %27, %cst_11 {dimension_numbers = #tpu.dot_dimension_numbers<[1], [0], [0], [1], [0, 0, 1, 1], [], []>} : vector<64x128xbf16>, vector<128x384xbf16>, vector<64x384xf32> -> vector<64x384xf32>
    %c0_12 = arith.constant 0 : index
    %c0_13 = arith.constant 0 : index
    %29 = vector.load %arg5[%c0_12, %c0_13] : memref<1x384xf32, #tpu.memory_space<vmem>>, vector<1x384xf32>
    %30 = vector.broadcast %29 : vector<1x384xf32> to vector<64x384xf32>
    %31 = arith.addf %28, %30 : vector<64x384xf32>
    %32 = arith.truncf %31 : vector<64x384xf32> to vector<64x384xbf16>
    %c0_14 = arith.constant 0 : index
    %c0_15 = arith.constant 0 : index
    %33 = vector.load %arg6[%c0_14, %c0_15] : memref<64x384xbf16, #tpu.memory_space<vmem>>, vector<64x384xbf16>
    tpu.vector_store %arg6[%c0_14, %c0_15], %32 {strides = array<i32>} : memref<64x384xbf16, #tpu.memory_space<vmem>>, vector<64x384xbf16>,
    return
  }
  func.func @transform_0(%arg0: i32) -> (i32, i32) {
    %c0_i32 = arith.constant 0 : i32
    %c0_i32_0 = arith.constant 0 : i32
    return %arg0, %c0_i32 : i32, i32
  }
  func.func @transform_1(%arg0: i32) -> (i32, i32) {
    %c0_i32 = arith.constant 0 : i32
    %c0_i32_0 = arith.constant 0 : i32
    %c0_i32_1 = arith.constant 0 : i32
    return %c0_i32, %c0_i32_0 : i32, i32
  }
  func.func @transform_2(%arg0: i32) -> (i32, i32) {
    %c0_i32 = arith.constant 0 : i32
    %c0_i32_0 = arith.constant 0 : i32
    %c0_i32_1 = arith.constant 0 : i32
    return %c0_i32, %c0_i32_0 : i32, i32
  }
  func.func @transform_3(%arg0: i32) -> (i32, i32) {
    %c0_i32 = arith.constant 0 : i32
    %c0_i32_0 = arith.constant 0 : i32
    %c0_i32_1 = arith.constant 0 : i32
    return %c0_i32, %c0_i32_0 : i32, i32
  }
  func.func @transform_4(%arg0: i32) -> (i32, i32) {
    %c0_i32 = arith.constant 0 : i32
    %c0_i32_0 = arith.constant 0 : i32
    %c0_i32_1 = arith.constant 0 : i32
    return %c0_i32, %c0_i32_0 : i32, i32
  }
  func.func @transform_5(%arg0: i32) -> (i32, i32) {
    %c0_i32 = arith.constant 0 : i32
    %c0_i32_0 = arith.constant 0 : i32
    return %arg0, %c0_i32 : i32, i32
  }
}

module attributes {stable_mosaic.version = 11 : i64} {
  func.func @_proj_mlp_kernel(%arg0: i32, %arg1: memref<64x128xbf16, #tpu.memory_space<vmem>>, %arg2: memref<128x128xbf16, #tpu.memory_space<vmem>>, %arg3: memref<1x128xf32, #tpu.memory_space<vmem>>, %arg4: memref<64x128xbf16, #tpu.memory_space<vmem>>, %arg5: memref<1x128xf32, #tpu.memory_space<vmem>>, %arg6: memref<1x128xf32, #tpu.memory_space<vmem>>, %arg7: memref<128x512xbf16, #tpu.memory_space<vmem>>, %arg8: memref<1x512xf32, #tpu.memory_space<vmem>>, %arg9: memref<512x128xbf16, #tpu.memory_space<vmem>>, %arg10: memref<1x128xf32, #tpu.memory_space<vmem>>, %arg11: memref<64x128xbf16, #tpu.memory_space<vmem>>) attributes {dimension_semantics = [#tpu.dimension_semantics<parallel>], iteration_bounds = array<i64: 2>, scalar_prefetch = 0 : i64, scratch_operands = 0 : i64, tpu.core_type = #tpu.core_type<tc>, window_params = [{transform_indices = @transform_0, window_bounds = array<i64: 64, 128>}, {pipeline_mode = #tpu.pipeline_mode<synchronous>, transform_indices = @transform_1, window_bounds = array<i64: 128, 128>}, {pipeline_mode = #tpu.pipeline_mode<synchronous>, transform_indices = @transform_2, window_bounds = array<i64: 1, 128>}, {transform_indices = @transform_3, window_bounds = array<i64: 64, 128>}, {pipeline_mode = #tpu.pipeline_mode<synchronous>, transform_indices = @transform_4, window_bounds = array<i64: 1, 128>}, {pipeline_mode = #tpu.pipeline_mode<synchronous>, transform_indices = @transform_5, window_bounds = array<i64: 1, 128>}, {pipeline_mode = #tpu.pipeline_mode<synchronous>, transform_indices = @transform_6, window_bounds = array<i64: 128, 512>}, {pipeline_mode = #tpu.pipeline_mode<synchronous>, transform_indices = @transform_7, window_bounds = array<i64: 1, 512>}, {pipeline_mode = #tpu.pipeline_mode<synchronous>, transform_indices = @transform_8, window_bounds = array<i64: 512, 128>}, {pipeline_mode = #tpu.pipeline_mode<synchronous>, transform_indices = @transform_9, window_bounds = array<i64: 1, 128>}, {transform_indices = @transform_10, window_bounds = array<i64: 64, 128>}]} {
    %c0 = arith.constant 0 : index
    %c0_0 = arith.constant 0 : index
    %0 = vector.load %arg1[%c0, %c0_0] : memref<64x128xbf16, #tpu.memory_space<vmem>>, vector<64x128xbf16>
    %c0_1 = arith.constant 0 : index
    %c0_2 = arith.constant 0 : index
    %1 = vector.load %arg2[%c0_1, %c0_2] : memref<128x128xbf16, #tpu.memory_space<vmem>>, vector<128x128xbf16>
    %cst = arith.constant dense<0.000000e+00> : vector<64x128xf32>
    %2 = tpu.matmul %0, %1, %cst {dimension_numbers = #tpu.dot_dimension_numbers<[1], [0], [0], [1], [0, 0, 1, 1], [], []>} : vector<64x128xbf16>, vector<128x128xbf16>, vector<64x128xf32> -> vector<64x128xf32>
    %c0_3 = arith.constant 0 : index
    %c0_4 = arith.constant 0 : index
    %3 = vector.load %arg3[%c0_3, %c0_4] : memref<1x128xf32, #tpu.memory_space<vmem>>, vector<1x128xf32>
    %4 = vector.broadcast %3 : vector<1x128xf32> to vector<64x128xf32>
    %5 = arith.addf %2, %4 : vector<64x128xf32>
    %c0_5 = arith.constant 0 : index
    %c0_6 = arith.constant 0 : index
    %6 = vector.load %arg4[%c0_5, %c0_6] : memref<64x128xbf16, #tpu.memory_space<vmem>>, vector<64x128xbf16>
    %7 = arith.extf %6 : vector<64x128xbf16> to vector<64x128xf32>
    %8 = arith.addf %5, %7 : vector<64x128xf32>
    %c0_7 = arith.constant 0 : index
    %c0_8 = arith.constant 0 : index
    %9 = vector.load %arg5[%c0_7, %c0_8] : memref<1x128xf32, #tpu.memory_space<vmem>>, vector<1x128xf32>
    %c0_9 = arith.constant 0 : index
    %c0_10 = arith.constant 0 : index
    %10 = vector.load %arg6[%c0_9, %c0_10] : memref<1x128xf32, #tpu.memory_space<vmem>>, vector<1x128xf32>
    %cst_11 = arith.constant dense<0.000000e+00> : vector<64xf32>
    %11 = vector.multi_reduction <add>, %8, %cst_11 [1] : vector<64x128xf32> to vector<64xf32>
    %12 = vector.shape_cast %11 : vector<64xf32> to vector<64x1xf32>
    %cst_12 = arith.constant 1.280000e+02 : f32
    %13 = vector.broadcast %cst_12 : f32 to vector<64x1xf32>
    %14 = arith.divf %12, %13 : vector<64x1xf32>
    %15 = vector.broadcast %14 : vector<64x1xf32> to vector<64x128xf32>
    %16 = arith.subf %8, %15 : vector<64x128xf32>
    %17 = arith.mulf %16, %16 : vector<64x128xf32>
    %cst_13 = arith.constant dense<0.000000e+00> : vector<64xf32>
    %18 = vector.multi_reduction <add>, %17, %cst_13 [1] : vector<64x128xf32> to vector<64xf32>
    %19 = vector.shape_cast %18 : vector<64xf32> to vector<64x1xf32>
    %cst_14 = arith.constant 1.280000e+02 : f32
    %20 = vector.broadcast %cst_14 : f32 to vector<64x1xf32>
    %21 = arith.divf %19, %20 : vector<64x1xf32>
    %22 = vector.broadcast %14 : vector<64x1xf32> to vector<64x128xf32>
    %23 = arith.subf %8, %22 : vector<64x128xf32>
    %cst_15 = arith.constant 9.99999974E-6 : f32
    %24 = vector.broadcast %cst_15 : f32 to vector<64x1xf32>
    %25 = arith.addf %21, %24 : vector<64x1xf32>
    %26 = math.rsqrt %25 : vector<64x1xf32>
    %27 = vector.broadcast %26 : vector<64x1xf32> to vector<64x128xf32>
    %28 = arith.mulf %23, %27 : vector<64x128xf32>
    %29 = vector.broadcast %9 : vector<1x128xf32> to vector<64x128xf32>
    %30 = arith.mulf %28, %29 : vector<64x128xf32>
    %31 = vector.broadcast %10 : vector<1x128xf32> to vector<64x128xf32>
    %32 = arith.addf %30, %31 : vector<64x128xf32>
    %33 = arith.truncf %32 : vector<64x128xf32> to vector<64x128xbf16>
    %c0_16 = arith.constant 0 : index
    %c0_17 = arith.constant 0 : index
    %34 = vector.load %arg7[%c0_16, %c0_17] : memref<128x512xbf16, #tpu.memory_space<vmem>>, vector<128x512xbf16>
    %cst_18 = arith.constant dense<0.000000e+00> : vector<64x512xf32>
    %35 = tpu.matmul %33, %34, %cst_18 {dimension_numbers = #tpu.dot_dimension_numbers<[1], [0], [0], [1], [0, 0, 1, 1], [], []>} : vector<64x128xbf16>, vector<128x512xbf16>, vector<64x512xf32> -> vector<64x512xf32>
    %c0_19 = arith.constant 0 : index
    %c0_20 = arith.constant 0 : index
    %36 = vector.load %arg8[%c0_19, %c0_20] : memref<1x512xf32, #tpu.memory_space<vmem>>, vector<1x512xf32>
    %37 = vector.broadcast %36 : vector<1x512xf32> to vector<64x512xf32>
    %38 = arith.addf %35, %37 : vector<64x512xf32>
    %39 = arith.mulf %38, %38 : vector<64x512xf32>
    %40 = arith.mulf %38, %39 : vector<64x512xf32>
    %cst_21 = arith.constant 4.471500e-02 : f32
    %41 = vector.broadcast %cst_21 : f32 to vector<64x512xf32>
    %42 = arith.mulf %41, %40 : vector<64x512xf32>
    %43 = arith.addf %38, %42 : vector<64x512xf32>
    %cst_22 = arith.constant 0.797884583 : f32
    %44 = vector.broadcast %cst_22 : f32 to vector<64x512xf32>
    %45 = arith.mulf %44, %43 : vector<64x512xf32>
    %46 = math.tanh %45 : vector<64x512xf32>
    %cst_23 = arith.constant 1.000000e+00 : f32
    %47 = vector.broadcast %cst_23 : f32 to vector<64x512xf32>
    %48 = arith.addf %47, %46 : vector<64x512xf32>
    %cst_24 = arith.constant 5.000000e-01 : f32
    %49 = vector.broadcast %cst_24 : f32 to vector<64x512xf32>
    %50 = arith.mulf %49, %48 : vector<64x512xf32>
    %51 = arith.mulf %38, %50 : vector<64x512xf32>
    %52 = arith.truncf %51 : vector<64x512xf32> to vector<64x512xbf16>
    %c0_25 = arith.constant 0 : index
    %c0_26 = arith.constant 0 : index
    %53 = vector.load %arg9[%c0_25, %c0_26] : memref<512x128xbf16, #tpu.memory_space<vmem>>, vector<512x128xbf16>
    %cst_27 = arith.constant dense<0.000000e+00> : vector<64x128xf32>
    %54 = tpu.matmul %52, %53, %cst_27 {dimension_numbers = #tpu.dot_dimension_numbers<[1], [0], [0], [1], [0, 0, 1, 1], [], []>} : vector<64x512xbf16>, vector<512x128xbf16>, vector<64x128xf32> -> vector<64x128xf32>
    %55 = arith.addf %8, %54 : vector<64x128xf32>
    %c0_28 = arith.constant 0 : index
    %c0_29 = arith.constant 0 : index
    %56 = vector.load %arg10[%c0_28, %c0_29] : memref<1x128xf32, #tpu.memory_space<vmem>>, vector<1x128xf32>
    %57 = vector.broadcast %56 : vector<1x128xf32> to vector<64x128xf32>
    %58 = arith.addf %55, %57 : vector<64x128xf32>
    %59 = arith.truncf %58 : vector<64x128xf32> to vector<64x128xbf16>
    %c0_30 = arith.constant 0 : index
    %c0_31 = arith.constant 0 : index
    %60 = vector.load %arg11[%c0_30, %c0_31] : memref<64x128xbf16, #tpu.memory_space<vmem>>, vector<64x128xbf16>
    tpu.vector_store %arg11[%c0_30, %c0_31], %59 {strides = array<i32>} : memref<64x128xbf16, #tpu.memory_space<vmem>>, vector<64x128xbf16>,
    return
  }
  func.func @transform_0(%arg0: i32) -> (i32, i32) {
    %c0_i32 = arith.constant 0 : i32
    %c0_i32_0 = arith.constant 0 : i32
    return %arg0, %c0_i32 : i32, i32
  }
  func.func @transform_1(%arg0: i32) -> (i32, i32) {
    %c0_i32 = arith.constant 0 : i32
    %c0_i32_0 = arith.constant 0 : i32
    %c0_i32_1 = arith.constant 0 : i32
    return %c0_i32, %c0_i32_0 : i32, i32
  }
  func.func @transform_2(%arg0: i32) -> (i32, i32) {
    %c0_i32 = arith.constant 0 : i32
    %c0_i32_0 = arith.constant 0 : i32
    %c0_i32_1 = arith.constant 0 : i32
    return %c0_i32, %c0_i32_0 : i32, i32
  }
  func.func @transform_3(%arg0: i32) -> (i32, i32) {
    %c0_i32 = arith.constant 0 : i32
    %c0_i32_0 = arith.constant 0 : i32
    return %arg0, %c0_i32 : i32, i32
  }
  func.func @transform_4(%arg0: i32) -> (i32, i32) {
    %c0_i32 = arith.constant 0 : i32
    %c0_i32_0 = arith.constant 0 : i32
    %c0_i32_1 = arith.constant 0 : i32
    return %c0_i32, %c0_i32_0 : i32, i32
  }
  func.func @transform_5(%arg0: i32) -> (i32, i32) {
    %c0_i32 = arith.constant 0 : i32
    %c0_i32_0 = arith.constant 0 : i32
    %c0_i32_1 = arith.constant 0 : i32
    return %c0_i32, %c0_i32_0 : i32, i32
  }
  func.func @transform_6(%arg0: i32) -> (i32, i32) {
    %c0_i32 = arith.constant 0 : i32
    %c0_i32_0 = arith.constant 0 : i32
    %c0_i32_1 = arith.constant 0 : i32
    return %c0_i32, %c0_i32_0 : i32, i32
  }
  func.func @transform_7(%arg0: i32) -> (i32, i32) {
    %c0_i32 = arith.constant 0 : i32
    %c0_i32_0 = arith.constant 0 : i32
    %c0_i32_1 = arith.constant 0 : i32
    return %c0_i32, %c0_i32_0 : i32, i32
  }
  func.func @transform_8(%arg0: i32) -> (i32, i32) {
    %c0_i32 = arith.constant 0 : i32
    %c0_i32_0 = arith.constant 0 : i32
    %c0_i32_1 = arith.constant 0 : i32
    return %c0_i32, %c0_i32_0 : i32, i32
  }
  func.func @transform_9(%arg0: i32) -> (i32, i32) {
    %c0_i32 = arith.constant 0 : i32
    %c0_i32_0 = arith.constant 0 : i32
    %c0_i32_1 = arith.constant 0 : i32
    return %c0_i32, %c0_i32_0 : i32, i32
  }
  func.func @transform_10(%arg0: i32) -> (i32, i32) {
    %c0_i32 = arith.constant 0 : i32
    %c0_i32_0 = arith.constant 0 : i32
    return %arg0, %c0_i32 : i32, i32
  }
}

module attributes {stable_mosaic.version = 11 : i64} {
  func.func @_attn_kernel(%arg0: i32, %arg1: i32, %arg2: memref<1x32x128xbf16, #tpu.memory_space<vmem>>, %arg3: memref<1x64x128xbf16, #tpu.memory_space<vmem>>, %arg4: memref<1x64x128xbf16, #tpu.memory_space<vmem>>, %arg5: memref<1x32x128xbf16, #tpu.memory_space<vmem>>, %arg6: memref<32x128xf32, #tpu.memory_space<vmem>>) attributes {dimension_semantics = [#tpu.dimension_semantics<parallel>, #tpu.dimension_semantics<parallel>], iteration_bounds = array<i64: 2, 2>, scalar_prefetch = 0 : i64, scratch_operands = 1 : i64, tpu.core_type = #tpu.core_type<tc>, window_params = [{transform_indices = @transform_0, window_bounds = array<i64: 1, 32, 128>}, {transform_indices = @transform_1, window_bounds = array<i64: 1, 64, 128>}, {transform_indices = @transform_2, window_bounds = array<i64: 1, 64, 128>}, {transform_indices = @transform_3, window_bounds = array<i64: 1, 32, 128>}]} {
    %c0 = arith.constant 0 : index
    %c0_0 = arith.constant 0 : index
    %c0_1 = arith.constant 0 : index
    %0 = vector.load %arg2[%c0, %c0_0, %c0_1] : memref<1x32x128xbf16, #tpu.memory_space<vmem>>, vector<1x32x128xbf16>
    %1 = vector.shape_cast %0 : vector<1x32x128xbf16> to vector<32x128xbf16>
    %2 = arith.extf %1 : vector<32x128xbf16> to vector<32x128xf32>
    %cst = arith.constant 0.176776692 : f32
    %3 = vector.broadcast %cst : f32 to vector<32x128xf32>
    %4 = arith.mulf %2, %3 : vector<32x128xf32>
    %5 = arith.truncf %4 : vector<32x128xf32> to vector<32x128xbf16>
    %c0_2 = arith.constant 0 : index
    %c0_3 = arith.constant 0 : index
    %c0_4 = arith.constant 0 : index
    %6 = vector.load %arg3[%c0_2, %c0_3, %c0_4] : memref<1x64x128xbf16, #tpu.memory_space<vmem>>, vector<1x64x128xbf16>
    %7 = vector.shape_cast %6 : vector<1x64x128xbf16> to vector<64x128xbf16>
    %c0_5 = arith.constant 0 : index
    %c0_6 = arith.constant 0 : index
    %c0_7 = arith.constant 0 : index
    %8 = vector.load %arg4[%c0_5, %c0_6, %c0_7] : memref<1x64x128xbf16, #tpu.memory_space<vmem>>, vector<1x64x128xbf16>
    %9 = vector.shape_cast %8 : vector<1x64x128xbf16> to vector<64x128xbf16>
    %10 = vector.extract_strided_slice %5 {offsets = [0, 0], sizes = [32, 32], strides = [1, 1]} : vector<32x128xbf16> to vector<32x32xbf16>
    %11 = vector.extract_strided_slice %7 {offsets = [0, 0], sizes = [64, 32], strides = [1, 1]} : vector<64x128xbf16> to vector<64x32xbf16>
    %cst_8 = arith.constant dense<0.000000e+00> : vector<32x64xf32>
    %12 = tpu.matmul %10, %11, %cst_8 {dimension_numbers = #tpu.dot_dimension_numbers<[1], [1], [0], [0], [0, 0, 1, 0], [], []>} : vector<32x32xbf16>, vector<64x32xbf16>, vector<32x64xf32> -> vector<32x64xf32>
    %cst_9 = arith.constant dense<0xFF800000> : vector<32xf32>
    %13 = vector.multi_reduction <maximumf>, %12, %cst_9 [1] : vector<32x64xf32> to vector<32xf32>
    %14 = vector.shape_cast %13 : vector<32xf32> to vector<32x1xf32>
    %15 = vector.broadcast %14 : vector<32x1xf32> to vector<32x64xf32>
    %16 = arith.subf %12, %15 : vector<32x64xf32>
    %17 = math.exp %16 : vector<32x64xf32>
    %cst_10 = arith.constant dense<0.000000e+00> : vector<32xf32>
    %18 = vector.multi_reduction <add>, %17, %cst_10 [1] : vector<32x64xf32> to vector<32xf32>
    %19 = vector.shape_cast %18 : vector<32xf32> to vector<32x1xf32>
    %cst_11 = arith.constant 1.000000e+00 : f32
    %20 = vector.broadcast %cst_11 : f32 to vector<32x1xf32>
    %21 = arith.divf %20, %19 : vector<32x1xf32>
    %22 = vector.broadcast %21 : vector<32x1xf32> to vector<32x64xf32>
    %23 = arith.mulf %17, %22 : vector<32x64xf32>
    %24 = arith.truncf %23 : vector<32x64xf32> to vector<32x64xbf16>
    %25 = vector.extract_strided_slice %9 {offsets = [0, 0], sizes = [64, 32], strides = [1, 1]} : vector<64x128xbf16> to vector<64x32xbf16>
    %cst_12 = arith.constant dense<0.000000e+00> : vector<32x32xf32>
    %26 = tpu.matmul %24, %25, %cst_12 {dimension_numbers = #tpu.dot_dimension_numbers<[1], [0], [0], [1], [0, 0, 1, 1], [], []>} : vector<32x64xbf16>, vector<64x32xbf16>, vector<32x32xf32> -> vector<32x32xf32>
    %c0_13 = arith.constant 0 : index
    %c0_14 = arith.constant 0 : index
    %27 = vector.load %arg6[%c0_13, %c0_14] : memref<32x128xf32, #tpu.memory_space<vmem>>, vector<32x32xf32>
    tpu.vector_store %arg6[%c0_13, %c0_14], %26 {strides = array<i32>} : memref<32x128xf32, #tpu.memory_space<vmem>>, vector<32x32xf32>,
    %28 = vector.extract_strided_slice %5 {offsets = [0, 32], sizes = [32, 32], strides = [1, 1]} : vector<32x128xbf16> to vector<32x32xbf16>
    %29 = vector.extract_strided_slice %7 {offsets = [0, 32], sizes = [64, 32], strides = [1, 1]} : vector<64x128xbf16> to vector<64x32xbf16>
    %cst_15 = arith.constant dense<0.000000e+00> : vector<32x64xf32>
    %30 = tpu.matmul %28, %29, %cst_15 {dimension_numbers = #tpu.dot_dimension_numbers<[1], [1], [0], [0], [0, 0, 1, 0], [], []>} : vector<32x32xbf16>, vector<64x32xbf16>, vector<32x64xf32> -> vector<32x64xf32>
    %cst_16 = arith.constant dense<0xFF800000> : vector<32xf32>
    %31 = vector.multi_reduction <maximumf>, %30, %cst_16 [1] : vector<32x64xf32> to vector<32xf32>
    %32 = vector.shape_cast %31 : vector<32xf32> to vector<32x1xf32>
    %33 = vector.broadcast %32 : vector<32x1xf32> to vector<32x64xf32>
    %34 = arith.subf %30, %33 : vector<32x64xf32>
    %35 = math.exp %34 : vector<32x64xf32>
    %cst_17 = arith.constant dense<0.000000e+00> : vector<32xf32>
    %36 = vector.multi_reduction <add>, %35, %cst_17 [1] : vector<32x64xf32> to vector<32xf32>
    %37 = vector.shape_cast %36 : vector<32xf32> to vector<32x1xf32>
    %cst_18 = arith.constant 1.000000e+00 : f32
    %38 = vector.broadcast %cst_18 : f32 to vector<32x1xf32>
    %39 = arith.divf %38, %37 : vector<32x1xf32>
    %40 = vector.broadcast %39 : vector<32x1xf32> to vector<32x64xf32>
    %41 = arith.mulf %35, %40 : vector<32x64xf32>
    %42 = arith.truncf %41 : vector<32x64xf32> to vector<32x64xbf16>
    %43 = vector.extract_strided_slice %9 {offsets = [0, 32], sizes = [64, 32], strides = [1, 1]} : vector<64x128xbf16> to vector<64x32xbf16>
    %cst_19 = arith.constant dense<0.000000e+00> : vector<32x32xf32>
    %44 = tpu.matmul %42, %43, %cst_19 {dimension_numbers = #tpu.dot_dimension_numbers<[1], [0], [0], [1], [0, 0, 1, 1], [], []>} : vector<32x64xbf16>, vector<64x32xbf16>, vector<32x32xf32> -> vector<32x32xf32>
    %c0_20 = arith.constant 0 : index
    %c32 = arith.constant 32 : index
    %45 = vector.load %arg6[%c0_20, %c32] : memref<32x128xf32, #tpu.memory_space<vmem>>, vector<32x32xf32>
    tpu.vector_store %arg6[%c0_20, %c32], %44 {strides = array<i32>} : memref<32x128xf32, #tpu.memory_space<vmem>>, vector<32x32xf32>,
    %46 = vector.extract_strided_slice %5 {offsets = [0, 64], sizes = [32, 32], strides = [1, 1]} : vector<32x128xbf16> to vector<32x32xbf16>
    %47 = vector.extract_strided_slice %7 {offsets = [0, 64], sizes = [64, 32], strides = [1, 1]} : vector<64x128xbf16> to vector<64x32xbf16>
    %cst_21 = arith.constant dense<0.000000e+00> : vector<32x64xf32>
    %48 = tpu.matmul %46, %47, %cst_21 {dimension_numbers = #tpu.dot_dimension_numbers<[1], [1], [0], [0], [0, 0, 1, 0], [], []>} : vector<32x32xbf16>, vector<64x32xbf16>, vector<32x64xf32> -> vector<32x64xf32>
    %cst_22 = arith.constant dense<0xFF800000> : vector<32xf32>
    %49 = vector.multi_reduction <maximumf>, %48, %cst_22 [1] : vector<32x64xf32> to vector<32xf32>
    %50 = vector.shape_cast %49 : vector<32xf32> to vector<32x1xf32>
    %51 = vector.broadcast %50 : vector<32x1xf32> to vector<32x64xf32>
    %52 = arith.subf %48, %51 : vector<32x64xf32>
    %53 = math.exp %52 : vector<32x64xf32>
    %cst_23 = arith.constant dense<0.000000e+00> : vector<32xf32>
    %54 = vector.multi_reduction <add>, %53, %cst_23 [1] : vector<32x64xf32> to vector<32xf32>
    %55 = vector.shape_cast %54 : vector<32xf32> to vector<32x1xf32>
    %cst_24 = arith.constant 1.000000e+00 : f32
    %56 = vector.broadcast %cst_24 : f32 to vector<32x1xf32>
    %57 = arith.divf %56, %55 : vector<32x1xf32>
    %58 = vector.broadcast %57 : vector<32x1xf32> to vector<32x64xf32>
    %59 = arith.mulf %53, %58 : vector<32x64xf32>
    %60 = arith.truncf %59 : vector<32x64xf32> to vector<32x64xbf16>
    %61 = vector.extract_strided_slice %9 {offsets = [0, 64], sizes = [64, 32], strides = [1, 1]} : vector<64x128xbf16> to vector<64x32xbf16>
    %cst_25 = arith.constant dense<0.000000e+00> : vector<32x32xf32>
    %62 = tpu.matmul %60, %61, %cst_25 {dimension_numbers = #tpu.dot_dimension_numbers<[1], [0], [0], [1], [0, 0, 1, 1], [], []>} : vector<32x64xbf16>, vector<64x32xbf16>, vector<32x32xf32> -> vector<32x32xf32>
    %c0_26 = arith.constant 0 : index
    %c64 = arith.constant 64 : index
    %63 = vector.load %arg6[%c0_26, %c64] : memref<32x128xf32, #tpu.memory_space<vmem>>, vector<32x32xf32>
    tpu.vector_store %arg6[%c0_26, %c64], %62 {strides = array<i32>} : memref<32x128xf32, #tpu.memory_space<vmem>>, vector<32x32xf32>,
    %64 = vector.extract_strided_slice %5 {offsets = [0, 96], sizes = [32, 32], strides = [1, 1]} : vector<32x128xbf16> to vector<32x32xbf16>
    %65 = vector.extract_strided_slice %7 {offsets = [0, 96], sizes = [64, 32], strides = [1, 1]} : vector<64x128xbf16> to vector<64x32xbf16>
    %cst_27 = arith.constant dense<0.000000e+00> : vector<32x64xf32>
    %66 = tpu.matmul %64, %65, %cst_27 {dimension_numbers = #tpu.dot_dimension_numbers<[1], [1], [0], [0], [0, 0, 1, 0], [], []>} : vector<32x32xbf16>, vector<64x32xbf16>, vector<32x64xf32> -> vector<32x64xf32>
    %cst_28 = arith.constant dense<0xFF800000> : vector<32xf32>
    %67 = vector.multi_reduction <maximumf>, %66, %cst_28 [1] : vector<32x64xf32> to vector<32xf32>
    %68 = vector.shape_cast %67 : vector<32xf32> to vector<32x1xf32>
    %69 = vector.broadcast %68 : vector<32x1xf32> to vector<32x64xf32>
    %70 = arith.subf %66, %69 : vector<32x64xf32>
    %71 = math.exp %70 : vector<32x64xf32>
    %cst_29 = arith.constant dense<0.000000e+00> : vector<32xf32>
    %72 = vector.multi_reduction <add>, %71, %cst_29 [1] : vector<32x64xf32> to vector<32xf32>
    %73 = vector.shape_cast %72 : vector<32xf32> to vector<32x1xf32>
    %cst_30 = arith.constant 1.000000e+00 : f32
    %74 = vector.broadcast %cst_30 : f32 to vector<32x1xf32>
    %75 = arith.divf %74, %73 : vector<32x1xf32>
    %76 = vector.broadcast %75 : vector<32x1xf32> to vector<32x64xf32>
    %77 = arith.mulf %71, %76 : vector<32x64xf32>
    %78 = arith.truncf %77 : vector<32x64xf32> to vector<32x64xbf16>
    %79 = vector.extract_strided_slice %9 {offsets = [0, 96], sizes = [64, 32], strides = [1, 1]} : vector<64x128xbf16> to vector<64x32xbf16>
    %cst_31 = arith.constant dense<0.000000e+00> : vector<32x32xf32>
    %80 = tpu.matmul %78, %79, %cst_31 {dimension_numbers = #tpu.dot_dimension_numbers<[1], [0], [0], [1], [0, 0, 1, 1], [], []>} : vector<32x64xbf16>, vector<64x32xbf16>, vector<32x32xf32> -> vector<32x32xf32>
    %c0_32 = arith.constant 0 : index
    %c96 = arith.constant 96 : index
    %81 = vector.load %arg6[%c0_32, %c96] : memref<32x128xf32, #tpu.memory_space<vmem>>, vector<32x32xf32>
    tpu.vector_store %arg6[%c0_32, %c96], %80 {strides = array<i32>} : memref<32x128xf32, #tpu.memory_space<vmem>>, vector<32x32xf32>,
    %c0_33 = arith.constant 0 : index
    %c0_34 = arith.constant 0 : index
    %82 = vector.load %arg6[%c0_33, %c0_34] : memref<32x128xf32, #tpu.memory_space<vmem>>, vector<32x128xf32>
    %83 = arith.truncf %82 : vector<32x128xf32> to vector<32x128xbf16>
    %c0_35 = arith.constant 0 : index
    %c0_36 = arith.constant 0 : index
    %c0_37 = arith.constant 0 : index
    %84 = vector.load %arg5[%c0_35, %c0_36, %c0_37] : memref<1x32x128xbf16, #tpu.memory_space<vmem>>, vector<1x32x128xbf16>
    %85 = vector.shape_cast %84 : vector<1x32x128xbf16> to vector<32x128xbf16>
    %86 = vector.shape_cast %83 : vector<32x128xbf16> to vector<1x32x128xbf16>
    tpu.vector_store %arg5[%c0_35, %c0_36, %c0_37], %86 {strides = array<i32>} : memref<1x32x128xbf16, #tpu.memory_space<vmem>>, vector<1x32x128xbf16>,
    return
  }
  func.func @transform_0(%arg0: i32, %arg1: i32) -> (i32, i32, i32) {
    %c0_i32 = arith.constant 0 : i32
    %c0_i32_0 = arith.constant 0 : i32
    return %arg0, %arg1, %c0_i32 : i32, i32, i32
  }
  func.func @transform_1(%arg0: i32, %arg1: i32) -> (i32, i32, i32) {
    %c0_i32 = arith.constant 0 : i32
    %c1_i32 = arith.constant 1 : i32
    %c0_i32_0 = arith.constant 0 : i32
    return %arg0, %c0_i32, %c1_i32 : i32, i32, i32
  }
  func.func @transform_2(%arg0: i32, %arg1: i32) -> (i32, i32, i32) {
    %c0_i32 = arith.constant 0 : i32
    %c2_i32 = arith.constant 2 : i32
    %c0_i32_0 = arith.constant 0 : i32
    return %arg0, %c0_i32, %c2_i32 : i32, i32, i32
  }
  func.func @transform_3(%arg0: i32, %arg1: i32) -> (i32, i32, i32) {
    %c0_i32 = arith.constant 0 : i32
    %c0_i32_0 = arith.constant 0 : i32
    return %arg0, %arg1, %c0_i32 : i32, i32, i32
  }
}

module attributes {stable_mosaic.version = 11 : i64} {
  func.func @_ln_pool_proj_kernel(%arg0: i32, %arg1: memref<1x64x128xbf16, #tpu.memory_space<vmem>>, %arg2: memref<1x128xf32, #tpu.memory_space<vmem>>, %arg3: memref<1x128xf32, #tpu.memory_space<vmem>>, %arg4: memref<128x256xbf16, #tpu.memory_space<vmem>>, %arg5: memref<1x256xf32, #tpu.memory_space<vmem>>, %arg6: memref<1x1x256xf32, #tpu.memory_space<vmem>>) attributes {dimension_semantics = [#tpu.dimension_semantics<parallel>], iteration_bounds = array<i64: 2>, scalar_prefetch = 0 : i64, scratch_operands = 0 : i64, tpu.core_type = #tpu.core_type<tc>, window_params = [{transform_indices = @transform_0, window_bounds = array<i64: 1, 64, 128>}, {pipeline_mode = #tpu.pipeline_mode<synchronous>, transform_indices = @transform_1, window_bounds = array<i64: 1, 128>}, {pipeline_mode = #tpu.pipeline_mode<synchronous>, transform_indices = @transform_2, window_bounds = array<i64: 1, 128>}, {pipeline_mode = #tpu.pipeline_mode<synchronous>, transform_indices = @transform_3, window_bounds = array<i64: 128, 256>}, {pipeline_mode = #tpu.pipeline_mode<synchronous>, transform_indices = @transform_4, window_bounds = array<i64: 1, 256>}, {transform_indices = @transform_5, window_bounds = array<i64: 1, 1, 256>}]} {
    %c0 = arith.constant 0 : index
    %c0_0 = arith.constant 0 : index
    %c0_1 = arith.constant 0 : index
    %0 = vector.load %arg1[%c0, %c0_0, %c0_1] : memref<1x64x128xbf16, #tpu.memory_space<vmem>>, vector<1x64x128xbf16>
    %1 = arith.extf %0 : vector<1x64x128xbf16> to vector<1x64x128xf32>
    %c0_2 = arith.constant 0 : index
    %c0_3 = arith.constant 0 : index
    %2 = vector.load %arg2[%c0_2, %c0_3] : memref<1x128xf32, #tpu.memory_space<vmem>>, vector<1x128xf32>
    %c0_4 = arith.constant 0 : index
    %c0_5 = arith.constant 0 : index
    %3 = vector.load %arg3[%c0_4, %c0_5] : memref<1x128xf32, #tpu.memory_space<vmem>>, vector<1x128xf32>
    %cst = arith.constant dense<0.000000e+00> : vector<1x64xf32>
    %4 = vector.multi_reduction <add>, %1, %cst [2] : vector<1x64x128xf32> to vector<1x64xf32>
    %5 = vector.shape_cast %4 : vector<1x64xf32> to vector<1x64x1xf32>
    %cst_6 = arith.constant 1.280000e+02 : f32
    %6 = vector.broadcast %cst_6 : f32 to vector<1x64x1xf32>
    %7 = arith.divf %5, %6 : vector<1x64x1xf32>
    %8 = vector.broadcast %7 : vector<1x64x1xf32> to vector<1x64x128xf32>
    %9 = arith.subf %1, %8 : vector<1x64x128xf32>
    %10 = arith.mulf %9, %9 : vector<1x64x128xf32>
    %cst_7 = arith.constant dense<0.000000e+00> : vector<1x64xf32>
    %11 = vector.multi_reduction <add>, %10, %cst_7 [2] : vector<1x64x128xf32> to vector<1x64xf32>
    %12 = vector.shape_cast %11 : vector<1x64xf32> to vector<1x64x1xf32>
    %cst_8 = arith.constant 1.280000e+02 : f32
    %13 = vector.broadcast %cst_8 : f32 to vector<1x64x1xf32>
    %14 = arith.divf %12, %13 : vector<1x64x1xf32>
    %15 = vector.broadcast %7 : vector<1x64x1xf32> to vector<1x64x128xf32>
    %16 = arith.subf %1, %15 : vector<1x64x128xf32>
    %cst_9 = arith.constant 9.99999974E-6 : f32
    %17 = vector.broadcast %cst_9 : f32 to vector<1x64x1xf32>
    %18 = arith.addf %14, %17 : vector<1x64x1xf32>
    %19 = math.rsqrt %18 : vector<1x64x1xf32>
    %20 = vector.broadcast %19 : vector<1x64x1xf32> to vector<1x64x128xf32>
    %21 = arith.mulf %16, %20 : vector<1x64x128xf32>
    %22 = vector.shape_cast %2 : vector<1x128xf32> to vector<1x1x128xf32>
    %23 = vector.broadcast %22 : vector<1x1x128xf32> to vector<1x64x128xf32>
    %24 = arith.mulf %21, %23 : vector<1x64x128xf32>
    %25 = vector.shape_cast %3 : vector<1x128xf32> to vector<1x1x128xf32>
    %26 = vector.broadcast %25 : vector<1x1x128xf32> to vector<1x64x128xf32>
    %27 = arith.addf %24, %26 : vector<1x64x128xf32>
    %cst_10 = arith.constant dense<0.000000e+00> : vector<1x128xf32>
    %28 = vector.multi_reduction <add>, %27, %cst_10 [1] : vector<1x64x128xf32> to vector<1x128xf32>
    %cst_11 = arith.constant 6.400000e+01 : f32
    %29 = vector.broadcast %cst_11 : f32 to vector<1x128xf32>
    %30 = arith.divf %28, %29 : vector<1x128xf32>
    %31 = arith.truncf %30 : vector<1x128xf32> to vector<1x128xbf16>
    %c0_12 = arith.constant 0 : index
    %c0_13 = arith.constant 0 : index
    %32 = vector.load %arg4[%c0_12, %c0_13] : memref<128x256xbf16, #tpu.memory_space<vmem>>, vector<128x256xbf16>
    %cst_14 = arith.constant dense<0.000000e+00> : vector<1x256xf32>
    %33 = tpu.matmul %31, %32, %cst_14 {dimension_numbers = #tpu.dot_dimension_numbers<[1], [0], [0], [1], [0, 0, 1, 1], [], []>} : vector<1x128xbf16>, vector<128x256xbf16>, vector<1x256xf32> -> vector<1x256xf32>
    %c0_15 = arith.constant 0 : index
    %c0_16 = arith.constant 0 : index
    %34 = vector.load %arg5[%c0_15, %c0_16] : memref<1x256xf32, #tpu.memory_space<vmem>>, vector<1x256xf32>
    %35 = arith.addf %33, %34 : vector<1x256xf32>
    %36 = arith.mulf %35, %35 : vector<1x256xf32>
    %cst_17 = arith.constant dense<0.000000e+00> : vector<1xf32>
    %37 = vector.multi_reduction <add>, %36, %cst_17 [1] : vector<1x256xf32> to vector<1xf32>
    %38 = vector.shape_cast %37 : vector<1xf32> to vector<1x1xf32>
    %cst_18 = arith.constant 9.99999996E-13 : f32
    %39 = vector.broadcast %cst_18 : f32 to vector<1x1xf32>
    %40 = arith.addf %38, %39 : vector<1x1xf32>
    %41 = math.rsqrt %40 : vector<1x1xf32>
    %42 = vector.broadcast %41 : vector<1x1xf32> to vector<1x256xf32>
    %43 = arith.mulf %35, %42 : vector<1x256xf32>
    %44 = vector.shape_cast %43 : vector<1x256xf32> to vector<1x1x256xf32>
    %c0_19 = arith.constant 0 : index
    %c0_20 = arith.constant 0 : index
    %c0_21 = arith.constant 0 : index
    %45 = vector.load %arg6[%c0_19, %c0_20, %c0_21] : memref<1x1x256xf32, #tpu.memory_space<vmem>>, vector<1x1x256xf32>
    tpu.vector_store %arg6[%c0_19, %c0_20, %c0_21], %44 {strides = array<i32>} : memref<1x1x256xf32, #tpu.memory_space<vmem>>, vector<1x1x256xf32>,
    return
  }
  func.func @transform_0(%arg0: i32) -> (i32, i32, i32) {
    %c0_i32 = arith.constant 0 : i32
    %c0_i32_0 = arith.constant 0 : i32
    %c0_i32_1 = arith.constant 0 : i32
    return %arg0, %c0_i32, %c0_i32_0 : i32, i32, i32
  }
  func.func @transform_1(%arg0: i32) -> (i32, i32) {
    %c0_i32 = arith.constant 0 : i32
    %c0_i32_0 = arith.constant 0 : i32
    %c0_i32_1 = arith.constant 0 : i32
    return %c0_i32, %c0_i32_0 : i32, i32
  }
  func.func @transform_2(%arg0: i32) -> (i32, i32) {
    %c0_i32 = arith.constant 0 : i32
    %c0_i32_0 = arith.constant 0 : i32
    %c0_i32_1 = arith.constant 0 : i32
    return %c0_i32, %c0_i32_0 : i32, i32
  }
  func.func @transform_3(%arg0: i32) -> (i32, i32) {
    %c0_i32 = arith.constant 0 : i32
    %c0_i32_0 = arith.constant 0 : i32
    %c0_i32_1 = arith.constant 0 : i32
    return %c0_i32, %c0_i32_0 : i32, i32
  }
  func.func @transform_4(%arg0: i32) -> (i32, i32) {
    %c0_i32 = arith.constant 0 : i32
    %c0_i32_0 = arith.constant 0 : i32
    %c0_i32_1 = arith.constant 0 : i32
    return %c0_i32, %c0_i32_0 : i32, i32
  }
  func.func @transform_5(%arg0: i32) -> (i32, i32, i32) {
    %c0_i32 = arith.constant 0 : i32
    %c0_i32_0 = arith.constant 0 : i32
    %c0_i32_1 = arith.constant 0 : i32
    return %arg0, %c0_i32, %c0_i32_0 : i32, i32, i32
  }
}

</mosaic_0001>

<llo_original>
// kernel: encode_graph.8
$region0: #{encode_graph.8}
  #allocation0 [shape = 'u32[]', space=smem, size = 0x4, offset = 0x4, fixed_abs, tag = 'smem constant byte address 0x4 - core index']
  #allocation1 [shape = 'u32[144,128]{1,0:T(1,128)}', space=vmem, size = 0x12000, scoped, tag = 'internal scratch']
  %s0 = inlined_call_operand.vmem [shape: bf16[128,32], index: 0, kind: input, shape index: {}]
  %s1 = inlined_call_operand.vmem [shape: bf16[32,128], index: 1, kind: input, shape index: {}]
  %s2 = inlined_call_operand.vmem [shape: f32[1,128], index: 2, kind: input, shape index: {}]
  %s3 = inlined_call_operand.vmem [shape: bf16[128,128], index: 3, kind: output, shape index: {}]
  %s4 = sld [smem:[#allocation0]]
  $region45: #{encode_graph.8} parent=0
    _
  %s6 = ssub.s32 1, %s4
  %s7 = scalar_select 0, %s6, %s4
  loop: start=0, step=1, limit=4
  $region2: #{encode_graph.8} parent=0 // loop_pre_header
    _
  $region3: #{encode_graph.8} parent=0 // loop_header
    %s9 = sphi 0, %s13
    %p10 = scmp.ge.s32.totalorder %s9, 4
    %s19 = sphi 0, %s21
    %s22 = sphi 0, %s19
    %s23 = sphi 0, %s22
    %s39 = sphi 0, %s23
    %s43 = sphi 0, %s43
    %s45 = sphi 0, %s43
    %s46 = sphi 0, %s45
    %s60 = sphi 0, %s46
    %s64 = sphi 0, %s64
    %s66 = sphi 0, %s64
    %s67 = sphi 0, %s66
    %s81 = sphi 0, %s67
    %s87 = sphi 0, %s89
    %s90 = sphi 0, %s87
    %s91 = sphi 0, %s90
    %s107 = sphi 0, %s91
  $region4: #{encode_graph.8} parent=0 // loop_header_branch
    %12 = sbr.rel (%p10) target = $region8
  $region5: #{encode_graph.8} parent=0 // loop_body
    %s14 = ssub.s32 %s9, 1
    %s15 = ssub.s32 %s9, 2
    %s16 = sadd.s32 %s9, 1
    %s17 = ssub.s32 %s9, %s16
    %p18 = scmp.eq.s32.totalorder %s17, 0
    %s20 = sadd.s32 %s19, 1
    %s21 = scalar_select %p18, %s19, %s20
    %p24 = pneg %p18
    %p25 = scmp.eq.s32.totalorder %s9, 1
    %p26 = por %p24, %p25
    %p27 = scmp.ne.s32.totalorder %s19, %s22
    %p28 = scmp.eq.s32.totalorder %s9, 0
    %p29 = por %p27, %p28
    %p30 = scmp.ne.s32.totalorder %s19, %s22
    %p31 = scmp.eq.s32.totalorder %s14, 1
    %p32 = por %p30, %p31
    %p33 = scmp.ne.s32.totalorder %s22, %s23
    %p34 = scmp.eq.s32.totalorder %s14, 0
    %p35 = por %p33, %p34
    %p36 = scmp.ne.s32.totalorder %s22, %s23
    %p37 = scmp.eq.s32.totalorder %s15, 1
    %p38 = por %p36, %p37
    %p40 = scmp.ne.s32.totalorder %s23, %s39
    %p41 = scmp.eq.s32.totalorder %s15, 0
    %p42 = por %p40, %p41
    %s44 = sadd.s32 %s43, 1
    %p47 = scmp.eq.s32.totalorder %s9, 1
    %p48 = scmp.ne.s32.totalorder %s43, %s45
    %p49 = scmp.eq.s32.totalorder %s9, 0
    %p50 = por %p48, %p49
    %p51 = scmp.ne.s32.totalorder %s43, %s45
    %p52 = scmp.eq.s32.totalorder %s14, 1
    %p53 = por %p51, %p52
    %p54 = scmp.ne.s32.totalorder %s45, %s46
    %p55 = scmp.eq.s32.totalorder %s14, 0
    %p56 = por %p54, %p55
    %p57 = scmp.ne.s32.totalorder %s45, %s46
    %p58 = scmp.eq.s32.totalorder %s15, 1
    %p59 = por %p57, %p58
    %p61 = scmp.ne.s32.totalorder %s46, %s60
    %p62 = scmp.eq.s32.totalorder %s15, 0
    %p63 = por %p61, %p62
    %s65 = sadd.s32 %s64, 1
    %p68 = scmp.eq.s32.totalorder %s9, 1
    %p69 = scmp.ne.s32.totalorder %s64, %s66
    %p70 = scmp.eq.s32.totalorder %s9, 0
    %p71 = por %p69, %p70
    %p72 = scmp.ne.s32.totalorder %s64, %s66
    %p73 = scmp.eq.s32.totalorder %s14, 1
    %p74 = por %p72, %p73
    %p75 = scmp.ne.s32.totalorder %s66, %s67
    %p76 = scmp.eq.s32.totalorder %s14, 0
    %p77 = por %p75, %p76
    %p78 = scmp.ne.s32.totalorder %s66, %s67
    %p79 = scmp.eq.s32.totalorder %s15, 1
    %p80 = por %p78, %p79
    %p82 = scmp.ne.s32.totalorder %s67, %s81
    %p83 = scmp.eq.s32.totalorder %s15, 0
    %p84 = por %p82, %p83
    %s85 = ssub.s32 %s9, %s16
    %p86 = scmp.eq.s32.totalorder %s85, 0
    %s88 = sadd.s32 %s87, 1
    %s89 = scalar_select %p86, %s87, %s88
    %p92 = pneg %p86
    %p93 = scmp.eq.s32.totalorder %s9, 1
    %p94 = por %p92, %p93
    %p95 = scmp.ne.s32.totalorder %s87, %s90
    %p96 = scmp.eq.s32.totalorder %s9, 0
    %p97 = por %p95, %p96
    %p98 = scmp.ne.s32.totalorder %s87, %s90
    %p99 = scmp.eq.s32.totalorder %s14, 1
    %p100 = por %p98, %p99
    %p101 = scmp.ne.s32.totalorder %s90, %s91
    %p102 = scmp.eq.s32.totalorder %s14, 0
    %p103 = por %p101, %p102
    %p104 = scmp.ne.s32.totalorder %s90, %s91
    %p105 = scmp.eq.s32.totalorder %s15, 1
    %p106 = por %p104, %p105
    %p108 = scmp.ne.s32.totalorder %s91, %s107
    %p109 = scmp.eq.s32.totalorder %s15, 0
    %p110 = por %p108, %p109
    %p111 = scmp.le.s32.totalorder 1, %s9
    %p112 = scmp.lt.s32.totalorder %s9, 3
    %p113 = pnand %p111, %p112
    %p114 = pneg %p113
    // Predicated region
    $region9: #{encode_graph.8} parent=5 // pred_check
      _
    $region10: #{encode_graph.8} parent=5 // pred_check_branch
      %116 = sbr.rel (%p113) target = $region12
    $region11: #{encode_graph.8} parent=5 // pred_region
      %s117 = ssub.s32 %s9, 1
      // Predicated region
      $region13: #{encode_graph.8} parent=11 // pred_check
        %p118 = pneg %p56
      $region14: #{encode_graph.8} parent=11 // pred_check_branch
        %120 = sbr.rel (%p118) target = $region16
      $region15: #{encode_graph.8} parent=11 // pred_region
        _
      $region16: #{encode_graph.8} parent=11 // pred_fallthru
        _
      // Predicated region
      $region17: #{encode_graph.8} parent=11 // pred_check
        %p121 = pneg %p77
      $region18: #{encode_graph.8} parent=11 // pred_check_branch
        %123 = sbr.rel (%p121) target = $region20
      $region19: #{encode_graph.8} parent=11 // pred_region
        _
      $region20: #{encode_graph.8} parent=11 // pred_fallthru
        _
    $region12: #{encode_graph.8} parent=5 // pred_fallthru
      _
    %p124 = scmp.lt.s32.totalorder %s9, 2
    // Predicated region
    $region21: #{encode_graph.8} parent=5 // pred_check
      %p125 = pneg %p124
    $region22: #{encode_graph.8} parent=5 // pred_check_branch
      %127 = sbr.rel (%p125) target = $region24
    $region23: #{encode_graph.8} parent=5 // pred_region
      // Predicated region
      $region25: #{encode_graph.8} parent=23 // pred_check
        %p128 = pneg %p29
      $region26: #{encode_graph.8} parent=23 // pred_check_branch
        %130 = sbr.rel (%p128) target = $region28
      $region27: #{encode_graph.8} parent=23 // pred_region
        %s131 = smul.u32 8, %s9
        %p132 = scmp.lt.s32.totalorder %s131, 15
        %s133 = scalar_select %p132, %s131, 15
        %s134 = smul.addr %s133, 4
        %s135 = scalar_lea.vmem %s0, %s134
        %s136 = smul.u32 8, %s9
      $region28: #{encode_graph.8} parent=23 // pred_fallthru
        _
    $region24: #{encode_graph.8} parent=5 // pred_fallthru
      _
    %p137 = scmp.le.s32.totalorder 1, %s9
    %p138 = scmp.lt.s32.totalorder %s9, 3
    %p139 = pnand %p137, %p138
    %p140 = pneg %p139
    // Predicated region
    $region29: #{encode_graph.8} parent=5 // pred_check
      _
    $region30: #{encode_graph.8} parent=5 // pred_check_branch
      %142 = sbr.rel (%p139) target = $region32
    $region31: #{encode_graph.8} parent=5 // pred_region
      %s143 = ssub.s32 %s9, 1
      %s144 = smul.u32 8, %s14
      %p145 = scmp.lt.s32.totalorder %s144, 15
      %s146 = scalar_select %p145, %s144, 15
      %s147 = smul.addr %s146, 4
      %s148 = scalar_lea.vmem %s0, %s147
      %p149 = pneg %p35
      %p150 = pneg %p32
      %p151 = pneg %p56
      %p152 = pneg %p53
      %p153 = pneg %p77
      %p154 = pneg %p74
      %p155 = pneg %p103
      %p156 = pneg %p100
      %s157 = smul.u32 8, %s14
      %p158 = scmp.lt.s32.totalorder %s157, 15
      %s159 = scalar_select %p158, %s157, 15
      %s160 = smul.addr %s159, 4
      %s161 = scalar_lea.vmem %s3, %s160
      %s162 = smul.u32 8, %s14
      %p163 = scmp.lt.s32.totalorder %s162, 15
      %s164 = scalar_select %p163, %s162, 15
      %s165 = smul.addr %s164, 4
      %s166 = scalar_lea.vmem %s0, %s165
      %s167 = smul.u32 8, %s14
      %s168 = smul.u32 8, %s14
      %p169 = scmp.lt.s32.totalorder %s168, 15
      %s170 = scalar_select %p169, %s168, 15
      %s171 = smul.addr %s170, 4
      %s172 = scalar_lea.vmem %s3, %s171
      %s173 = smul.u32 8, %s14
      %v175 = vld [vmem:[%s166] sm:$0xf]
      %v176 = vld [vmem:[%s166 + $0x4] sm:$0xf]
      %v177 = vld [vmem:[%s166 + $0x8] sm:$0xf]
      %v178 = vld [vmem:[%s166 + $0xc] sm:$0xf]
      %v179 = vld [vmem:[%s166 + $0x10] sm:$0xf]
      %v180 = vld [vmem:[%s166 + $0x14] sm:$0xf]
      %v181 = vld [vmem:[%s166 + $0x18] sm:$0xf]
      %v182 = vld [vmem:[%s166 + $0x1c] sm:$0xf]
      %v183 = vld [vmem:[%s1] sm:$0xf]
      %v184 = vld [vmem:[%s1 + $0x4] sm:$0xf]
      %v185 = vld [vmem:[%s1 + $0x8] sm:$0xf]
      %v186 = vld [vmem:[%s1 + $0xc] sm:$0xf]
      %v187 = vld [vmem:[%s2] sm:$0x1]
      %v189 = vlaneseq
      %v190 = vshrl.u32 %v189, 7
      %v191 = vsub.s32 0, %v190
      %v192 = vrot.slane %v187, %v191
      %v202 = vunpack.c.l.b16 %v175
      %v203 = vunpack.c.l.b16 %v176
      %v204 = vunpack.c.l.b16 %v177
      %v205 = vunpack.c.l.b16 %v178
      %v206 = vunpack.c.l.b16 %v179
      %v207 = vunpack.c.l.b16 %v180
      %v208 = vunpack.c.l.b16 %v181
      %v209 = vunpack.c.l.b16 %v182
      %v210 = vpack.c.b16 %v203, %v202
      %v211 = vpack.c.b16 %v205, %v204
      %v212 = vpack.c.b16 %v207, %v206
      %v213 = vpack.c.b16 %v209, %v208
      %v218 = vunpack.c.l.b16 %v183
      %v219 = vunpack.c.l.b16 %v184
      %v220 = vunpack.c.l.b16 %v185
      %v221 = vunpack.c.l.b16 %v186
      %v222 = vpack.c.b16 %v219, %v218
      %v223 = vpack.c.b16 %v221, %v220
      %vm226 = vcmask 261120
      %v228 = vsel %vm226, %v210, 0
      %v231 = vsel %vm226, %v211, 0
      %v234 = vsel %vm226, %v212, 0
      %v237 = vsel %vm226, %v213, 0
      %239 = vmatprep.subr.bf16.mxu0 0
      %240 = vmatpush1.bf16.msra.mxu0 %v222
      %241 = vmatprep.subr.bf16.mxu0 0
      %242 = vmatpush1.bf16.msra.mxu0 %v223
      %243 = vmatprep.subr.bf16.mxu0 0
      %244 = vmatpush1.bf16.msra.mxu0 0
      %245 = vmatprep.subr.bf16.mxu0 0
      %246 = vmatpush1.bf16.msra.mxu0 0
      %247 = vmatprep.subr.bf16.mxu0 0
      %248 = vmatpush1.bf16.msra.mxu0 0
      %249 = vmatprep.subr.bf16.mxu0 0
      %250 = vmatpush1.bf16.msra.mxu0 0
      %251 = vmatprep.subr.bf16.mxu0 0
      %252 = vmatpush1.bf16.msra.mxu0 0
      %253 = vmatprep.subr.bf16.mxu0 0
      %254 = vmatpush1.bf16.msra.mxu0 0
      %255 = vmatprep.subr.bf16.mxu0 0
      %256 = vmatpush1.bf16.msra.mxu0 0
      %257 = vmatprep.subr.bf16.mxu0 0
      %258 = vmatpush1.bf16.msra.mxu0 0
      %259 = vmatprep.subr.bf16.mxu0 0
      %260 = vmatpush1.bf16.msra.mxu0 0
      %261 = vmatprep.subr.bf16.mxu0 0
      %262 = vmatpush1.bf16.msra.mxu0 0
      %263 = vmatprep.subr.bf16.mxu0 0
      %264 = vmatpush1.bf16.msra.mxu0 0
      %265 = vmatprep.subr.bf16.mxu0 0
      %266 = vmatpush1.bf16.msra.mxu0 0
      %267 = vmatprep.subr.bf16.mxu0 0
      %268 = vmatpush1.bf16.msra.mxu0 0
      %269 = vmatprep.subr.bf16.mxu0 0
      %270 = vmatpush1.bf16.msra.mxu0 0
      %271 = vmatprep.mubr.bf16.mxu0 0
      %272 = vmatmul.mubr.bf16.gmra.mrb[0].mxu0 %v228
      %v273 = vpop.f32.mrb[0].mxu0
      %v274 = vadd.f32 %v192, %v273
      %v275 = vpop.f32.mrb[0].mxu0
      %v276 = vpop.f32.mrb[0].mxu0
      %v277 = vadd.f32 %v192, %v276
      %v278 = vpop.f32.mrb[0].mxu0
      %279 = vmatprep.mubr.bf16.mxu0 0
      %280 = vmatmul.mubr.bf16.gmra.mrb[0].mxu0 %v231
      %v281 = vpop.f32.mrb[0].mxu0
      %v282 = vadd.f32 %v192, %v281
      %v283 = vpop.f32.mrb[0].mxu0
      %v284 = vpop.f32.mrb[0].mxu0
      %v285 = vadd.f32 %v192, %v284
      %v286 = vpop.f32.mrb[0].mxu0
      %287 = vmatprep.mubr.bf16.mxu0 0
      %288 = vmatmul.mubr.bf16.gmra.mrb[0].mxu0 %v234
      %v289 = vpop.f32.mrb[0].mxu0
      %v290 = vadd.f32 %v192, %v289
      %v291 = vpop.f32.mrb[0].mxu0
      %v292 = vpop.f32.mrb[0].mxu0
      %v293 = vadd.f32 %v192, %v292
      %v294 = vpop.f32.mrb[0].mxu0
      %295 = vmatprep.mubr.bf16.mxu0 0
      %296 = vmatmul.mubr.bf16.gmra.mrb[0].mxu0 %v237
      %v297 = vpop.f32.mrb[0].mxu0
      %v298 = vadd.f32 %v192, %v297
      %v299 = vpop.f32.mrb[0].mxu0
      %v300 = vpop.f32.mrb[0].mxu0
      %v301 = vadd.f32 %v192, %v300
      %v302 = vpop.f32.mrb[0].mxu0
      %303 = vdwg.mxu0
      %v304 = vpack.c.bf16 %v277, %v274
      %v305 = vpack.c.bf16 %v285, %v282
      %v306 = vpack.c.bf16 %v293, %v290
      %v307 = vpack.c.bf16 %v301, %v298
      %v312 = vunpack.c.l.b16 %v304
      %v313 = vunpack.c.h.b16 %v304
      %v314 = vunpack.c.l.b16 %v305
      %v315 = vunpack.c.h.b16 %v305
      %v316 = vunpack.c.l.b16 %v306
      %v317 = vunpack.c.h.b16 %v306
      %v318 = vunpack.c.l.b16 %v307
      %v319 = vunpack.c.h.b16 %v307
      %v320 = vpack.c.b16 %v312, %v312
      %v321 = vpack.c.b16 %v313, %v313
      %v322 = vpack.c.b16 %v314, %v314
      %v323 = vpack.c.b16 %v315, %v315
      %v324 = vpack.c.b16 %v316, %v316
      %v325 = vpack.c.b16 %v317, %v317
      %v326 = vpack.c.b16 %v318, %v318
      %v327 = vpack.c.b16 %v319, %v319
      %336 = vst [vmem:[%s172] sm:$0xf] %v320
      %337 = vst [vmem:[%s172 + $0x4] sm:$0xf] %v321
      %338 = vst [vmem:[%s172 + $0x8] sm:$0xf] %v322
      %339 = vst [vmem:[%s172 + $0xc] sm:$0xf] %v323
      %340 = vst [vmem:[%s172 + $0x10] sm:$0xf] %v324
      %341 = vst [vmem:[%s172 + $0x14] sm:$0xf] %v325
      %342 = vst [vmem:[%s172 + $0x18] sm:$0xf] %v326
      %343 = vst [vmem:[%s172 + $0x1c] sm:$0xf] %v327
      %s344 = smul.u32 8, %s14
      %p345 = scmp.lt.s32.totalorder %s344, 15
      %s346 = scalar_select %p345, %s344, 15
      %s347 = smul.addr %s346, 4
      %s348 = scalar_lea.vmem %s3, %s347
      // Predicated region
      $region33: #{encode_graph.8} parent=31 // pred_check
        %p349 = pneg %p100
      $region34: #{encode_graph.8} parent=31 // pred_check_branch
        %351 = sbr.rel (%p349) target = $region36
      $region35: #{encode_graph.8} parent=31 // pred_region
        %s352 = smul.u32 8, %s14
      $region36: #{encode_graph.8} parent=31 // pred_fallthru
        _
    $region32: #{encode_graph.8} parent=5 // pred_fallthru
      _
    %p353 = scmp.le.s32.totalorder 2, %s9
    // Predicated region
    $region37: #{encode_graph.8} parent=5 // pred_check
      %p354 = pneg %p353
    $region38: #{encode_graph.8} parent=5 // pred_check_branch
      %356 = sbr.rel (%p354) target = $region40
    $region39: #{encode_graph.8} parent=5 // pred_region
      %s357 = ssub.s32 %s9, 2
      // Predicated region
      $region41: #{encode_graph.8} parent=39 // pred_check
        %p358 = pneg %p106
      $region42: #{encode_graph.8} parent=39 // pred_check_branch
        %360 = sbr.rel (%p358) target = $region44
      $region43: #{encode_graph.8} parent=39 // pred_region
        %s361 = smul.u32 8, %s15
        %p362 = scmp.lt.s32.totalorder %s361, 15
        %s363 = scalar_select %p362, %s361, 15
        %s364 = smul.addr %s363, 4
        %s365 = scalar_lea.vmem %s3, %s364
      $region44: #{encode_graph.8} parent=39 // pred_fallthru
        _
    $region40: #{encode_graph.8} parent=5 // pred_fallthru
      _
  $region6: #{encode_graph.8} parent=0 // loop_footer
    %s13 = sadd.s32 1, %s9
  $region7: #{encode_graph.8} parent=0 // loop_footer_branch
    %8 = sbr.rel target = $region3
  $region8: #{encode_graph.8} parent=0 // loop_exit
    _

// kernel: encode_graph.9
$region0: #{encode_graph.9}
  #allocation0 [shape = 'u32[]', space=smem, size = 0x4, offset = 0x4, fixed_abs, tag = 'smem constant byte address 0x4 - core index']
  #allocation1 [shape = 'u32[144,128]{1,0:T(1,128)}', space=vmem, size = 0x12000, scoped, tag = 'internal scratch']
  %s0 = inlined_call_operand.vmem [shape: bf16[128,128], index: 0, kind: input, shape index: {}]
  %s1 = inlined_call_operand.vmem [shape: f32[1,128], index: 1, kind: input, shape index: {}]
  %s2 = inlined_call_operand.vmem [shape: f32[1,128], index: 2, kind: input, shape index: {}]
  %s3 = inlined_call_operand.vmem [shape: bf16[128,384], index: 3, kind: input, shape index: {}]
  %s4 = inlined_call_operand.vmem [shape: f32[1,384], index: 4, kind: input, shape index: {}]
  %s5 = inlined_call_operand.vmem [shape: bf16[128,384], index: 5, kind: output, shape index: {}]
  %s6 = sld [smem:[#allocation0]]
  $region53: #{encode_graph.9} parent=0
    _
  %s8 = ssub.s32 1, %s6
  %s9 = scalar_select 0, %s8, %s6
  loop: start=0, step=1, limit=4
  $region2: #{encode_graph.9} parent=0 // loop_pre_header
    _
  $region3: #{encode_graph.9} parent=0 // loop_header
    %s11 = sphi 0, %s15
    %p12 = scmp.ge.s32.totalorder %s11, 4
    %s21 = sphi 0, %s23
    %s24 = sphi 0, %s21
    %s25 = sphi 0, %s24
    %s41 = sphi 0, %s25
    %s45 = sphi 0, %s45
    %s47 = sphi 0, %s45
    %s48 = sphi 0, %s47
    %s62 = sphi 0, %s48
    %s66 = sphi 0, %s66
    %s68 = sphi 0, %s66
    %s69 = sphi 0, %s68
    %s83 = sphi 0, %s69
    %s87 = sphi 0, %s87
    %s89 = sphi 0, %s87
    %s90 = sphi 0, %s89
    %s104 = sphi 0, %s90
    %s108 = sphi 0, %s108
    %s110 = sphi 0, %s108
    %s111 = sphi 0, %s110
    %s125 = sphi 0, %s111
    %s131 = sphi 0, %s133
    %s134 = sphi 0, %s131
    %s135 = sphi 0, %s134
    %s151 = sphi 0, %s135
  $region4: #{encode_graph.9} parent=0 // loop_header_branch
    %14 = sbr.rel (%p12) target = $region8
  $region5: #{encode_graph.9} parent=0 // loop_body
    %s16 = ssub.s32 %s11, 1
    %s17 = ssub.s32 %s11, 2
    %s18 = sadd.s32 %s11, 1
    %s19 = ssub.s32 %s11, %s18
    %p20 = scmp.eq.s32.totalorder %s19, 0
    %s22 = sadd.s32 %s21, 1
    %s23 = scalar_select %p20, %s21, %s22
    %p26 = pneg %p20
    %p27 = scmp.eq.s32.totalorder %s11, 1
    %p28 = por %p26, %p27
    %p29 = scmp.ne.s32.totalorder %s21, %s24
    %p30 = scmp.eq.s32.totalorder %s11, 0
    %p31 = por %p29, %p30
    %p32 = scmp.ne.s32.totalorder %s21, %s24
    %p33 = scmp.eq.s32.totalorder %s16, 1
    %p34 = por %p32, %p33
    %p35 = scmp.ne.s32.totalorder %s24, %s25
    %p36 = scmp.eq.s32.totalorder %s16, 0
    %p37 = por %p35, %p36
    %p38 = scmp.ne.s32.totalorder %s24, %s25
    %p39 = scmp.eq.s32.totalorder %s17, 1
    %p40 = por %p38, %p39
    %p42 = scmp.ne.s32.totalorder %s25, %s41
    %p43 = scmp.eq.s32.totalorder %s17, 0
    %p44 = por %p42, %p43
    %s46 = sadd.s32 %s45, 1
    %p49 = scmp.eq.s32.totalorder %s11, 1
    %p50 = scmp.ne.s32.totalorder %s45, %s47
    %p51 = scmp.eq.s32.totalorder %s11, 0
    %p52 = por %p50, %p51
    %p53 = scmp.ne.s32.totalorder %s45, %s47
    %p54 = scmp.eq.s32.totalorder %s16, 1
    %p55 = por %p53, %p54
    %p56 = scmp.ne.s32.totalorder %s47, %s48
    %p57 = scmp.eq.s32.totalorder %s16, 0
    %p58 = por %p56, %p57
    %p59 = scmp.ne.s32.totalorder %s47, %s48
    %p60 = scmp.eq.s32.totalorder %s17, 1
    %p61 = por %p59, %p60
    %p63 = scmp.ne.s32.totalorder %s48, %s62
    %p64 = scmp.eq.s32.totalorder %s17, 0
    %p65 = por %p63, %p64
    %s67 = sadd.s32 %s66, 1
    %p70 = scmp.eq.s32.totalorder %s11, 1
    %p71 = scmp.ne.s32.totalorder %s66, %s68
    %p72 = scmp.eq.s32.totalorder %s11, 0
    %p73 = por %p71, %p72
    %p74 = scmp.ne.s32.totalorder %s66, %s68
    %p75 = scmp.eq.s32.totalorder %s16, 1
    %p76 = por %p74, %p75
    %p77 = scmp.ne.s32.totalorder %s68, %s69
    %p78 = scmp.eq.s32.totalorder %s16, 0
    %p79 = por %p77, %p78
    %p80 = scmp.ne.s32.totalorder %s68, %s69
    %p81 = scmp.eq.s32.totalorder %s17, 1
    %p82 = por %p80, %p81
    %p84 = scmp.ne.s32.totalorder %s69, %s83
    %p85 = scmp.eq.s32.totalorder %s17, 0
    %p86 = por %p84, %p85
    %s88 = sadd.s32 %s87, 1
    %p91 = scmp.eq.s32.totalorder %s11, 1
    %p92 = scmp.ne.s32.totalorder %s87, %s89
    %p93 = scmp.eq.s32.totalorder %s11, 0
    %p94 = por %p92, %p93
    %p95 = scmp.ne.s32.totalorder %s87, %s89
    %p96 = scmp.eq.s32.totalorder %s16, 1
    %p97 = por %p95, %p96
    %p98 = scmp.ne.s32.totalorder %s89, %s90
    %p99 = scmp.eq.s32.totalorder %s16, 0
    %p100 = por %p98, %p99
    %p101 = scmp.ne.s32.totalorder %s89, %s90
    %p102 = scmp.eq.s32.totalorder %s17, 1
    %p103 = por %p101, %p102
    %p105 = scmp.ne.s32.totalorder %s90, %s104
    %p106 = scmp.eq.s32.totalorder %s17, 0
    %p107 = por %p105, %p106
    %s109 = sadd.s32 %s108, 1
    %p112 = scmp.eq.s32.totalorder %s11, 1
    %p113 = scmp.ne.s32.totalorder %s108, %s110
    %p114 = scmp.eq.s32.totalorder %s11, 0
    %p115 = por %p113, %p114
    %p116 = scmp.ne.s32.totalorder %s108, %s110
    %p117 = scmp.eq.s32.totalorder %s16, 1
    %p118 = por %p116, %p117
    %p119 = scmp.ne.s32.totalorder %s110, %s111
    %p120 = scmp.eq.s32.totalorder %s16, 0
    %p121 = por %p119, %p120
    %p122 = scmp.ne.s32.totalorder %s110, %s111
    %p123 = scmp.eq.s32.totalorder %s17, 1
    %p124 = por %p122, %p123
    %p126 = scmp.ne.s32.totalorder %s111, %s125
    %p127 = scmp.eq.s32.totalorder %s17, 0
    %p128 = por %p126, %p127
    %s129 = ssub.s32 %s11, %s18
    %p130 = scmp.eq.s32.totalorder %s129, 0
    %s132 = sadd.s32 %s131, 1
    %s133 = scalar_select %p130, %s131, %s132
    %p136 = pneg %p130
    %p137 = scmp.eq.s32.totalorder %s11, 1
    %p138 = por %p136, %p137
    %p139 = scmp.ne.s32.totalorder %s131, %s134
    %p140 = scmp.eq.s32.totalorder %s11, 0
    %p141 = por %p139, %p140
    %p142 = scmp.ne.s32.totalorder %s131, %s134
    %p143 = scmp.eq.s32.totalorder %s16, 1
    %p144 = por %p142, %p143
    %p145 = scmp.ne.s32.totalorder %s134, %s135
    %p146 = scmp.eq.s32.totalorder %s16, 0
    %p147 = por %p145, %p146
    %p148 = scmp.ne.s32.totalorder %s134, %s135
    %p149 = scmp.eq.s32.totalorder %s17, 1
    %p150 = por %p148, %p149
    %p152 = scmp.ne.s32.totalorder %s135, %s151
    %p153 = scmp.eq.s32.totalorder %s17, 0
    %p154 = por %p152, %p153
    %p155 = scmp.le.s32.totalorder 1, %s11
    %p156 = scmp.lt.s32.totalorder %s11, 3
    %p157 = pnand %p155, %p156
    %p158 = pneg %p157
    // Predicated region
    $region9: #{encode_graph.9} parent=5 // pred_check
      _
    $region10: #{encode_graph.9} parent=5 // pred_check_branch
      %160 = sbr.rel (%p157) target = $region12
    $region11: #{encode_graph.9} parent=5 // pred_region
      %s161 = ssub.s32 %s11, 1
      // Predicated region
      $region13: #{encode_graph.9} parent=11 // pred_check
        %p162 = pneg %p58
      $region14: #{encode_graph.9} parent=11 // pred_check_branch
        %164 = sbr.rel (%p162) target = $region16
      $region15: #{encode_graph.9} parent=11 // pred_region
        _
      $region16: #{encode_graph.9} parent=11 // pred_fallthru
        _
      // Predicated region
      $region17: #{encode_graph.9} parent=11 // pred_check
        %p165 = pneg %p79
      $region18: #{encode_graph.9} parent=11 // pred_check_branch
        %167 = sbr.rel (%p165) target = $region20
      $region19: #{encode_graph.9} parent=11 // pred_region
        _
      $region20: #{encode_graph.9} parent=11 // pred_fallthru
        _
      // Predicated region
      $region21: #{encode_graph.9} parent=11 // pred_check
        %p168 = pneg %p100
      $region22: #{encode_graph.9} parent=11 // pred_check_branch
        %170 = sbr.rel (%p168) target = $region24
      $region23: #{encode_graph.9} parent=11 // pred_region
        _
      $region24: #{encode_graph.9} parent=11 // pred_fallthru
        _
      // Predicated region
      $region25: #{encode_graph.9} parent=11 // pred_check
        %p171 = pneg %p121
      $region26: #{encode_graph.9} parent=11 // pred_check_branch
        %173 = sbr.rel (%p171) target = $region28
      $region27: #{encode_graph.9} parent=11 // pred_region
        _
      $region28: #{encode_graph.9} parent=11 // pred_fallthru
        _
    $region12: #{encode_graph.9} parent=5 // pred_fallthru
      _
    %p174 = scmp.lt.s32.totalorder %s11, 2
    // Predicated region
    $region29: #{encode_graph.9} parent=5 // pred_check
      %p175 = pneg %p174
    $region30: #{encode_graph.9} parent=5 // pred_check_branch
      %177 = sbr.rel (%p175) target = $region32
    $region31: #{encode_graph.9} parent=5 // pred_region
      // Predicated region
      $region33: #{encode_graph.9} parent=31 // pred_check
        %p178 = pneg %p31
      $region34: #{encode_graph.9} parent=31 // pred_check_branch
        %180 = sbr.rel (%p178) target = $region36
      $region35: #{encode_graph.9} parent=31 // pred_region
        %s181 = smul.u32 8, %s11
        %p182 = scmp.lt.s32.totalorder %s181, 15
        %s183 = scalar_select %p182, %s181, 15
        %s184 = smul.addr %s183, 4
        %s185 = scalar_lea.vmem %s0, %s184
        %s186 = smul.u32 8, %s11
      $region36: #{encode_graph.9} parent=31 // pred_fallthru
        _
    $region32: #{encode_graph.9} parent=5 // pred_fallthru
      _
    %p187 = scmp.le.s32.totalorder 1, %s11
    %p188 = scmp.lt.s32.totalorder %s11, 3
    %p189 = pnand %p187, %p188
    %p190 = pneg %p189
    // Predicated region
    $region37: #{encode_graph.9} parent=5 // pred_check
      _
    $region38: #{encode_graph.9} parent=5 // pred_check_branch
      %192 = sbr.rel (%p189) target = $region40
    $region39: #{encode_graph.9} parent=5 // pred_region
      %s193 = ssub.s32 %s11, 1
      %s194 = smul.u32 8, %s16
      %p195 = scmp.lt.s32.totalorder %s194, 15
      %s196 = scalar_select %p195, %s194, 15
      %s197 = smul.addr %s196, 4
      %s198 = scalar_lea.vmem %s0, %s197
      %p199 = pneg %p37
      %p200 = pneg %p34
      %p201 = pneg %p58
      %p202 = pneg %p55
      %p203 = pneg %p79
      %p204 = pneg %p76
      %p205 = pneg %p100
      %p206 = pneg %p97
      %p207 = pneg %p121
      %p208 = pneg %p118
      %p209 = pneg %p147
      %p210 = pneg %p144
      %s211 = smul.u32 8, %s16
      %p212 = scmp.lt.s32.totalorder %s211, 15
      %s213 = scalar_select %p212, %s211, 15
      %s214 = smul.addr %s213, 3
      %s215 = smul.addr %s214, 4
      %s216 = scalar_lea.vmem %s5, %s215
      %s217 = smul.u32 8, %s16
      %p218 = scmp.lt.s32.totalorder %s217, 15
      %s219 = scalar_select %p218, %s217, 15
      %s220 = smul.addr %s219, 4
      %s221 = scalar_lea.vmem %s0, %s220
      %s222 = smul.u32 8, %s16
      %s223 = smul.u32 8, %s16
      %p224 = scmp.lt.s32.totalorder %s223, 15
      %s225 = scalar_select %p224, %s223, 15
      %s226 = smul.addr %s225, 3
      %s227 = smul.addr %s226, 4
      %s228 = scalar_lea.vmem %s5, %s227
      %s229 = smul.u32 8, %s16
      %v231 = vld [vmem:[%s221] sm:$0xf]
      %v232 = vld [vmem:[%s221 + $0x4] sm:$0xf]
      %v233 = vld [vmem:[%s221 + $0x8] sm:$0xf]
      %v234 = vld [vmem:[%s221 + $0xc] sm:$0xf]
      %v235 = vld [vmem:[%s221 + $0x10] sm:$0xf]
      %v236 = vld [vmem:[%s221 + $0x14] sm:$0xf]
      %v237 = vld [vmem:[%s221 + $0x18] sm:$0xf]
      %v238 = vld [vmem:[%s221 + $0x1c] sm:$0xf]
      %v239 = vunpack.c.l.bf16 %v231
      %v240 = vunpack.c.l.bf16 %v232
      %v241 = vunpack.c.l.bf16 %v233
      %v242 = vunpack.c.l.bf16 %v234
      %v243 = vunpack.c.l.bf16 %v235
      %v244 = vunpack.c.l.bf16 %v236
      %v245 = vunpack.c.l.bf16 %v237
      %v246 = vunpack.c.l.bf16 %v238
      %v247 = vld [vmem:[%s1] sm:$0x1]
      %v248 = vld [vmem:[%s2] sm:$0x1]
      %249 = vadd.xlane.f32.xlu0 %v239
      %v250 = vpop.xlane.xlu0 %249
      %251 = vadd.xlane.f32.xlu0 %v240
      %v252 = vpop.xlane.xlu0 %251
      %253 = vadd.xlane.f32.xlu0 %v241
      %v254 = vpop.xlane.xlu0 %253
      %255 = vadd.xlane.f32.xlu0 %v242
      %v256 = vpop.xlane.xlu0 %255
      %257 = vadd.xlane.f32.xlu0 %v243
      %v258 = vpop.xlane.xlu0 %257
      %259 = vadd.xlane.f32.xlu0 %v244
      %v260 = vpop.xlane.xlu0 %259
      %261 = vadd.xlane.f32.xlu0 %v245
      %v262 = vpop.xlane.xlu0 %261
      %263 = vadd.xlane.f32.xlu0 %v246
      %v264 = vpop.xlane.xlu0 %263
      %v265 = vrcp.pop 128.0
      %v266 = vmul.f32 %v250, %v265
      %v267 = vmul.f32 %v252, %v265
      %v268 = vmul.f32 %v254, %v265
      %v269 = vmul.f32 %v256, %v265
      %v270 = vmul.f32 %v258, %v265
      %v271 = vmul.f32 %v260, %v265
      %v272 = vmul.f32 %v262, %v265
      %v273 = vmul.f32 %v264, %v265
      %v274 = vsub.f32 %v239, %v266
      %v275 = vsub.f32 %v240, %v267
      %v276 = vsub.f32 %v241, %v268
      %v277 = vsub.f32 %v242, %v269
      %v278 = vsub.f32 %v243, %v270
      %v279 = vsub.f32 %v244, %v271
      %v280 = vsub.f32 %v245, %v272
      %v281 = vsub.f32 %v246, %v273
      %v282 = vmul.f32 %v274, %v274
      %v283 = vmul.f32 %v275, %v275
      %v284 = vmul.f32 %v276, %v276
      %v285 = vmul.f32 %v277, %v277
      %v286 = vmul.f32 %v278, %v278
      %v287 = vmul.f32 %v279, %v279
      %v288 = vmul.f32 %v280, %v280
      %v289 = vmul.f32 %v281, %v281
      %290 = vadd.xlane.f32.xlu0 %v282
      %v291 = vpop.xlane.xlu0 %290
      %292 = vadd.xlane.f32.xlu0 %v283
      %v293 = vpop.xlane.xlu0 %292
      %294 = vadd.xlane.f32.xlu0 %v284
      %v295 = vpop.xlane.xlu0 %294
      %296 = vadd.xlane.f32.xlu0 %v285
      %v297 = vpop.xlane.xlu0 %296
      %298 = vadd.xlane.f32.xlu0 %v286
      %v299 = vpop.xlane.xlu0 %298
      %300 = vadd.xlane.f32.xlu0 %v287
      %v301 = vpop.xlane.xlu0 %300
      %302 = vadd.xlane.f32.xlu0 %v288
      %v303 = vpop.xlane.xlu0 %302
      %304 = vadd.xlane.f32.xlu0 %v289
      %v305 = vpop.xlane.xlu0 %304
      %v306 = vmul.f32 %v291, %v265
      %v307 = vmul.f32 %v293, %v265
      %v308 = vmul.f32 %v295, %v265
      %v309 = vmul.f32 %v297, %v265
      %v310 = vmul.f32 %v299, %v265
      %v311 = vmul.f32 %v301, %v265
      %v312 = vmul.f32 %v303, %v265
      %v313 = vmul.f32 %v305, %v265
      %v314 = vadd.f32 %v306, 1e-05
      %v315 = vadd.f32 %v307, 1e-05
      %v316 = vadd.f32 %v308, 1e-05
      %v317 = vadd.f32 %v309, 1e-05
      %v318 = vadd.f32 %v310, 1e-05
      %v319 = vadd.f32 %v311, 1e-05
      %v320 = vadd.f32 %v312, 1e-05
      %v321 = vadd.f32 %v313, 1e-05
      %v322 = vrsqrt.pop %v314
      %v323 = vrsqrt.pop %v315
      %v324 = vrsqrt.pop %v316
      %v325 = vrsqrt.pop %v317
      %v326 = vrsqrt.pop %v318
      %v327 = vrsqrt.pop %v319
      %v328 = vrsqrt.pop %v320
      %v329 = vrsqrt.pop %v321
      %v330 = vmul.f32 %v274, %v322
      %v331 = vmul.f32 %v275, %v323
      %v332 = vmul.f32 %v276, %v324
      %v333 = vmul.f32 %v277, %v325
      %v334 = vmul.f32 %v278, %v326
      %v335 = vmul.f32 %v279, %v327
      %v336 = vmul.f32 %v280, %v328
      %v337 = vmul.f32 %v281, %v329
      %v339 = vlaneseq
      %v340 = vshrl.u32 %v339, 7
      %v341 = vsub.s32 0, %v340
      %v342 = vrot.slane %v247, %v341
      %v344 = vmul.f32 %v330, %v342
      %v345 = vmul.f32 %v331, %v342
      %v346 = vmul.f32 %v332, %v342
      %v347 = vmul.f32 %v333, %v342
      %v348 = vmul.f32 %v334, %v342
      %v349 = vmul.f32 %v335, %v342
      %v350 = vmul.f32 %v336, %v342
      %v351 = vmul.f32 %v337, %v342
      %v353 = vlaneseq
      %v354 = vshrl.u32 %v353, 7
      %v355 = vsub.s32 0, %v354
      %v356 = vrot.slane %v248, %v355
      %v358 = vadd.f32 %v344, %v356
      %v359 = vadd.f32 %v345, %v356
      %v360 = vadd.f32 %v346, %v356
      %v361 = vadd.f32 %v347, %v356
      %v362 = vadd.f32 %v348, %v356
      %v363 = vadd.f32 %v349, %v356
      %v364 = vadd.f32 %v350, %v356
      %v365 = vadd.f32 %v351, %v356
      %v366 = vpack.c.bf16 %v359, %v358
      %v367 = vpack.c.bf16 %v361, %v360
      %v368 = vpack.c.bf16 %v363, %v362
      %v369 = vpack.c.bf16 %v365, %v364
      %v370 = vld [vmem:[%s3] sm:$0xff]
      %v371 = vld [vmem:[%s3 + $0x8] sm:$0xf]
      %v372 = vld [vmem:[%s3 + $0xc] sm:$0xff]
      %v373 = vld [vmem:[%s3 + $0x14] sm:$0xf]
      %v374 = vld [vmem:[%s3 + $0x18] sm:$0xff]
      %v375 = vld [vmem:[%s3 + $0x20] sm:$0xf]
      %v376 = vld [vmem:[%s3 + $0x24] sm:$0xff]
      %v377 = vld [vmem:[%s3 + $0x2c] sm:$0xf]
      %v378 = vld [vmem:[%s3 + $0x30] sm:$0xff]
      %v379 = vld [vmem:[%s3 + $0x38] sm:$0xf]
      %v380 = vld [vmem:[%s3 + $0x3c] sm:$0xff]
      %v381 = vld [vmem:[%s3 + $0x44] sm:$0xf]
      %v382 = vld [vmem:[%s3 + $0x48] sm:$0xff]
      %v383 = vld [vmem:[%s3 + $0x50] sm:$0xf]
      %v384 = vld [vmem:[%s3 + $0x54] sm:$0xff]
      %v385 = vld [vmem:[%s3 + $0x5c] sm:$0xf]
      %v386 = vld [vmem:[%s3 + $0x60] sm:$0xff]
      %v387 = vld [vmem:[%s3 + $0x68] sm:$0xf]
      %v388 = vld [vmem:[%s3 + $0x6c] sm:$0xff]
      %v389 = vld [vmem:[%s3 + $0x74] sm:$0xf]
      %v390 = vld [vmem:[%s3 + $0x78] sm:$0xff]
      %v391 = vld [vmem:[%s3 + $0x80] sm:$0xf]
      %v392 = vld [vmem:[%s3 + $0x84] sm:$0xff]
      %v393 = vld [vmem:[%s3 + $0x8c] sm:$0xf]
      %v394 = vld [vmem:[%s3 + $0x90] sm:$0xff]
      %v395 = vld [vmem:[%s3 + $0x98] sm:$0xf]
      %v396 = vld [vmem:[%s3 + $0x9c] sm:$0xff]
      %v397 = vld [vmem:[%s3 + $0xa4] sm:$0xf]
      %v398 = vld [vmem:[%s3 + $0xa8] sm:$0xff]
      %v399 = vld [vmem:[%s3 + $0xb0] sm:$0xf]
      %v400 = vld [vmem:[%s3 + $0xb4] sm:$0xff]
      %v401 = vld [vmem:[%s3 + $0xbc] sm:$0xf]
      %v402 = vld [vmem:[%s4] sm:$0x7]
      %v404 = vlaneseq
      %v405 = vshrl.u32 %v404, 7
      %v406 = vsub.s32 0, %v405
      %v407 = vrot.slane %v402, %v406
      %v408 = vlaneseq
      %v409 = vshrl.u32 %v408, 7
      %v410 = vsub.s32 1, %v409
      %v411 = vrot.slane %v402, %v410
      %v412 = vlaneseq
      %v413 = vshrl.u32 %v412, 7
      %v414 = vsub.s32 2, %v413
      %v415 = vrot.slane %v402, %v414
      %v451 = vunpack.c.l.b16 %v370
      %v452 = vunpack.c.h.b16 %v370
      %v453 = vunpack.c.l.b16 %v371
      %v454 = vunpack.c.l.b16 %v372
      %v455 = vunpack.c.h.b16 %v372
      %v456 = vunpack.c.l.b16 %v373
      %v457 = vunpack.c.l.b16 %v374
      %v458 = vunpack.c.h.b16 %v374
      %v459 = vunpack.c.l.b16 %v375
      %v460 = vunpack.c.l.b16 %v376
      %v461 = vunpack.c.h.b16 %v376
      %v462 = vunpack.c.l.b16 %v377
      %v463 = vunpack.c.l.b16 %v378
      %v464 = vunpack.c.h.b16 %v378
      %v465 = vunpack.c.l.b16 %v379
      %v466 = vunpack.c.l.b16 %v380
      %v467 = vunpack.c.h.b16 %v380
      %v468 = vunpack.c.l.b16 %v381
      %v469 = vunpack.c.l.b16 %v382
      %v470 = vunpack.c.h.b16 %v382
      %v471 = vunpack.c.l.b16 %v383
      %v472 = vunpack.c.l.b16 %v384
      %v473 = vunpack.c.h.b16 %v384
      %v474 = vunpack.c.l.b16 %v385
      %v475 = vunpack.c.l.b16 %v386
      %v476 = vunpack.c.h.b16 %v386
      %v477 = vunpack.c.l.b16 %v387
      %v478 = vunpack.c.l.b16 %v388
      %v479 = vunpack.c.h.b16 %v388
      %v480 = vunpack.c.l.b16 %v389
      %v481 = vunpack.c.l.b16 %v390
      %v482 = vunpack.c.h.b16 %v390
      %v483 = vunpack.c.l.b16 %v391
      %v484 = vunpack.c.l.b16 %v392
      %v485 = vunpack.c.h.b16 %v392
      %v486 = vunpack.c.l.b16 %v393
      %v487 = vunpack.c.l.b16 %v394
      %v488 = vunpack.c.h.b16 %v394
      %v489 = vunpack.c.l.b16 %v395
      %v490 = vunpack.c.l.b16 %v396
      %v491 = vunpack.c.h.b16 %v396
      %v492 = vunpack.c.l.b16 %v397
      %v493 = vunpack.c.l.b16 %v398
      %v494 = vunpack.c.h.b16 %v398
      %v495 = vunpack.c.l.b16 %v399
      %v496 = vunpack.c.l.b16 %v400
      %v497 = vunpack.c.h.b16 %v400
      %v498 = vunpack.c.l.b16 %v401
      %v499 = vpack.c.b16 %v454, %v451
      %v500 = vpack.c.b16 %v455, %v452
      %v501 = vpack.c.b16 %v456, %v453
      %v502 = vpack.c.b16 %v460, %v457
      %v503 = vpack.c.b16 %v461, %v458
      %v504 = vpack.c.b16 %v462, %v459
      %v505 = vpack.c.b16 %v466, %v463
      %v506 = vpack.c.b16 %v467, %v464
      %v507 = vpack.c.b16 %v468, %v465
      %v508 = vpack.c.b16 %v472, %v469
      %v509 = vpack.c.b16 %v473, %v470
      %v510 = vpack.c.b16 %v474, %v471
      %v511 = vpack.c.b16 %v478, %v475
      %v512 = vpack.c.b16 %v479, %v476
      %v513 = vpack.c.b16 %v480, %v477
      %v514 = vpack.c.b16 %v484, %v481
      %v515 = vpack.c.b16 %v485, %v482
      %v516 = vpack.c.b16 %v486, %v483
      %v517 = vpack.c.b16 %v490, %v487
      %v518 = vpack.c.b16 %v491, %v488
      %v519 = vpack.c.b16 %v492, %v489
      %v520 = vpack.c.b16 %v496, %v493
      %v521 = vpack.c.b16 %v497, %v494
      %v522 = vpack.c.b16 %v498, %v495
      %547 = vmatprep.subr.bf16.mxu0 %v500
      %548 = vmatpush1.bf16.msra.mxu0 %v499
      %549 = vmatprep.subr.bf16.mxu0 %v503
      %550 = vmatpush1.bf16.msra.mxu0 %v502
      %551 = vmatprep.subr.bf16.mxu0 %v506
      %552 = vmatpush1.bf16.msra.mxu0 %v505
      %553 = vmatprep.subr.bf16.mxu0 %v509
      %554 = vmatpush1.bf16.msra.mxu0 %v508
      %555 = vmatprep.subr.bf16.mxu0 %v512
      %556 = vmatpush1.bf16.msra.mxu0 %v511
      %557 = vmatprep.subr.bf16.mxu0 %v515
      %558 = vmatpush1.bf16.msra.mxu0 %v514
      %559 = vmatprep.subr.bf16.mxu0 %v518
      %560 = vmatpush1.bf16.msra.mxu0 %v517
      %561 = vmatprep.subr.bf16.mxu0 %v521
      %562 = vmatpush1.bf16.msra.mxu0 %v520
      %563 = vmatprep.subr.bf16.mxu0 0
      %564 = vmatpush1.bf16.msra.mxu0 0
      %565 = vmatprep.subr.bf16.mxu0 0
      %566 = vmatpush1.bf16.msra.mxu0 0
      %567 = vmatprep.subr.bf16.mxu0 0
      %568 = vmatpush1.bf16.msra.mxu0 0
      %569 = vmatprep.subr.bf16.mxu0 0
      %570 = vmatpush1.bf16.msra.mxu0 0
      %571 = vmatprep.subr.bf16.mxu0 0
      %572 = vmatpush1.bf16.msra.mxu0 0
      %573 = vmatprep.subr.bf16.mxu0 0
      %574 = vmatpush1.bf16.msra.mxu0 0
      %575 = vmatprep.subr.bf16.mxu0 0
      %576 = vmatpush1.bf16.msra.mxu0 0
      %577 = vmatprep.subr.bf16.mxu0 0
      %578 = vmatpush1.bf16.msra.mxu0 0
      %579 = vmatprep.mubr.bf16.mxu0 0
      %580 = vmatmul.mubr.bf16.gmra.mrb[0].mxu0 %v366
      %v581 = vpop.f32.mrb[0].mxu0
      %v582 = vadd.f32 %v407, %v581
      %v583 = vpop.f32.mrb[0].mxu0
      %v584 = vadd.f32 %v411, %v583
      %v585 = vpop.f32.mrb[0].mxu0
      %v586 = vadd.f32 %v407, %v585
      %v587 = vpop.f32.mrb[0].mxu0
      %v588 = vadd.f32 %v411, %v587
      %589 = vmatprep.mubr.bf16.mxu0 0
      %590 = vmatmul.mubr.bf16.gmra.mrb[0].mxu0 %v367
      %v591 = vpop.f32.mrb[0].mxu0
      %v592 = vadd.f32 %v407, %v591
      %v593 = vpop.f32.mrb[0].mxu0
      %v594 = vadd.f32 %v411, %v593
      %v595 = vpop.f32.mrb[0].mxu0
      %v596 = vadd.f32 %v407, %v595
      %v597 = vpop.f32.mrb[0].mxu0
      %v598 = vadd.f32 %v411, %v597
      %599 = vmatprep.mubr.bf16.mxu0 0
      %600 = vmatmul.mubr.bf16.gmra.mrb[0].mxu0 %v368
      %v601 = vpop.f32.mrb[0].mxu0
      %v602 = vadd.f32 %v407, %v601
      %v603 = vpop.f32.mrb[0].mxu0
      %v604 = vadd.f32 %v411, %v603
      %v605 = vpop.f32.mrb[0].mxu0
      %v606 = vadd.f32 %v407, %v605
      %v607 = vpop.f32.mrb[0].mxu0
      %v608 = vadd.f32 %v411, %v607
      %609 = vmatprep.mubr.bf16.mxu0 0
      %610 = vmatmul.mubr.bf16.gmra.mrb[0].mxu0 %v369
      %v611 = vpop.f32.mrb[0].mxu0
      %v612 = vadd.f32 %v407, %v611
      %v613 = vpop.f32.mrb[0].mxu0
      %v614 = vadd.f32 %v411, %v613
      %v615 = vpop.f32.mrb[0].mxu0
      %v616 = vadd.f32 %v407, %v615
      %v617 = vpop.f32.mrb[0].mxu0
      %v618 = vadd.f32 %v411, %v617
      %619 = vdwg.mxu0
      %620 = vmatprep.subr.bf16.mxu0 0
      %621 = vmatpush1.bf16.msra.mxu0 %v501
      %622 = vmatprep.subr.bf16.mxu0 0
      %623 = vmatpush1.bf16.msra.mxu0 %v504
      %624 = vmatprep.subr.bf16.mxu0 0
      %625 = vmatpush1.bf16.msra.mxu0 %v507
      %626 = vmatprep.subr.bf16.mxu0 0
      %627 = vmatpush1.bf16.msra.mxu0 %v510
      %628 = vmatprep.subr.bf16.mxu0 0
      %629 = vmatpush1.bf16.msra.mxu0 %v513
      %630 = vmatprep.subr.bf16.mxu0 0
      %631 = vmatpush1.bf16.msra.mxu0 %v516
      %632 = vmatprep.subr.bf16.mxu0 0
      %633 = vmatpush1.bf16.msra.mxu0 %v519
      %634 = vmatprep.subr.bf16.mxu0 0
      %635 = vmatpush1.bf16.msra.mxu0 %v522
      %636 = vmatprep.subr.bf16.mxu0 0
      %637 = vmatpush1.bf16.msra.mxu0 0
      %638 = vmatprep.subr.bf16.mxu0 0
      %639 = vmatpush1.bf16.msra.mxu0 0
      %640 = vmatprep.subr.bf16.mxu0 0
      %641 = vmatpush1.bf16.msra.mxu0 0
      %642 = vmatprep.subr.bf16.mxu0 0
      %643 = vmatpush1.bf16.msra.mxu0 0
      %644 = vmatprep.subr.bf16.mxu0 0
      %645 = vmatpush1.bf16.msra.mxu0 0
      %646 = vmatprep.subr.bf16.mxu0 0
      %647 = vmatpush1.bf16.msra.mxu0 0
      %648 = vmatprep.subr.bf16.mxu0 0
      %649 = vmatpush1.bf16.msra.mxu0 0
      %650 = vmatprep.subr.bf16.mxu0 0
      %651 = vmatpush1.bf16.msra.mxu0 0
      %652 = vmatprep.mubr.bf16.mxu0 0
      %653 = vmatmul.mubr.bf16.gmra.mrb[0].mxu0 %v366
      %v654 = vpop.f32.mrb[0].mxu0
      %v655 = vadd.f32 %v415, %v654
      %v656 = vpop.f32.mrb[0].mxu0
      %v657 = vpop.f32.mrb[0].mxu0
      %v658 = vadd.f32 %v415, %v657
      %v659 = vpop.f32.mrb[0].mxu0
      %660 = vmatprep.mubr.bf16.mxu0 0
      %661 = vmatmul.mubr.bf16.gmra.mrb[0].mxu0 %v367
      %v662 = vpop.f32.mrb[0].mxu0
      %v663 = vadd.f32 %v415, %v662
      %v664 = vpop.f32.mrb[0].mxu0
      %v665 = vpop.f32.mrb[0].mxu0
      %v666 = vadd.f32 %v415, %v665
      %v667 = vpop.f32.mrb[0].mxu0
      %668 = vmatprep.mubr.bf16.mxu0 0
      %669 = vmatmul.mubr.bf16.gmra.mrb[0].mxu0 %v368
      %v670 = vpop.f32.mrb[0].mxu0
      %v671 = vadd.f32 %v415, %v670
      %v672 = vpop.f32.mrb[0].mxu0
      %v673 = vpop.f32.mrb[0].mxu0
      %v674 = vadd.f32 %v415, %v673
      %v675 = vpop.f32.mrb[0].mxu0
      %676 = vmatprep.mubr.bf16.mxu0 0
      %677 = vmatmul.mubr.bf16.gmra.mrb[0].mxu0 %v369
      %v678 = vpop.f32.mrb[0].mxu0
      %v679 = vadd.f32 %v415, %v678
      %v680 = vpop.f32.mrb[0].mxu0
      %v681 = vpop.f32.mrb[0].mxu0
      %v682 = vadd.f32 %v415, %v681
      %v683 = vpop.f32.mrb[0].mxu0
      %684 = vdwg.mxu0
      %v685 = vpack.c.bf16 %v586, %v582
      %v686 = vpack.c.bf16 %v588, %v584
      %v687 = vpack.c.bf16 %v658, %v655
      %v688 = vpack.c.bf16 %v596, %v592
      %v689 = vpack.c.bf16 %v598, %v594
      %v690 = vpack.c.bf16 %v666, %v663
      %v691 = vpack.c.bf16 %v606, %v602
      %v692 = vpack.c.bf16 %v608, %v604
      %v693 = vpack.c.bf16 %v674, %v671
      %v694 = vpack.c.bf16 %v616, %v612
      %v695 = vpack.c.bf16 %v618, %v614
      %v696 = vpack.c.bf16 %v682, %v679
      %v709 = vunpack.c.l.b16 %v685
      %v710 = vunpack.c.l.b16 %v686
      %v711 = vunpack.c.l.b16 %v687
      %v712 = vunpack.c.h.b16 %v685
      %v713 = vunpack.c.h.b16 %v686
      %v714 = vunpack.c.h.b16 %v687
      %v715 = vunpack.c.l.b16 %v688
      %v716 = vunpack.c.l.b16 %v689
      %v717 = vunpack.c.l.b16 %v690
      %v718 = vunpack.c.h.b16 %v688
      %v719 = vunpack.c.h.b16 %v689
      %v720 = vunpack.c.h.b16 %v690
      %v721 = vunpack.c.l.b16 %v691
      %v722 = vunpack.c.l.b16 %v692
      %v723 = vunpack.c.l.b16 %v693
      %v724 = vunpack.c.h.b16 %v691
      %v725 = vunpack.c.h.b16 %v692
      %v726 = vunpack.c.h.b16 %v693
      %v727 = vunpack.c.l.b16 %v694
      %v728 = vunpack.c.l.b16 %v695
      %v729 = vunpack.c.l.b16 %v696
      %v730 = vunpack.c.h.b16 %v694
      %v731 = vunpack.c.h.b16 %v695
      %v732 = vunpack.c.h.b16 %v696
      %v733 = vpack.c.b16 %v710, %v709
      %v734 = vpack.c.b16 %v711, %v711
      %v735 = vpack.c.b16 %v713, %v712
      %v736 = vpack.c.b16 %v714, %v714
      %v737 = vpack.c.b16 %v716, %v715
      %v738 = vpack.c.b16 %v717, %v717
      %v739 = vpack.c.b16 %v719, %v718
      %v740 = vpack.c.b16 %v720, %v720
      %v741 = vpack.c.b16 %v722, %v721
      %v742 = vpack.c.b16 %v723, %v723
      %v743 = vpack.c.b16 %v725, %v724
      %v744 = vpack.c.b16 %v726, %v726
      %v745 = vpack.c.b16 %v728, %v727
      %v746 = vpack.c.b16 %v729, %v729
      %v747 = vpack.c.b16 %v731, %v730
      %v748 = vpack.c.b16 %v732, %v732
      %765 = vst [vmem:[%s228] sm:$0xff] %v733
      %766 = vst [vmem:[%s228 + $0x8] sm:$0xf] %v734
      %767 = vst [vmem:[%s228 + $0xc] sm:$0xff] %v735
      %768 = vst [vmem:[%s228 + $0x14] sm:$0xf] %v736
      %769 = vst [vmem:[%s228 + $0x18] sm:$0xff] %v737
      %770 = vst [vmem:[%s228 + $0x20] sm:$0xf] %v738
      %771 = vst [vmem:[%s228 + $0x24] sm:$0xff] %v739
      %772 = vst [vmem:[%s228 + $0x2c] sm:$0xf] %v740
      %773 = vst [vmem:[%s228 + $0x30] sm:$0xff] %v741
      %774 = vst [vmem:[%s228 + $0x38] sm:$0xf] %v742
      %775 = vst [vmem:[%s228 + $0x3c] sm:$0xff] %v743
      %776 = vst [vmem:[%s228 + $0x44] sm:$0xf] %v744
      %777 = vst [vmem:[%s228 + $0x48] sm:$0xff] %v745
      %778 = vst [vmem:[%s228 + $0x50] sm:$0xf] %v746
      %779 = vst [vmem:[%s228 + $0x54] sm:$0xff] %v747
      %780 = vst [vmem:[%s228 + $0x5c] sm:$0xf] %v748
      %s781 = smul.u32 8, %s16
      %p782 = scmp.lt.s32.totalorder %s781, 15
      %s783 = scalar_select %p782, %s781, 15
      %s784 = smul.addr %s783, 3
      %s785 = smul.addr %s784, 4
      %s786 = scalar_lea.vmem %s5, %s785
      // Predicated region
      $region41: #{encode_graph.9} parent=39 // pred_check
        %p787 = pneg %p144
      $region42: #{encode_graph.9} parent=39 // pred_check_branch
        %789 = sbr.rel (%p787) target = $region44
      $region43: #{encode_graph.9} parent=39 // pred_region
        %s790 = smul.u32 8, %s16
      $region44: #{encode_graph.9} parent=39 // pred_fallthru
        _
    $region40: #{encode_graph.9} parent=5 // pred_fallthru
      _
    %p791 = scmp.le.s32.totalorder 2, %s11
    // Predicated region
    $region45: #{encode_graph.9} parent=5 // pred_check
      %p792 = pneg %p791
    $region46: #{encode_graph.9} parent=5 // pred_check_branch
      %794 = sbr.rel (%p792) target = $region48
    $region47: #{encode_graph.9} parent=5 // pred_region
      %s795 = ssub.s32 %s11, 2
      // Predicated region
      $region49: #{encode_graph.9} parent=47 // pred_check
        %p796 = pneg %p150
      $region50: #{encode_graph.9} parent=47 // pred_check_branch
        %798 = sbr.rel (%p796) target = $region52
      $region51: #{encode_graph.9} parent=47 // pred_region
        %s799 = smul.u32 8, %s17
        %p800 = scmp.lt.s32.totalorder %s799, 15
        %s801 = scalar_select %p800, %s799, 15
        %s802 = smul.addr %s801, 3
        %s803 = smul.addr %s802, 4
        %s804 = scalar_lea.vmem %s5, %s803
      $region52: #{encode_graph.9} parent=47 // pred_fallthru
        _
    $region48: #{encode_graph.9} parent=5 // pred_fallthru
      _
  $region6: #{encode_graph.9} parent=0 // loop_footer
    %s15 = sadd.s32 1, %s11
  $region7: #{encode_graph.9} parent=0 // loop_footer_branch
    %10 = sbr.rel target = $region3
  $region8: #{encode_graph.9} parent=0 // loop_exit
    _

// kernel: encode_graph.10
$region0: #{encode_graph.10}
  #allocation0 [shape = 'u32[]', space=smem, size = 0x4, offset = 0x4, fixed_abs, tag = 'smem constant byte address 0x4 - core index']
  #allocation1 [shape = 'u32[144,128]{1,0:T(1,128)}', space=vmem, size = 0x12000, scoped, tag = 'internal scratch']
  #allocation2 [shape = 'f32[32,128]{1,0:T(8,128)}', space=vmem, size = 0x4000, scoped, tag = 'scratch operand']
  %s0 = inlined_call_operand.vmem [shape: bf16[2,64,384], index: 0, kind: input, shape index: {}, may-alias: {0,1,2}]
  %s1 = inlined_call_operand.vmem [shape: bf16[2,64,384], index: 1, kind: input, shape index: {}, may-alias: {0,1,2}]
  %s2 = inlined_call_operand.vmem [shape: bf16[2,64,384], index: 2, kind: input, shape index: {}, may-alias: {0,1,2}]
  %s3 = inlined_call_operand.vmem [shape: bf16[2,64,128], index: 3, kind: output, shape index: {}]
  %s4 = sld [smem:[#allocation0]]
  $region168: #{encode_graph.10} parent=0
    _
  %s6 = ssub.s32 1, %s4
  %s7 = scalar_select 0, %s6, %s4
  $region1: #{encode_graph.10} parent=0
    #allocation3 [shape = 'u8[16384]{0}', space=vmem, size = 0x4000, scoped, tag = 'input window, operand 0']
    #allocation4 [shape = 'u8[32768]{0}', space=vmem, size = 0x8000, scoped, tag = 'input window, operand 1']
    #allocation5 [shape = 'u8[32768]{0}', space=vmem, size = 0x8000, scoped, tag = 'input window, operand 2']
    loop: start=0, step=1, limit=6
    $region2: #{encode_graph.10} parent=1 // loop_pre_header
      _
    $region3: #{encode_graph.10} parent=1 // loop_header
      %s9 = sphi 0, %s13
      %p10 = scmp.ge.s32.totalorder %s9, 6
      %s16 = sphi 0, %s28
      %s17 = sphi 0, %s24
      %s18 = sphi 0, %s16
      %s19 = sphi 0, %s17
      %s20 = sphi 0, %s18
      %s21 = sphi 0, %s19
      %s33 = sphi 0, %s35
      %s36 = sphi 0, %s33
      %s37 = sphi 0, %s36
      %s53 = sphi 0, %s37
      %s59 = sphi 0, %s61
      %s62 = sphi 0, %s59
      %s63 = sphi 0, %s62
      %s79 = sphi 0, %s63
      %s85 = sphi 0, %s87
      %s88 = sphi 0, %s85
      %s89 = sphi 0, %s88
      %s105 = sphi 0, %s89
      %s113 = sphi 0, %s115
      %s116 = sphi 0, %s113
      %s117 = sphi 0, %s116
      %s133 = sphi 0, %s117
    $region4: #{encode_graph.10} parent=1 // loop_header_branch
      %12 = sbr.rel (%p10) target = $region8
    $region5: #{encode_graph.10} parent=1 // loop_body
      %s14 = ssub.s32 %s9, 1
      %s15 = ssub.s32 %s9, 2
      %s22 = sadd.s32 1, %s17
      %p23 = scmp.ge.s32.totalorder %s22, 2
      %s24 = scalar_select %p23, 0, %s22
      %s25 = sadd.s32 1, %s16
      %s26 = scalar_select %p23, %s25, %s16
      %p27 = scmp.ge.s32.totalorder %s26, 2
      %s28 = scalar_select %p27, 0, %s26
      %s29 = ssub.s32 %s16, %s28
      %s30 = ssub.s32 %s17, %s24
      %s31 = sor.u32 %s29, %s30
      %p32 = scmp.eq.s32.totalorder %s31, 0
      %s34 = sadd.s32 %s33, 1
      %s35 = scalar_select %p32, %s33, %s34
      %p38 = pneg %p32
      %p39 = scmp.eq.s32.totalorder %s9, 3
      %p40 = por %p38, %p39
      %p41 = scmp.ne.s32.totalorder %s33, %s36
      %p42 = scmp.eq.s32.totalorder %s9, 0
      %p43 = por %p41, %p42
      %p44 = scmp.ne.s32.totalorder %s33, %s36
      %p45 = scmp.eq.s32.totalorder %s14, 3
      %p46 = por %p44, %p45
      %p47 = scmp.ne.s32.totalorder %s36, %s37
      %p48 = scmp.eq.s32.totalorder %s14, 0
      %p49 = por %p47, %p48
      %p50 = scmp.ne.s32.totalorder %s36, %s37
      %p51 = scmp.eq.s32.totalorder %s15, 3
      %p52 = por %p50, %p51
      %p54 = scmp.ne.s32.totalorder %s37, %s53
      %p55 = scmp.eq.s32.totalorder %s15, 0
      %p56 = por %p54, %p55
      %s57 = ssub.s32 %s16, %s28
      %p58 = scmp.eq.s32.totalorder %s57, 0
      %s60 = sadd.s32 %s59, 1
      %s61 = scalar_select %p58, %s59, %s60
      %p64 = pneg %p58
      %p65 = scmp.eq.s32.totalorder %s9, 3
      %p66 = por %p64, %p65
      %p67 = scmp.ne.s32.totalorder %s59, %s62
      %p68 = scmp.eq.s32.totalorder %s9, 0
      %p69 = por %p67, %p68
      %p70 = scmp.ne.s32.totalorder %s59, %s62
      %p71 = scmp.eq.s32.totalorder %s14, 3
      %p72 = por %p70, %p71
      %p73 = scmp.ne.s32.totalorder %s62, %s63
      %p74 = scmp.eq.s32.totalorder %s14, 0
      %p75 = por %p73, %p74
      %p76 = scmp.ne.s32.totalorder %s62, %s63
      %p77 = scmp.eq.s32.totalorder %s15, 3
      %p78 = por %p76, %p77
      %p80 = scmp.ne.s32.totalorder %s63, %s79
      %p81 = scmp.eq.s32.totalorder %s15, 0
      %p82 = por %p80, %p81
      %s83 = ssub.s32 %s16, %s28
      %p84 = scmp.eq.s32.totalorder %s83, 0
      %s86 = sadd.s32 %s85, 1
      %s87 = scalar_select %p84, %s85, %s86
      %p90 = pneg %p84
      %p91 = scmp.eq.s32.totalorder %s9, 3
      %p92 = por %p90, %p91
      %p93 = scmp.ne.s32.totalorder %s85, %s88
      %p94 = scmp.eq.s32.totalorder %s9, 0
      %p95 = por %p93, %p94
      %p96 = scmp.ne.s32.totalorder %s85, %s88
      %p97 = scmp.eq.s32.totalorder %s14, 3
      %p98 = por %p96, %p97
      %p99 = scmp.ne.s32.totalorder %s88, %s89
      %p100 = scmp.eq.s32.totalorder %s14, 0
      %p101 = por %p99, %p100
      %p102 = scmp.ne.s32.totalorder %s88, %s89
      %p103 = scmp.eq.s32.totalorder %s15, 3
      %p104 = por %p102, %p103
      %p106 = scmp.ne.s32.totalorder %s89, %s105
      %p107 = scmp.eq.s32.totalorder %s15, 0
      %p108 = por %p106, %p107
      %s109 = ssub.s32 %s16, %s28
      %s110 = ssub.s32 %s17, %s24
      %s111 = sor.u32 %s109, %s110
      %p112 = scmp.eq.s32.totalorder %s111, 0
      %s114 = sadd.s32 %s113, 1
      %s115 = scalar_select %p112, %s113, %s114
      %p118 = pneg %p112
      %p119 = scmp.eq.s32.totalorder %s9, 3
      %p120 = por %p118, %p119
      %p121 = scmp.ne.s32.totalorder %s113, %s116
      %p122 = scmp.eq.s32.totalorder %s9, 0
      %p123 = por %p121, %p122
      %p124 = scmp.ne.s32.totalorder %s113, %s116
      %p125 = scmp.eq.s32.totalorder %s14, 3
      %p126 = por %p124, %p125
      %p127 = scmp.ne.s32.totalorder %s116, %s117
      %p128 = scmp.eq.s32.totalorder %s14, 0
      %p129 = por %p127, %p128
      %p130 = scmp.ne.s32.totalorder %s116, %s117
      %p131 = scmp.eq.s32.totalorder %s15, 3
      %p132 = por %p130, %p131
      %p134 = scmp.ne.s32.totalorder %s117, %s133
      %p135 = scmp.eq.s32.totalorder %s15, 0
      %p136 = por %p134, %p135
      %p137 = scmp.le.s32.totalorder 1, %s9
      %p138 = scmp.lt.s32.totalorder %s9, 5
      %p139 = pnand %p137, %p138
      %p140 = pneg %p139
      // Predicated region
      $region9: #{encode_graph.10} parent=5 // pred_check
        _
      $region10: #{encode_graph.10} parent=5 // pred_check_branch
        %142 = sbr.rel (%p139) target = $region12
      $region11: #{encode_graph.10} parent=5 // pred_region
        %s143 = ssub.s32 %s9, 1
      $region12: #{encode_graph.10} parent=5 // pred_fallthru
        _
      %p144 = scmp.lt.s32.totalorder %s9, 4
      // Predicated region
      $region13: #{encode_graph.10} parent=5 // pred_check
        %p145 = pneg %p144
      $region14: #{encode_graph.10} parent=5 // pred_check_branch
        %147 = sbr.rel (%p145) target = $region16
      $region15: #{encode_graph.10} parent=5 // pred_region
        // Predicated region
        $region17: #{encode_graph.10} parent=15 // pred_check
          %p148 = pneg %p43
        $region18: #{encode_graph.10} parent=15 // pred_check_branch
          %150 = sbr.rel (%p148) target = $region20
        $region19: #{encode_graph.10} parent=15 // pred_region
          %s151 = sand.u32 %s33, 1
          %s152 = sand.u32 %s33, 1
          %s153 = smul.addr %s152, 16
          %s154 = scalar_lea.vmem [#allocation3], %s153
          %s155 = smul.u32 4, %s17
          %s156 = smul.addr %s155, 3
          %s157 = smul.addr %s16, 24
          %s158 = sadd.s32 %s156, %s157
          %s159 = smul.addr %s158, 4
          %s160 = scalar_lea.vmem %s0, %s159
          // Predicated region
          $region21: #{encode_graph.10} parent=19 // pred_check
            _
          $region22: #{encode_graph.10} parent=19 // pred_check_branch
            %162 = sbr.rel (0) target = $region24
          $region23: #{encode_graph.10} parent=19 // pred_region
            // Predicated region
            $region25: #{encode_graph.10} parent=23 // pred_check
              _
            $region26: #{encode_graph.10} parent=23 // pred_check_branch
              %164 = sbr.rel target = $region28
            $region27: #{encode_graph.10} parent=23 // pred_region
              // Predicated region
              $region40: #{encode_graph.10} parent=27 // pred_check
                _
              $region41: #{encode_graph.10} parent=27 // pred_check_branch
                %185 = sbr.rel (0) target = $region43
              $region42: #{encode_graph.10} parent=27 // pred_region
                loop: start=0, step=1, limit=1
                $region44: #{encode_graph.10} parent=42 // loop_pre_header
                  _
                $region45: #{encode_graph.10} parent=42 // loop_header
                  %s187 = sphi 0, %s191
                  %p188 = scmp.ge.s32.totalorder %s187, 1
                  %s192 = sphi %s160, %s160
                  %s193 = sphi %s154, %s154
                $region46: #{encode_graph.10} parent=42 // loop_header_branch
                  %190 = sbr.rel (%p188) target = $region50
                $region47: #{encode_graph.10} parent=42 // loop_body
                  _
                $region48: #{encode_graph.10} parent=42 // loop_footer
                  %s191 = sadd.s32 1, %s187
                $region49: #{encode_graph.10} parent=42 // loop_footer_branch
                  %186 = sbr.rel target = $region45
                $region50: #{encode_graph.10} parent=42 // loop_exit
                  _
                loop: start=0, step=1, limit=1
                $region51: #{encode_graph.10} parent=42 // loop_pre_header
                  _
                $region52: #{encode_graph.10} parent=42 // loop_header
                  %s196 = sphi 0, %s200
                  %p197 = scmp.ge.s32.totalorder %s196, 1
                  %s201 = sphi %s160, %s160
                  %s202 = sphi %s154, %s154
                $region53: #{encode_graph.10} parent=42 // loop_header_branch
                  %199 = sbr.rel (%p197) target = $region57
                $region54: #{encode_graph.10} parent=42 // loop_body
                  %v203 = vld [vmem:[%s201] sm:$0xf]
                  %204 = vst [vmem:[%s202] sm:$0xf] %v203
                  %v205 = vld [vmem:[%s201 + $0xc] sm:$0xf]
                  %206 = vst [vmem:[%s202 + $0x4] sm:$0xf] %v205
                  %v207 = vld [vmem:[%s201 + $0x18] sm:$0xf]
                  %208 = vst [vmem:[%s202 + $0x8] sm:$0xf] %v207
                  %v209 = vld [vmem:[%s201 + $0x24] sm:$0xf]
                  %210 = vst [vmem:[%s202 + $0xc] sm:$0xf] %v209
                $region55: #{encode_graph.10} parent=42 // loop_footer
                  %s200 = sadd.s32 1, %s196
                $region56: #{encode_graph.10} parent=42 // loop_footer_branch
                  %195 = sbr.rel target = $region52
                $region57: #{encode_graph.10} parent=42 // loop_exit
                  _
              $region43: #{encode_graph.10} parent=27 // pred_fallthru
                _
            $region28: #{encode_graph.10} parent=23 // pred_fallthru
              _
            // Predicated region
            $region29: #{encode_graph.10} parent=23 // pred_check
              _
            $region30: #{encode_graph.10} parent=23 // pred_check_branch
              %166 = sbr.rel (0) target = $region32
            $region31: #{encode_graph.10} parent=23 // pred_region
              loop: start=0, step=1, limit=1
              $region33: #{encode_graph.10} parent=31 // loop_pre_header
                _
              $region34: #{encode_graph.10} parent=31 // loop_header
                %s169 = sphi 0, %s173
                %p170 = scmp.ge.s32.totalorder %s169, 1
                %s174 = sphi %s160, %s160
                %s175 = sphi %s154, %s154
              $region35: #{encode_graph.10} parent=31 // loop_header_branch
                %172 = sbr.rel (%p170) target = $region39
              $region36: #{encode_graph.10} parent=31 // loop_body
                %v176 = vld [vmem:[%s174] sm:$0xf]
                %177 = vst [vmem:[%s175] sm:$0xf] %v176
                %v178 = vld [vmem:[%s174 + $0xc] sm:$0xf]
                %179 = vst [vmem:[%s175 + $0x4] sm:$0xf] %v178
                %v180 = vld [vmem:[%s174 + $0x18] sm:$0xf]
                %181 = vst [vmem:[%s175 + $0x8] sm:$0xf] %v180
                %v182 = vld [vmem:[%s174 + $0x24] sm:$0xf]
                %183 = vst [vmem:[%s175 + $0xc] sm:$0xf] %v182
              $region37: #{encode_graph.10} parent=31 // loop_footer
                %s173 = sadd.s32 1, %s169
              $region38: #{encode_graph.10} parent=31 // loop_footer_branch
                %168 = sbr.rel target = $region34
              $region39: #{encode_graph.10} parent=31 // loop_exit
                _
            $region32: #{encode_graph.10} parent=23 // pred_fallthru
              _
          $region24: #{encode_graph.10} parent=19 // pred_fallthru
            _
          %211 = vnop
        $region20: #{encode_graph.10} parent=15 // pred_fallthru
          _
        // Predicated region
        $region58: #{encode_graph.10} parent=15 // pred_check
          %p212 = pneg %p69
        $region59: #{encode_graph.10} parent=15 // pred_check_branch
          %214 = sbr.rel (%p212) target = $region61
        $region60: #{encode_graph.10} parent=15 // pred_region
          %s215 = sand.u32 %s59, 1
          %s216 = sand.u32 %s59, 1
          %s217 = smul.addr %s216, 32
          %s218 = scalar_lea.vmem [#allocation4], %s217
          %s219 = smul.addr %s16, 24
          %s220 = sadd.s32 1, %s219
          %s221 = smul.addr %s220, 4
          %s222 = scalar_lea.vmem %s1, %s221
          // Predicated region
          $region62: #{encode_graph.10} parent=60 // pred_check
            _
          $region63: #{encode_graph.10} parent=60 // pred_check_branch
            %224 = sbr.rel (0) target = $region65
          $region64: #{encode_graph.10} parent=60 // pred_region
            // Predicated region
            $region66: #{encode_graph.10} parent=64 // pred_check
              _
            $region67: #{encode_graph.10} parent=64 // pred_check_branch
              %226 = sbr.rel target = $region69
            $region68: #{encode_graph.10} parent=64 // pred_region
              // Predicated region
              $region81: #{encode_graph.10} parent=68 // pred_check
                _
              $region82: #{encode_graph.10} parent=68 // pred_check_branch
                %255 = sbr.rel (0) target = $region84
              $region83: #{encode_graph.10} parent=68 // pred_region
                loop: start=0, step=1, limit=1
                $region85: #{encode_graph.10} parent=83 // loop_pre_header
                  _
                $region86: #{encode_graph.10} parent=83 // loop_header
                  %s257 = sphi 0, %s261
                  %p258 = scmp.ge.s32.totalorder %s257, 1
                  %s262 = sphi %s222, %s222
                  %s263 = sphi %s218, %s218
                $region87: #{encode_graph.10} parent=83 // loop_header_branch
                  %260 = sbr.rel (%p258) target = $region91
                $region88: #{encode_graph.10} parent=83 // loop_body
                  _
                $region89: #{encode_graph.10} parent=83 // loop_footer
                  %s261 = sadd.s32 1, %s257
                $region90: #{encode_graph.10} parent=83 // loop_footer_branch
                  %256 = sbr.rel target = $region86
                $region91: #{encode_graph.10} parent=83 // loop_exit
                  _
                loop: start=0, step=1, limit=1
                $region92: #{encode_graph.10} parent=83 // loop_pre_header
                  _
                $region93: #{encode_graph.10} parent=83 // loop_header
                  %s266 = sphi 0, %s270
                  %p267 = scmp.ge.s32.totalorder %s266, 1
                  %s271 = sphi %s222, %s222
                  %s272 = sphi %s218, %s218
                $region94: #{encode_graph.10} parent=83 // loop_header_branch
                  %269 = sbr.rel (%p267) target = $region98
                $region95: #{encode_graph.10} parent=83 // loop_body
                  %v273 = vld [vmem:[%s271] sm:$0xf]
                  %274 = vst [vmem:[%s272] sm:$0xf] %v273
                  %v275 = vld [vmem:[%s271 + $0xc] sm:$0xf]
                  %276 = vst [vmem:[%s272 + $0x4] sm:$0xf] %v275
                  %v277 = vld [vmem:[%s271 + $0x18] sm:$0xf]
                  %278 = vst [vmem:[%s272 + $0x8] sm:$0xf] %v277
                  %v279 = vld [vmem:[%s271 + $0x24] sm:$0xf]
                  %280 = vst [vmem:[%s272 + $0xc] sm:$0xf] %v279
                  %v281 = vld [vmem:[%s271 + $0x30] sm:$0xf]
                  %282 = vst [vmem:[%s272 + $0x10] sm:$0xf] %v281
                  %v283 = vld [vmem:[%s271 + $0x3c] sm:$0xf]
                  %284 = vst [vmem:[%s272 + $0x14] sm:$0xf] %v283
                  %v285 = vld [vmem:[%s271 + $0x48] sm:$0xf]
                  %286 = vst [vmem:[%s272 + $0x18] sm:$0xf] %v285
                  %v287 = vld [vmem:[%s271 + $0x54] sm:$0xf]
                  %288 = vst [vmem:[%s272 + $0x1c] sm:$0xf] %v287
                $region96: #{encode_graph.10} parent=83 // loop_footer
                  %s270 = sadd.s32 1, %s266
                $region97: #{encode_graph.10} parent=83 // loop_footer_branch
                  %265 = sbr.rel target = $region93
                $region98: #{encode_graph.10} parent=83 // loop_exit
                  _
              $region84: #{encode_graph.10} parent=68 // pred_fallthru
                _
            $region69: #{encode_graph.10} parent=64 // pred_fallthru
              _
            // Predicated region
            $region70: #{encode_graph.10} parent=64 // pred_check
              _
            $region71: #{encode_graph.10} parent=64 // pred_check_branch
              %228 = sbr.rel (0) target = $region73
            $region72: #{encode_graph.10} parent=64 // pred_region
              loop: start=0, step=1, limit=1
              $region74: #{encode_graph.10} parent=72 // loop_pre_header
                _
              $region75: #{encode_graph.10} parent=72 // loop_header
                %s231 = sphi 0, %s235
                %p232 = scmp.ge.s32.totalorder %s231, 1
                %s236 = sphi %s222, %s222
                %s237 = sphi %s218, %s218
              $region76: #{encode_graph.10} parent=72 // loop_header_branch
                %234 = sbr.rel (%p232) target = $region80
              $region77: #{encode_graph.10} parent=72 // loop_body
                %v238 = vld [vmem:[%s236] sm:$0xf]
                %239 = vst [vmem:[%s237] sm:$0xf] %v238
                %v240 = vld [vmem:[%s236 + $0xc] sm:$0xf]
                %241 = vst [vmem:[%s237 + $0x4] sm:$0xf] %v240
                %v242 = vld [vmem:[%s236 + $0x18] sm:$0xf]
                %243 = vst [vmem:[%s237 + $0x8] sm:$0xf] %v242
                %v244 = vld [vmem:[%s236 + $0x24] sm:$0xf]
                %245 = vst [vmem:[%s237 + $0xc] sm:$0xf] %v244
                %v246 = vld [vmem:[%s236 + $0x30] sm:$0xf]
                %247 = vst [vmem:[%s237 + $0x10] sm:$0xf] %v246
                %v248 = vld [vmem:[%s236 + $0x3c] sm:$0xf]
                %249 = vst [vmem:[%s237 + $0x14] sm:$0xf] %v248
                %v250 = vld [vmem:[%s236 + $0x48] sm:$0xf]
                %251 = vst [vmem:[%s237 + $0x18] sm:$0xf] %v250
                %v252 = vld [vmem:[%s236 + $0x54] sm:$0xf]
                %253 = vst [vmem:[%s237 + $0x1c] sm:$0xf] %v252
              $region78: #{encode_graph.10} parent=72 // loop_footer
                %s235 = sadd.s32 1, %s231
              $region79: #{encode_graph.10} parent=72 // loop_footer_branch
                %230 = sbr.rel target = $region75
              $region80: #{encode_graph.10} parent=72 // loop_exit
                _
            $region73: #{encode_graph.10} parent=64 // pred_fallthru
              _
          $region65: #{encode_graph.10} parent=60 // pred_fallthru
            _
          %289 = vnop
        $region61: #{encode_graph.10} parent=15 // pred_fallthru
          _
        // Predicated region
        $region99: #{encode_graph.10} parent=15 // pred_check
          %p290 = pneg %p95
        $region100: #{encode_graph.10} parent=15 // pred_check_branch
          %292 = sbr.rel (%p290) target = $region102
        $region101: #{encode_graph.10} parent=15 // pred_region
          %s293 = sand.u32 %s85, 1
          %s294 = sand.u32 %s85, 1
          %s295 = smul.addr %s294, 32
          %s296 = scalar_lea.vmem [#allocation5], %s295
          %s297 = smul.addr %s16, 24
          %s298 = sadd.s32 2, %s297
          %s299 = smul.addr %s298, 4
          %s300 = scalar_lea.vmem %s2, %s299
          // Predicated region
          $region103: #{encode_graph.10} parent=101 // pred_check
            _
          $region104: #{encode_graph.10} parent=101 // pred_check_branch
            %302 = sbr.rel (0) target = $region106
          $region105: #{encode_graph.10} parent=101 // pred_region
            // Predicated region
            $region107: #{encode_graph.10} parent=105 // pred_check
              _
            $region108: #{encode_graph.10} parent=105 // pred_check_branch
              %304 = sbr.rel target = $region110
            $region109: #{encode_graph.10} parent=105 // pred_region
              // Predicated region
              $region122: #{encode_graph.10} parent=109 // pred_check
                _
              $region123: #{encode_graph.10} parent=109 // pred_check_branch
                %333 = sbr.rel (0) target = $region125
              $region124: #{encode_graph.10} parent=109 // pred_region
                loop: start=0, step=1, limit=1
                $region126: #{encode_graph.10} parent=124 // loop_pre_header
                  _
                $region127: #{encode_graph.10} parent=124 // loop_header
                  %s335 = sphi 0, %s339
                  %p336 = scmp.ge.s32.totalorder %s335, 1
                  %s340 = sphi %s300, %s300
                  %s341 = sphi %s296, %s296
                $region128: #{encode_graph.10} parent=124 // loop_header_branch
                  %338 = sbr.rel (%p336) target = $region132
                $region129: #{encode_graph.10} parent=124 // loop_body
                  _
                $region130: #{encode_graph.10} parent=124 // loop_footer
                  %s339 = sadd.s32 1, %s335
                $region131: #{encode_graph.10} parent=124 // loop_footer_branch
                  %334 = sbr.rel target = $region127
                $region132: #{encode_graph.10} parent=124 // loop_exit
                  _
                loop: start=0, step=1, limit=1
                $region133: #{encode_graph.10} parent=124 // loop_pre_header
                  _
                $region134: #{encode_graph.10} parent=124 // loop_header
                  %s344 = sphi 0, %s348
                  %p345 = scmp.ge.s32.totalorder %s344, 1
                  %s349 = sphi %s300, %s300
                  %s350 = sphi %s296, %s296
                $region135: #{encode_graph.10} parent=124 // loop_header_branch
                  %347 = sbr.rel (%p345) target = $region139
                $region136: #{encode_graph.10} parent=124 // loop_body
                  %v351 = vld [vmem:[%s349] sm:$0xf]
                  %352 = vst [vmem:[%s350] sm:$0xf] %v351
                  %v353 = vld [vmem:[%s349 + $0xc] sm:$0xf]
                  %354 = vst [vmem:[%s350 + $0x4] sm:$0xf] %v353
                  %v355 = vld [vmem:[%s349 + $0x18] sm:$0xf]
                  %356 = vst [vmem:[%s350 + $0x8] sm:$0xf] %v355
                  %v357 = vld [vmem:[%s349 + $0x24] sm:$0xf]
                  %358 = vst [vmem:[%s350 + $0xc] sm:$0xf] %v357
                  %v359 = vld [vmem:[%s349 + $0x30] sm:$0xf]
                  %360 = vst [vmem:[%s350 + $0x10] sm:$0xf] %v359
                  %v361 = vld [vmem:[%s349 + $0x3c] sm:$0xf]
                  %362 = vst [vmem:[%s350 + $0x14] sm:$0xf] %v361
                  %v363 = vld [vmem:[%s349 + $0x48] sm:$0xf]
                  %364 = vst [vmem:[%s350 + $0x18] sm:$0xf] %v363
                  %v365 = vld [vmem:[%s349 + $0x54] sm:$0xf]
                  %366 = vst [vmem:[%s350 + $0x1c] sm:$0xf] %v365
                $region137: #{encode_graph.10} parent=124 // loop_footer
                  %s348 = sadd.s32 1, %s344
                $region138: #{encode_graph.10} parent=124 // loop_footer_branch
                  %343 = sbr.rel target = $region134
                $region139: #{encode_graph.10} parent=124 // loop_exit
                  _
              $region125: #{encode_graph.10} parent=109 // pred_fallthru
                _
            $region110: #{encode_graph.10} parent=105 // pred_fallthru
              _
            // Predicated region
            $region111: #{encode_graph.10} parent=105 // pred_check
              _
            $region112: #{encode_graph.10} parent=105 // pred_check_branch
              %306 = sbr.rel (0) target = $region114
            $region113: #{encode_graph.10} parent=105 // pred_region
              loop: start=0, step=1, limit=1
              $region115: #{encode_graph.10} parent=113 // loop_pre_header
                _
              $region116: #{encode_graph.10} parent=113 // loop_header
                %s309 = sphi 0, %s313
                %p310 = scmp.ge.s32.totalorder %s309, 1
                %s314 = sphi %s300, %s300
                %s315 = sphi %s296, %s296
              $region117: #{encode_graph.10} parent=113 // loop_header_branch
                %312 = sbr.rel (%p310) target = $region121
              $region118: #{encode_graph.10} parent=113 // loop_body
                %v316 = vld [vmem:[%s314] sm:$0xf]
                %317 = vst [vmem:[%s315] sm:$0xf] %v316
                %v318 = vld [vmem:[%s314 + $0xc] sm:$0xf]
                %319 = vst [vmem:[%s315 + $0x4] sm:$0xf] %v318
                %v320 = vld [vmem:[%s314 + $0x18] sm:$0xf]
                %321 = vst [vmem:[%s315 + $0x8] sm:$0xf] %v320
                %v322 = vld [vmem:[%s314 + $0x24] sm:$0xf]
                %323 = vst [vmem:[%s315 + $0xc] sm:$0xf] %v322
                %v324 = vld [vmem:[%s314 + $0x30] sm:$0xf]
                %325 = vst [vmem:[%s315 + $0x10] sm:$0xf] %v324
                %v326 = vld [vmem:[%s314 + $0x3c] sm:$0xf]
                %327 = vst [vmem:[%s315 + $0x14] sm:$0xf] %v326
                %v328 = vld [vmem:[%s314 + $0x48] sm:$0xf]
                %329 = vst [vmem:[%s315 + $0x18] sm:$0xf] %v328
                %v330 = vld [vmem:[%s314 + $0x54] sm:$0xf]
                %331 = vst [vmem:[%s315 + $0x1c] sm:$0xf] %v330
              $region119: #{encode_graph.10} parent=113 // loop_footer
                %s313 = sadd.s32 1, %s309
              $region120: #{encode_graph.10} parent=113 // loop_footer_branch
                %308 = sbr.rel target = $region116
              $region121: #{encode_graph.10} parent=113 // loop_exit
                _
            $region114: #{encode_graph.10} parent=105 // pred_fallthru
              _
          $region106: #{encode_graph.10} parent=101 // pred_fallthru
            _
          %367 = vnop
        $region102: #{encode_graph.10} parent=15 // pred_fallthru
          _
      $region16: #{encode_graph.10} parent=5 // pred_fallthru
        _
      %p368 = scmp.le.s32.totalorder 1, %s9
      %p369 = scmp.lt.s32.totalorder %s9, 5
      %p370 = pnand %p368, %p369
      %p371 = pneg %p370
      // Predicated region
      $region140: #{encode_graph.10} parent=5 // pred_check
        _
      $region141: #{encode_graph.10} parent=5 // pred_check_branch
        %373 = sbr.rel (%p370) target = $region143
      $region142: #{encode_graph.10} parent=5 // pred_region
        %s374 = ssub.s32 %s9, 1
        %s375 = sand.u32 %s36, 1
        %s376 = sand.u32 %s36, 1
        %s377 = smul.addr %s376, 16
        %s378 = scalar_lea.vmem [#allocation3], %s377
        // Predicated region
        $region144: #{encode_graph.10} parent=142 // pred_check
          %p379 = pneg %p49
        $region145: #{encode_graph.10} parent=142 // pred_check_branch
          %381 = sbr.rel (%p379) target = $region147
        $region146: #{encode_graph.10} parent=142 // pred_region
          _
        $region147: #{encode_graph.10} parent=142 // pred_fallthru
          _
        %s382 = sand.u32 %s62, 1
        %s383 = sand.u32 %s62, 1
        %s384 = smul.addr %s383, 32
        %s385 = scalar_lea.vmem [#allocation4], %s384
        // Predicated region
        $region148: #{encode_graph.10} parent=142 // pred_check
          %p386 = pneg %p75
        $region149: #{encode_graph.10} parent=142 // pred_check_branch
          %388 = sbr.rel (%p386) target = $region151
        $region150: #{encode_graph.10} parent=142 // pred_region
          _
        $region151: #{encode_graph.10} parent=142 // pred_fallthru
          _
        %s389 = sand.u32 %s88, 1
        %s390 = sand.u32 %s88, 1
        %s391 = smul.addr %s390, 32
        %s392 = scalar_lea.vmem [#allocation5], %s391
        // Predicated region
        $region152: #{encode_graph.10} parent=142 // pred_check
          %p393 = pneg %p101
        $region153: #{encode_graph.10} parent=142 // pred_check_branch
          %395 = sbr.rel (%p393) target = $region155
        $region154: #{encode_graph.10} parent=142 // pred_region
          _
        $region155: #{encode_graph.10} parent=142 // pred_fallthru
          _
        %s396 = sand.u32 %s36, 1
        %s397 = sand.u32 %s36, 1
        %s398 = smul.addr %s397, 16
        %s399 = scalar_lea.vmem [#allocation3], %s398
        %p400 = pneg %p49
        %p401 = pneg %p46
        %s402 = sand.u32 %s62, 1
        %s403 = sand.u32 %s62, 1
        %s404 = smul.addr %s403, 32
        %s405 = scalar_lea.vmem [#allocation4], %s404
        %p406 = pneg %p75
        %p407 = pneg %p72
        %s408 = sand.u32 %s88, 1
        %s409 = sand.u32 %s88, 1
        %s410 = smul.addr %s409, 32
        %s411 = scalar_lea.vmem [#allocation5], %s410
        %p412 = pneg %p101
        %p413 = pneg %p98
        %p414 = pneg %p129
        %p415 = pneg %p126
        %s416 = smul.u32 4, %s19
        %p417 = scmp.lt.s32.totalorder %s18, 1
        %s418 = scalar_select %p417, %s18, 1
        %p419 = scmp.lt.s32.totalorder %s416, 7
        %s420 = scalar_select %p419, %s416, 7
        %s421 = smul.addr %s418, 8
        %s422 = sadd.s32 %s420, %s421
        %s423 = smul.addr %s422, 4
        %s424 = scalar_lea.vmem %s3, %s423
        %s425 = smul.u32 4, %s19
        %s426 = smul.u32 4, %s19
        %p427 = scmp.lt.s32.totalorder %s18, 1
        %s428 = scalar_select %p427, %s18, 1
        %p429 = scmp.lt.s32.totalorder %s426, 7
        %s430 = scalar_select %p429, %s426, 7
        %s431 = smul.addr %s428, 8
        %s432 = sadd.s32 %s430, %s431
        %s433 = smul.addr %s432, 4
        %s434 = scalar_lea.vmem %s3, %s433
        %s435 = smul.u32 4, %s19
        %v437 = vld [vmem:[%s378] sm:$0xf]
        %v438 = vld [vmem:[%s378 + $0x4] sm:$0xf]
        %v439 = vld [vmem:[%s378 + $0x8] sm:$0xf]
        %v440 = vld [vmem:[%s378 + $0xc] sm:$0xf]
        %v441 = vunpack.c.l.bf16 %v437
        %v442 = vunpack.c.l.bf16 %v438
        %v443 = vunpack.c.l.bf16 %v439
        %v444 = vunpack.c.l.bf16 %v440
        %v445 = vmul.f32 %v441, 0.17677669
        %v446 = vmul.f32 %v442, 0.17677669
        %v447 = vmul.f32 %v443, 0.17677669
        %v448 = vmul.f32 %v444, 0.17677669
        %v449 = vpack.c.bf16 %v446, %v445
        %v450 = vpack.c.bf16 %v448, %v447
        %v451 = vld [vmem:[%s385] sm:$0xf]
        %v452 = vld [vmem:[%s385 + $0x4] sm:$0xf]
        %v453 = vld [vmem:[%s385 + $0x8] sm:$0xf]
        %v454 = vld [vmem:[%s385 + $0xc] sm:$0xf]
        %v455 = vld [vmem:[%s385 + $0x10] sm:$0xf]
        %v456 = vld [vmem:[%s385 + $0x14] sm:$0xf]
        %v457 = vld [vmem:[%s385 + $0x18] sm:$0xf]
        %v458 = vld [vmem:[%s385 + $0x1c] sm:$0xf]
        %v459 = vld [vmem:[%s392] sm:$0xf]
        %v460 = vld [vmem:[%s392 + $0x4] sm:$0xf]
        %v461 = vld [vmem:[%s392 + $0x8] sm:$0xf]
        %v462 = vld [vmem:[%s392 + $0xc] sm:$0xf]
        %v463 = vld [vmem:[%s392 + $0x10] sm:$0xf]
        %v464 = vld [vmem:[%s392 + $0x14] sm:$0xf]
        %v465 = vld [vmem:[%s392 + $0x18] sm:$0xf]
        %v466 = vld [vmem:[%s392 + $0x1c] sm:$0xf]
        %v475 = vunpack.c.l.b16 %v451
        %v476 = vunpack.c.l.b16 %v452
        %v477 = vunpack.c.l.b16 %v453
        %v478 = vunpack.c.l.b16 %v454
        %v479 = vunpack.c.l.b16 %v455
        %v480 = vunpack.c.l.b16 %v456
        %v481 = vunpack.c.l.b16 %v457
        %v482 = vunpack.c.l.b16 %v458
        %v483 = vpack.c.b16 %v476, %v475
        %v484 = vpack.c.b16 %v478, %v477
        %v485 = vpack.c.b16 %v480, %v479
        %v486 = vpack.c.b16 %v482, %v481
        %vm487 = vcmask 261120
        %v489 = vsel %vm487, %v449, 0
        %v492 = vsel %vm487, %v450, 0
        %v495 = vsel %vm487, %v483, 0
        %v498 = vsel %vm487, %v484, 0
        %v501 = vsel %vm487, %v485, 0
        %v504 = vsel %vm487, %v486, 0
        %506 = vmatprep.subr.bf16.mxu0 0
        %507 = vmatpush1.bf16.xpose.msra.mxu0 %v495
        %508 = vmatprep.subr.bf16.mxu0 0
        %509 = vmatpush1.bf16.xpose.msra.mxu0 %v498
        %510 = vmatprep.subr.bf16.mxu0 0
        %511 = vmatpush1.bf16.xpose.msra.mxu0 %v501
        %512 = vmatprep.subr.bf16.mxu0 0
        %513 = vmatpush1.bf16.xpose.msra.mxu0 %v504
        %514 = vmatprep.subr.bf16.mxu0 0
        %515 = vmatpush1.bf16.xpose.msra.mxu0 0
        %516 = vmatprep.subr.bf16.mxu0 0
        %517 = vmatpush1.bf16.xpose.msra.mxu0 0
        %518 = vmatprep.subr.bf16.mxu0 0
        %519 = vmatpush1.bf16.xpose.msra.mxu0 0
        %520 = vmatprep.subr.bf16.mxu0 0
        %521 = vmatpush1.bf16.xpose.msra.mxu0 0
        %522 = vmatprep.subr.bf16.mxu0 0
        %523 = vmatpush1.bf16.xpose.msra.mxu0 0
        %524 = vmatprep.subr.bf16.mxu0 0
        %525 = vmatpush1.bf16.xpose.msra.mxu0 0
        %526 = vmatprep.subr.bf16.mxu0 0
        %527 = vmatpush1.bf16.xpose.msra.mxu0 0
        %528 = vmatprep.subr.bf16.mxu0 0
        %529 = vmatpush1.bf16.xpose.msra.mxu0 0
        %530 = vmatprep.subr.bf16.mxu0 0
        %531 = vmatpush1.bf16.xpose.msra.mxu0 0
        %532 = vmatprep.subr.bf16.mxu0 0
        %533 = vmatpush1.bf16.xpose.msra.mxu0 0
        %534 = vmatprep.subr.bf16.mxu0 0
        %535 = vmatpush1.bf16.xpose.msra.mxu0 0
        %536 = vmatprep.subr.bf16.mxu0 0
        %537 = vmatpush1.bf16.xpose.msra.mxu0 0
        %538 = vmatprep.mubr.bf16.mxu0 0
        %539 = vmatmul.mubr.bf16.gmra.mrb[0].mxu0 %v489
        %v540 = vpop.f32.mrb[0].mxu0
        %v541 = vadd.f32 0.0, %v540
        %v542 = vpop.f32.mrb[0].mxu0
        %v543 = vpop.f32.mrb[0].mxu0
        %v544 = vadd.f32 0.0, %v543
        %v545 = vpop.f32.mrb[0].mxu0
        %546 = vmatprep.mubr.bf16.mxu0 0
        %547 = vmatmul.mubr.bf16.gmra.mrb[0].mxu0 %v492
        %v548 = vpop.f32.mrb[0].mxu0
        %v549 = vadd.f32 0.0, %v548
        %v550 = vpop.f32.mrb[0].mxu0
        %v551 = vpop.f32.mrb[0].mxu0
        %v552 = vadd.f32 0.0, %v551
        %v553 = vpop.f32.mrb[0].mxu0
        %554 = vdwg.mxu0
        %vm555 = vcmask 523264
        %v556 = vsel %vm555, %v541, -inf
        %557 = vmax.xlane.f32.xlu0 %v556
        %v558 = vpop.xlane.xlu0 %557
        %v559 = vsel %vm555, %v544, -inf
        %560 = vmax.xlane.f32.xlu0 %v559
        %v561 = vpop.xlane.xlu0 %560
        %v562 = vsel %vm555, %v549, -inf
        %563 = vmax.xlane.f32.xlu0 %v562
        %v564 = vpop.xlane.xlu0 %563
        %v565 = vsel %vm555, %v552, -inf
        %566 = vmax.xlane.f32.xlu0 %v565
        %v567 = vpop.xlane.xlu0 %566
        %v568 = vsub.f32 %v541, %v558
        %v569 = vsub.f32 %v544, %v561
        %v570 = vsub.f32 %v549, %v564
        %v571 = vsub.f32 %v552, %v567
        %v572 = vmul.f32 %v568, 1.442695
        %v573 = vpow.pop %v572
        %v574 = vmul.f32 %v569, 1.442695
        %v575 = vpow.pop %v574
        %v576 = vmul.f32 %v570, 1.442695
        %v577 = vpow.pop %v576
        %v578 = vmul.f32 %v571, 1.442695
        %v579 = vpow.pop %v578
        %v580 = vsel %vm555, %v573, 0.0
        %581 = vadd.xlane.f32.xlu0 %v580
        %v582 = vpop.xlane.xlu0 %581
        %v583 = vsel %vm555, %v575, 0.0
        %584 = vadd.xlane.f32.xlu0 %v583
        %v585 = vpop.xlane.xlu0 %584
        %v586 = vsel %vm555, %v577, 0.0
        %587 = vadd.xlane.f32.xlu0 %v586
        %v588 = vpop.xlane.xlu0 %587
        %v589 = vsel %vm555, %v579, 0.0
        %590 = vadd.xlane.f32.xlu0 %v589
        %v591 = vpop.xlane.xlu0 %590
        %v592 = vrcp.pop %v582
        %v593 = vmul.f32 1.0, %v592
        %v594 = vrcp.pop %v585
        %v595 = vmul.f32 1.0, %v594
        %v596 = vrcp.pop %v588
        %v597 = vmul.f32 1.0, %v596
        %v598 = vrcp.pop %v591
        %v599 = vmul.f32 1.0, %v598
        %v600 = vmul.f32 %v573, %v593
        %v601 = vmul.f32 %v575, %v595
        %v602 = vmul.f32 %v577, %v597
        %v603 = vmul.f32 %v579, %v599
        %v604 = vpack.c.bf16 %v601, %v600
        %v605 = vpack.c.bf16 %v603, %v602
        %v614 = vunpack.c.l.b16 %v459
        %v615 = vunpack.c.l.b16 %v460
        %v616 = vunpack.c.l.b16 %v461
        %v617 = vunpack.c.l.b16 %v462
        %v618 = vunpack.c.l.b16 %v463
        %v619 = vunpack.c.l.b16 %v464
        %v620 = vunpack.c.l.b16 %v465
        %v621 = vunpack.c.l.b16 %v466
        %v622 = vpack.c.b16 %v615, %v614
        %v623 = vpack.c.b16 %v617, %v616
        %v624 = vpack.c.b16 %v619, %v618
        %v625 = vpack.c.b16 %v621, %v620
        %v631 = vsel %vm555, %v604, 0
        %v634 = vsel %vm555, %v605, 0
        %636 = vmatprep.subr.bf16.mxu0 0
        %637 = vmatpush1.bf16.msra.mxu0 %v622
        %638 = vmatprep.subr.bf16.mxu0 0
        %639 = vmatpush1.bf16.msra.mxu0 %v623
        %640 = vmatprep.subr.bf16.mxu0 0
        %641 = vmatpush1.bf16.msra.mxu0 %v624
        %642 = vmatprep.subr.bf16.mxu0 0
        %643 = vmatpush1.bf16.msra.mxu0 %v625
        %644 = vmatprep.subr.bf16.mxu0 0
        %645 = vmatpush1.bf16.msra.mxu0 0
        %646 = vmatprep.subr.bf16.mxu0 0
        %647 = vmatpush1.bf16.msra.mxu0 0
        %648 = vmatprep.subr.bf16.mxu0 0
        %649 = vmatpush1.bf16.msra.mxu0 0
        %650 = vmatprep.subr.bf16.mxu0 0
        %651 = vmatpush1.bf16.msra.mxu0 0
        %652 = vmatprep.subr.bf16.mxu0 0
        %653 = vmatpush1.bf16.msra.mxu0 0
        %654 = vmatprep.subr.bf16.mxu0 0
        %655 = vmatpush1.bf16.msra.mxu0 0
        %656 = vmatprep.subr.bf16.mxu0 0
        %657 = vmatpush1.bf16.msra.mxu0 0
        %658 = vmatprep.subr.bf16.mxu0 0
        %659 = vmatpush1.bf16.msra.mxu0 0
        %660 = vmatprep.subr.bf16.mxu0 0
        %661 = vmatpush1.bf16.msra.mxu0 0
        %662 = vmatprep.subr.bf16.mxu0 0
        %663 = vmatpush1.bf16.msra.mxu0 0
        %664 = vmatprep.subr.bf16.mxu0 0
        %665 = vmatpush1.bf16.msra.mxu0 0
        %666 = vmatprep.subr.bf16.mxu0 0
        %667 = vmatpush1.bf16.msra.mxu0 0
        %668 = vmatprep.mubr.bf16.mxu0 0
        %669 = vmatmul.mubr.bf16.gmra.mrb[0].mxu0 %v631
        %v670 = vpop.f32.mrb[0].mxu0
        %v671 = vadd.f32 0.0, %v670
        %v672 = vpop.f32.mrb[0].mxu0
        %v673 = vpop.f32.mrb[0].mxu0
        %v674 = vadd.f32 0.0, %v673
        %v675 = vpop.f32.mrb[0].mxu0
        %676 = vmatprep.mubr.bf16.mxu0 0
        %677 = vmatmul.mubr.bf16.gmra.mrb[0].mxu0 %v634
        %v678 = vpop.f32.mrb[0].mxu0
        %v679 = vadd.f32 0.0, %v678
        %v680 = vpop.f32.mrb[0].mxu0
        %v681 = vpop.f32.mrb[0].mxu0
        %v682 = vadd.f32 0.0, %v681
        %v683 = vpop.f32.mrb[0].mxu0
        %684 = vdwg.mxu0
        %685 = vst.msk [vmem:[#allocation2] sm:$0xff] %vm487, %v671
        %686 = vst.msk [vmem:[#allocation2 + $0x8] sm:$0xff] %vm487, %v674
        %687 = vst.msk [vmem:[#allocation2 + $0x10] sm:$0xff] %vm487, %v679
        %688 = vst.msk [vmem:[#allocation2 + $0x18] sm:$0xff] %vm487, %v682
        %691 = vrot.lane.b32.xlu0 %v449, 96
        %v692 = vpop.permute.xlu0 %691
        %693 = vrot.lane.b32.xlu0 %v450, 96
        %v694 = vpop.permute.xlu0 %693
        %695 = vrot.lane.b32.xlu0 %v483, 96
        %v696 = vpop.permute.xlu0 %695
        %697 = vrot.lane.b32.xlu0 %v484, 96
        %v698 = vpop.permute.xlu0 %697
        %699 = vrot.lane.b32.xlu0 %v485, 96
        %v700 = vpop.permute.xlu0 %699
        %701 = vrot.lane.b32.xlu0 %v486, 96
        %v702 = vpop.permute.xlu0 %701
        %v704 = vsel %vm487, %v692, 0
        %v707 = vsel %vm487, %v694, 0
        %v710 = vsel %vm487, %v696, 0
        %v713 = vsel %vm487, %v698, 0
        %v716 = vsel %vm487, %v700, 0
        %v719 = vsel %vm487, %v702, 0
        %721 = vmatprep.subr.bf16.mxu0 0
        %722 = vmatpush1.bf16.xpose.msra.mxu0 %v710
        %723 = vmatprep.subr.bf16.mxu0 0
        %724 = vmatpush1.bf16.xpose.msra.mxu0 %v713
        %725 = vmatprep.subr.bf16.mxu0 0
        %726 = vmatpush1.bf16.xpose.msra.mxu0 %v716
        %727 = vmatprep.subr.bf16.mxu0 0
        %728 = vmatpush1.bf16.xpose.msra.mxu0 %v719
        %729 = vmatprep.subr.bf16.mxu0 0
        %730 = vmatpush1.bf16.xpose.msra.mxu0 0
        %731 = vmatprep.subr.bf16.mxu0 0
        %732 = vmatpush1.bf16.xpose.msra.mxu0 0
        %733 = vmatprep.subr.bf16.mxu0 0
        %734 = vmatpush1.bf16.xpose.msra.mxu0 0
        %735 = vmatprep.subr.bf16.mxu0 0
        %736 = vmatpush1.bf16.xpose.msra.mxu0 0
        %737 = vmatprep.subr.bf16.mxu0 0
        %738 = vmatpush1.bf16.xpose.msra.mxu0 0
        %739 = vmatprep.subr.bf16.mxu0 0
        %740 = vmatpush1.bf16.xpose.msra.mxu0 0
        %741 = vmatprep.subr.bf16.mxu0 0
        %742 = vmatpush1.bf16.xpose.msra.mxu0 0
        %743 = vmatprep.subr.bf16.mxu0 0
        %744 = vmatpush1.bf16.xpose.msra.mxu0 0
        %745 = vmatprep.subr.bf16.mxu0 0
        %746 = vmatpush1.bf16.xpose.msra.mxu0 0
        %747 = vmatprep.subr.bf16.mxu0 0
        %748 = vmatpush1.bf16.xpose.msra.mxu0 0
        %749 = vmatprep.subr.bf16.mxu0 0
        %750 = vmatpush1.bf16.xpose.msra.mxu0 0
        %751 = vmatprep.subr.bf16.mxu0 0
        %752 = vmatpush1.bf16.xpose.msra.mxu0 0
        %753 = vmatprep.mubr.bf16.mxu0 0
        %754 = vmatmul.mubr.bf16.gmra.mrb[0].mxu0 %v704
        %v755 = vpop.f32.mrb[0].mxu0
        %v756 = vadd.f32 0.0, %v755
        %v757 = vpop.f32.mrb[0].mxu0
        %v758 = vpop.f32.mrb[0].mxu0
        %v759 = vadd.f32 0.0, %v758
        %v760 = vpop.f32.mrb[0].mxu0
        %761 = vmatprep.mubr.bf16.mxu0 0
        %762 = vmatmul.mubr.bf16.gmra.mrb[0].mxu0 %v707
        %v763 = vpop.f32.mrb[0].mxu0
        %v764 = vadd.f32 0.0, %v763
        %v765 = vpop.f32.mrb[0].mxu0
        %v766 = vpop.f32.mrb[0].mxu0
        %v767 = vadd.f32 0.0, %v766
        %v768 = vpop.f32.mrb[0].mxu0
        %769 = vdwg.mxu0
        %v770 = vsel %vm555, %v756, -inf
        %771 = vmax.xlane.f32.xlu0 %v770
        %v772 = vpop.xlane.xlu0 %771
        %v773 = vsel %vm555, %v759, -inf
        %774 = vmax.xlane.f32.xlu0 %v773
        %v775 = vpop.xlane.xlu0 %774
        %v776 = vsel %vm555, %v764, -inf
        %777 = vmax.xlane.f32.xlu0 %v776
        %v778 = vpop.xlane.xlu0 %777
        %v779 = vsel %vm555, %v767, -inf
        %780 = vmax.xlane.f32.xlu0 %v779
        %v781 = vpop.xlane.xlu0 %780
        %v782 = vsub.f32 %v756, %v772
        %v783 = vsub.f32 %v759, %v775
        %v784 = vsub.f32 %v764, %v778
        %v785 = vsub.f32 %v767, %v781
        %v786 = vmul.f32 %v782, 1.442695
        %v787 = vpow.pop %v786
        %v788 = vmul.f32 %v783, 1.442695
        %v789 = vpow.pop %v788
        %v790 = vmul.f32 %v784, 1.442695
        %v791 = vpow.pop %v790
        %v792 = vmul.f32 %v785, 1.442695
        %v793 = vpow.pop %v792
        %v794 = vsel %vm555, %v787, 0.0
        %795 = vadd.xlane.f32.xlu0 %v794
        %v796 = vpop.xlane.xlu0 %795
        %v797 = vsel %vm555, %v789, 0.0
        %798 = vadd.xlane.f32.xlu0 %v797
        %v799 = vpop.xlane.xlu0 %798
        %v800 = vsel %vm555, %v791, 0.0
        %801 = vadd.xlane.f32.xlu0 %v800
        %v802 = vpop.xlane.xlu0 %801
        %v803 = vsel %vm555, %v793, 0.0
        %804 = vadd.xlane.f32.xlu0 %v803
        %v805 = vpop.xlane.xlu0 %804
        %v806 = vrcp.pop %v796
        %v807 = vmul.f32 1.0, %v806
        %v808 = vrcp.pop %v799
        %v809 = vmul.f32 1.0, %v808
        %v810 = vrcp.pop %v802
        %v811 = vmul.f32 1.0, %v810
        %v812 = vrcp.pop %v805
        %v813 = vmul.f32 1.0, %v812
        %v814 = vmul.f32 %v787, %v807
        %v815 = vmul.f32 %v789, %v809
        %v816 = vmul.f32 %v791, %v811
        %v817 = vmul.f32 %v793, %v813
        %v818 = vpack.c.bf16 %v815, %v814
        %v819 = vpack.c.bf16 %v817, %v816
        %820 = vrot.lane.b32.xlu0 %v622, 96
        %v821 = vpop.permute.xlu0 %820
        %822 = vrot.lane.b32.xlu0 %v623, 96
        %v823 = vpop.permute.xlu0 %822
        %824 = vrot.lane.b32.xlu0 %v624, 96
        %v825 = vpop.permute.xlu0 %824
        %826 = vrot.lane.b32.xlu0 %v625, 96
        %v827 = vpop.permute.xlu0 %826
        %v833 = vsel %vm555, %v818, 0
        %v836 = vsel %vm555, %v819, 0
        %838 = vmatprep.subr.bf16.mxu0 0
        %839 = vmatpush1.bf16.msra.mxu0 %v821
        %840 = vmatprep.subr.bf16.mxu0 0
        %841 = vmatpush1.bf16.msra.mxu0 %v823
        %842 = vmatprep.subr.bf16.mxu0 0
        %843 = vmatpush1.bf16.msra.mxu0 %v825
        %844 = vmatprep.subr.bf16.mxu0 0
        %845 = vmatpush1.bf16.msra.mxu0 %v827
        %846 = vmatprep.subr.bf16.mxu0 0
        %847 = vmatpush1.bf16.msra.mxu0 0
        %848 = vmatprep.subr.bf16.mxu0 0
        %849 = vmatpush1.bf16.msra.mxu0 0
        %850 = vmatprep.subr.bf16.mxu0 0
        %851 = vmatpush1.bf16.msra.mxu0 0
        %852 = vmatprep.subr.bf16.mxu0 0
        %853 = vmatpush1.bf16.msra.mxu0 0
        %854 = vmatprep.subr.bf16.mxu0 0
        %855 = vmatpush1.bf16.msra.mxu0 0
        %856 = vmatprep.subr.bf16.mxu0 0
        %857 = vmatpush1.bf16.msra.mxu0 0
        %858 = vmatprep.subr.bf16.mxu0 0
        %859 = vmatpush1.bf16.msra.mxu0 0
        %860 = vmatprep.subr.bf16.mxu0 0
        %861 = vmatpush1.bf16.msra.mxu0 0
        %862 = vmatprep.subr.bf16.mxu0 0
        %863 = vmatpush1.bf16.msra.mxu0 0
        %864 = vmatprep.subr.bf16.mxu0 0
        %865 = vmatpush1.bf16.msra.mxu0 0
        %866 = vmatprep.subr.bf16.mxu0 0
        %867 = vmatpush1.bf16.msra.mxu0 0
        %868 = vmatprep.subr.bf16.mxu0 0
        %869 = vmatpush1.bf16.msra.mxu0 0
        %870 = vmatprep.mubr.bf16.mxu0 0
        %871 = vmatmul.mubr.bf16.gmra.mrb[0].mxu0 %v833
        %v872 = vpop.f32.mrb[0].mxu0
        %v873 = vadd.f32 0.0, %v872
        %v874 = vpop.f32.mrb[0].mxu0
        %v875 = vpop.f32.mrb[0].mxu0
        %v876 = vadd.f32 0.0, %v875
        %v877 = vpop.f32.mrb[0].mxu0
        %878 = vmatprep.mubr.bf16.mxu0 0
        %879 = vmatmul.mubr.bf16.gmra.mrb[0].mxu0 %v836
        %v880 = vpop.f32.mrb[0].mxu0
        %v881 = vadd.f32 0.0, %v880
        %v882 = vpop.f32.mrb[0].mxu0
        %v883 = vpop.f32.mrb[0].mxu0
        %v884 = vadd.f32 0.0, %v883
        %v885 = vpop.f32.mrb[0].mxu0
        %886 = vdwg.mxu0
        %891 = vrot.lane.b32.xlu0 %v873, 32
        %v892 = vpop.permute.xlu0 %891
        %893 = vrot.lane.b32.xlu0 %v876, 32
        %v894 = vpop.permute.xlu0 %893
        %895 = vrot.lane.b32.xlu0 %v881, 32
        %v896 = vpop.permute.xlu0 %895
        %897 = vrot.lane.b32.xlu0 %v884, 32
        %v898 = vpop.permute.xlu0 %897
        %vm903 = vcmask 523520
        %904 = vst.msk [vmem:[#allocation2] sm:$0xff] %vm903, %v892
        %905 = vst.msk [vmem:[#allocation2 + $0x8] sm:$0xff] %vm903, %v894
        %906 = vst.msk [vmem:[#allocation2 + $0x10] sm:$0xff] %vm903, %v896
        %907 = vst.msk [vmem:[#allocation2 + $0x18] sm:$0xff] %vm903, %v898
        %908 = vrot.lane.b32.xlu0 %v449, 64
        %v909 = vpop.permute.xlu0 %908
        %910 = vrot.lane.b32.xlu0 %v450, 64
        %v911 = vpop.permute.xlu0 %910
        %912 = vrot.lane.b32.xlu0 %v483, 64
        %v913 = vpop.permute.xlu0 %912
        %914 = vrot.lane.b32.xlu0 %v484, 64
        %v915 = vpop.permute.xlu0 %914
        %916 = vrot.lane.b32.xlu0 %v485, 64
        %v917 = vpop.permute.xlu0 %916
        %918 = vrot.lane.b32.xlu0 %v486, 64
        %v919 = vpop.permute.xlu0 %918
        %v921 = vsel %vm487, %v909, 0
        %v924 = vsel %vm487, %v911, 0
        %v927 = vsel %vm487, %v913, 0
        %v930 = vsel %vm487, %v915, 0
        %v933 = vsel %vm487, %v917, 0
        %v936 = vsel %vm487, %v919, 0
        %938 = vmatprep.subr.bf16.mxu0 0
        %939 = vmatpush1.bf16.xpose.msra.mxu0 %v927
        %940 = vmatprep.subr.bf16.mxu0 0
        %941 = vmatpush1.bf16.xpose.msra.mxu0 %v930
        %942 = vmatprep.subr.bf16.mxu0 0
        %943 = vmatpush1.bf16.xpose.msra.mxu0 %v933
        %944 = vmatprep.subr.bf16.mxu0 0
        %945 = vmatpush1.bf16.xpose.msra.mxu0 %v936
        %946 = vmatprep.subr.bf16.mxu0 0
        %947 = vmatpush1.bf16.xpose.msra.mxu0 0
        %948 = vmatprep.subr.bf16.mxu0 0
        %949 = vmatpush1.bf16.xpose.msra.mxu0 0
        %950 = vmatprep.subr.bf16.mxu0 0
        %951 = vmatpush1.bf16.xpose.msra.mxu0 0
        %952 = vmatprep.subr.bf16.mxu0 0
        %953 = vmatpush1.bf16.xpose.msra.mxu0 0
        %954 = vmatprep.subr.bf16.mxu0 0
        %955 = vmatpush1.bf16.xpose.msra.mxu0 0
        %956 = vmatprep.subr.bf16.mxu0 0
        %957 = vmatpush1.bf16.xpose.msra.mxu0 0
        %958 = vmatprep.subr.bf16.mxu0 0
        %959 = vmatpush1.bf16.xpose.msra.mxu0 0
        %960 = vmatprep.subr.bf16.mxu0 0
        %961 = vmatpush1.bf16.xpose.msra.mxu0 0
        %962 = vmatprep.subr.bf16.mxu0 0
        %963 = vmatpush1.bf16.xpose.msra.mxu0 0
        %964 = vmatprep.subr.bf16.mxu0 0
        %965 = vmatpush1.bf16.xpose.msra.mxu0 0
        %966 = vmatprep.subr.bf16.mxu0 0
        %967 = vmatpush1.bf16.xpose.msra.mxu0 0
        %968 = vmatprep.subr.bf16.mxu0 0
        %969 = vmatpush1.bf16.xpose.msra.mxu0 0
        %970 = vmatprep.mubr.bf16.mxu0 0
        %971 = vmatmul.mubr.bf16.gmra.mrb[0].mxu0 %v921
        %v972 = vpop.f32.mrb[0].mxu0
        %v973 = vadd.f32 0.0, %v972
        %v974 = vpop.f32.mrb[0].mxu0
        %v975 = vpop.f32.mrb[0].mxu0
        %v976 = vadd.f32 0.0, %v975
        %v977 = vpop.f32.mrb[0].mxu0
        %978 = vmatprep.mubr.bf16.mxu0 0
        %979 = vmatmul.mubr.bf16.gmra.mrb[0].mxu0 %v924
        %v980 = vpop.f32.mrb[0].mxu0
        %v981 = vadd.f32 0.0, %v980
        %v982 = vpop.f32.mrb[0].mxu0
        %v983 = vpop.f32.mrb[0].mxu0
        %v984 = vadd.f32 0.0, %v983
        %v985 = vpop.f32.mrb[0].mxu0
        %986 = vdwg.mxu0
        %v987 = vsel %vm555, %v973, -inf
        %988 = vmax.xlane.f32.xlu0 %v987
        %v989 = vpop.xlane.xlu0 %988
        %v990 = vsel %vm555, %v976, -inf
        %991 = vmax.xlane.f32.xlu0 %v990
        %v992 = vpop.xlane.xlu0 %991
        %v993 = vsel %vm555, %v981, -inf
        %994 = vmax.xlane.f32.xlu0 %v993
        %v995 = vpop.xlane.xlu0 %994
        %v996 = vsel %vm555, %v984, -inf
        %997 = vmax.xlane.f32.xlu0 %v996
        %v998 = vpop.xlane.xlu0 %997
        %v999 = vsub.f32 %v973, %v989
        %v1000 = vsub.f32 %v976, %v992
        %v1001 = vsub.f32 %v981, %v995
        %v1002 = vsub.f32 %v984, %v998
        %v1003 = vmul.f32 %v999, 1.442695
        %v1004 = vpow.pop %v1003
        %v1005 = vmul.f32 %v1000, 1.442695
        %v1006 = vpow.pop %v1005
        %v1007 = vmul.f32 %v1001, 1.442695
        %v1008 = vpow.pop %v1007
        %v1009 = vmul.f32 %v1002, 1.442695
        %v1010 = vpow.pop %v1009
        %v1011 = vsel %vm555, %v1004, 0.0
        %1012 = vadd.xlane.f32.xlu0 %v1011
        %v1013 = vpop.xlane.xlu0 %1012
        %v1014 = vsel %vm555, %v1006, 0.0
        %1015 = vadd.xlane.f32.xlu0 %v1014
        %v1016 = vpop.xlane.xlu0 %1015
        %v1017 = vsel %vm555, %v1008, 0.0
        %1018 = vadd.xlane.f32.xlu0 %v1017
        %v1019 = vpop.xlane.xlu0 %1018
        %v1020 = vsel %vm555, %v1010, 0.0
        %1021 = vadd.xlane.f32.xlu0 %v1020
        %v1022 = vpop.xlane.xlu0 %1021
        %v1023 = vrcp.pop %v1013
        %v1024 = vmul.f32 1.0, %v1023
        %v1025 = vrcp.pop %v1016
        %v1026 = vmul.f32 1.0, %v1025
        %v1027 = vrcp.pop %v1019
        %v1028 = vmul.f32 1.0, %v1027
        %v1029 = vrcp.pop %v1022
        %v1030 = vmul.f32 1.0, %v1029
        %v1031 = vmul.f32 %v1004, %v1024
        %v1032 = vmul.f32 %v1006, %v1026
        %v1033 = vmul.f32 %v1008, %v1028
        %v1034 = vmul.f32 %v1010, %v1030
        %v1035 = vpack.c.bf16 %v1032, %v1031
        %v1036 = vpack.c.bf16 %v1034, %v1033
        %1037 = vrot.lane.b32.xlu0 %v622, 64
        %v1038 = vpop.permute.xlu0 %1037
        %1039 = vrot.lane.b32.xlu0 %v623, 64
        %v1040 = vpop.permute.xlu0 %1039
        %1041 = vrot.lane.b32.xlu0 %v624, 64
        %v1042 = vpop.permute.xlu0 %1041
        %1043 = vrot.lane.b32.xlu0 %v625, 64
        %v1044 = vpop.permute.xlu0 %1043
        %v1050 = vsel %vm555, %v1035, 0
        %v1053 = vsel %vm555, %v1036, 0
        %1055 = vmatprep.subr.bf16.mxu0 0
        %1056 = vmatpush1.bf16.msra.mxu0 %v1038
        %1057 = vmatprep.subr.bf16.mxu0 0
        %1058 = vmatpush1.bf16.msra.mxu0 %v1040
        %1059 = vmatprep.subr.bf16.mxu0 0
        %1060 = vmatpush1.bf16.msra.mxu0 %v1042
        %1061 = vmatprep.subr.bf16.mxu0 0
        %1062 = vmatpush1.bf16.msra.mxu0 %v1044
        %1063 = vmatprep.subr.bf16.mxu0 0
        %1064 = vmatpush1.bf16.msra.mxu0 0
        %1065 = vmatprep.subr.bf16.mxu0 0
        %1066 = vmatpush1.bf16.msra.mxu0 0
        %1067 = vmatprep.subr.bf16.mxu0 0
        %1068 = vmatpush1.bf16.msra.mxu0 0
        %1069 = vmatprep.subr.bf16.mxu0 0
        %1070 = vmatpush1.bf16.msra.mxu0 0
        %1071 = vmatprep.subr.bf16.mxu0 0
        %1072 = vmatpush1.bf16.msra.mxu0 0
        %1073 = vmatprep.subr.bf16.mxu0 0
        %1074 = vmatpush1.bf16.msra.mxu0 0
        %1075 = vmatprep.subr.bf16.mxu0 0
        %1076 = vmatpush1.bf16.msra.mxu0 0
        %1077 = vmatprep.subr.bf16.mxu0 0
        %1078 = vmatpush1.bf16.msra.mxu0 0
        %1079 = vmatprep.subr.bf16.mxu0 0
        %1080 = vmatpush1.bf16.msra.mxu0 0
        %1081 = vmatprep.subr.bf16.mxu0 0
        %1082 = vmatpush1.bf16.msra.mxu0 0
        %1083 = vmatprep.subr.bf16.mxu0 0
        %1084 = vmatpush1.bf16.msra.mxu0 0
        %1085 = vmatprep.subr.bf16.mxu0 0
        %1086 = vmatpush1.bf16.msra.mxu0 0
        %1087 = vmatprep.mubr.bf16.mxu0 0
        %1088 = vmatmul.mubr.bf16.gmra.mrb[0].mxu0 %v1050
        %v1089 = vpop.f32.mrb[0].mxu0
        %v1090 = vadd.f32 0.0, %v1089
        %v1091 = vpop.f32.mrb[0].mxu0
        %v1092 = vpop.f32.mrb[0].mxu0
        %v1093 = vadd.f32 0.0, %v1092
        %v1094 = vpop.f32.mrb[0].mxu0
        %1095 = vmatprep.mubr.bf16.mxu0 0
        %1096 = vmatmul.mubr.bf16.gmra.mrb[0].mxu0 %v1053
        %v1097 = vpop.f32.mrb[0].mxu0
        %v1098 = vadd.f32 0.0, %v1097
        %v1099 = vpop.f32.mrb[0].mxu0
        %v1100 = vpop.f32.mrb[0].mxu0
        %v1101 = vadd.f32 0.0, %v1100
        %v1102 = vpop.f32.mrb[0].mxu0
        %1103 = vdwg.mxu0
        %1108 = vrot.lane.b32.xlu0 %v1090, 64
        %v1109 = vpop.permute.xlu0 %1108
        %1110 = vrot.lane.b32.xlu0 %v1093, 64
        %v1111 = vpop.permute.xlu0 %1110
        %1112 = vrot.lane.b32.xlu0 %v1098, 64
        %v1113 = vpop.permute.xlu0 %1112
        %1114 = vrot.lane.b32.xlu0 %v1101, 64
        %v1115 = vpop.permute.xlu0 %1114
        %vm1120 = vcmask 785920
        %1121 = vst.msk [vmem:[#allocation2] sm:$0xff] %vm1120, %v1109
        %1122 = vst.msk [vmem:[#allocation2 + $0x8] sm:$0xff] %vm1120, %v1111
        %1123 = vst.msk [vmem:[#allocation2 + $0x10] sm:$0xff] %vm1120, %v1113
        %1124 = vst.msk [vmem:[#allocation2 + $0x18] sm:$0xff] %vm1120, %v1115
        %1125 = vrot.lane.b32.xlu0 %v449, 32
        %v1126 = vpop.permute.xlu0 %1125
        %1127 = vrot.lane.b32.xlu0 %v450, 32
        %v1128 = vpop.permute.xlu0 %1127
        %1129 = vrot.lane.b32.xlu0 %v483, 32
        %v1130 = vpop.permute.xlu0 %1129
        %1131 = vrot.lane.b32.xlu0 %v484, 32
        %v1132 = vpop.permute.xlu0 %1131
        %1133 = vrot.lane.b32.xlu0 %v485, 32
        %v1134 = vpop.permute.xlu0 %1133
        %1135 = vrot.lane.b32.xlu0 %v486, 32
        %v1136 = vpop.permute.xlu0 %1135
        %v1138 = vsel %vm487, %v1126, 0
        %v1141 = vsel %vm487, %v1128, 0
        %v1144 = vsel %vm487, %v1130, 0
        %v1147 = vsel %vm487, %v1132, 0
        %v1150 = vsel %vm487, %v1134, 0
        %v1153 = vsel %vm487, %v1136, 0
        %1155 = vmatprep.subr.bf16.mxu0 0
        %1156 = vmatpush1.bf16.xpose.msra.mxu0 %v1144
        %1157 = vmatprep.subr.bf16.mxu0 0
        %1158 = vmatpush1.bf16.xpose.msra.mxu0 %v1147
        %1159 = vmatprep.subr.bf16.mxu0 0
        %1160 = vmatpush1.bf16.xpose.msra.mxu0 %v1150
        %1161 = vmatprep.subr.bf16.mxu0 0
        %1162 = vmatpush1.bf16.xpose.msra.mxu0 %v1153
        %1163 = vmatprep.subr.bf16.mxu0 0
        %1164 = vmatpush1.bf16.xpose.msra.mxu0 0
        %1165 = vmatprep.subr.bf16.mxu0 0
        %1166 = vmatpush1.bf16.xpose.msra.mxu0 0
        %1167 = vmatprep.subr.bf16.mxu0 0
        %1168 = vmatpush1.bf16.xpose.msra.mxu0 0
        %1169 = vmatprep.subr.bf16.mxu0 0
        %1170 = vmatpush1.bf16.xpose.msra.mxu0 0
        %1171 = vmatprep.subr.bf16.mxu0 0
        %1172 = vmatpush1.bf16.xpose.msra.mxu0 0
        %1173 = vmatprep.subr.bf16.mxu0 0
        %1174 = vmatpush1.bf16.xpose.msra.mxu0 0
        %1175 = vmatprep.subr.bf16.mxu0 0
        %1176 = vmatpush1.bf16.xpose.msra.mxu0 0
        %1177 = vmatprep.subr.bf16.mxu0 0
        %1178 = vmatpush1.bf16.xpose.msra.mxu0 0
        %1179 = vmatprep.subr.bf16.mxu0 0
        %1180 = vmatpush1.bf16.xpose.msra.mxu0 0
        %1181 = vmatprep.subr.bf16.mxu0 0
        %1182 = vmatpush1.bf16.xpose.msra.mxu0 0
        %1183 = vmatprep.subr.bf16.mxu0 0
        %1184 = vmatpush1.bf16.xpose.msra.mxu0 0
        %1185 = vmatprep.subr.bf16.mxu0 0
        %1186 = vmatpush1.bf16.xpose.msra.mxu0 0
        %1187 = vmatprep.mubr.bf16.mxu0 0
        %1188 = vmatmul.mubr.bf16.gmra.mrb[0].mxu0 %v1138
        %v1189 = vpop.f32.mrb[0].mxu0
        %v1190 = vadd.f32 0.0, %v1189
        %v1191 = vpop.f32.mrb[0].mxu0
        %v1192 = vpop.f32.mrb[0].mxu0
        %v1193 = vadd.f32 0.0, %v1192
        %v1194 = vpop.f32.mrb[0].mxu0
        %1195 = vmatprep.mubr.bf16.mxu0 0
        %1196 = vmatmul.mubr.bf16.gmra.mrb[0].mxu0 %v1141
        %v1197 = vpop.f32.mrb[0].mxu0
        %v1198 = vadd.f32 0.0, %v1197
        %v1199 = vpop.f32.mrb[0].mxu0
        %v1200 = vpop.f32.mrb[0].mxu0
        %v1201 = vadd.f32 0.0, %v1200
        %v1202 = vpop.f32.mrb[0].mxu0
        %1203 = vdwg.mxu0
        %v1204 = vsel %vm555, %v1190, -inf
        %1205 = vmax.xlane.f32.xlu0 %v1204
        %v1206 = vpop.xlane.xlu0 %1205
        %v1207 = vsel %vm555, %v1193, -inf
        %1208 = vmax.xlane.f32.xlu0 %v1207
        %v1209 = vpop.xlane.xlu0 %1208
        %v1210 = vsel %vm555, %v1198, -inf
        %1211 = vmax.xlane.f32.xlu0 %v1210
        %v1212 = vpop.xlane.xlu0 %1211
        %v1213 = vsel %vm555, %v1201, -inf
        %1214 = vmax.xlane.f32.xlu0 %v1213
        %v1215 = vpop.xlane.xlu0 %1214
        %v1216 = vsub.f32 %v1190, %v1206
        %v1217 = vsub.f32 %v1193, %v1209
        %v1218 = vsub.f32 %v1198, %v1212
        %v1219 = vsub.f32 %v1201, %v1215
        %v1220 = vmul.f32 %v1216, 1.442695
        %v1221 = vpow.pop %v1220
        %v1222 = vmul.f32 %v1217, 1.442695
        %v1223 = vpow.pop %v1222
        %v1224 = vmul.f32 %v1218, 1.442695
        %v1225 = vpow.pop %v1224
        %v1226 = vmul.f32 %v1219, 1.442695
        %v1227 = vpow.pop %v1226
        %v1228 = vsel %vm555, %v1221, 0.0
        %1229 = vadd.xlane.f32.xlu0 %v1228
        %v1230 = vpop.xlane.xlu0 %1229
        %v1231 = vsel %vm555, %v1223, 0.0
        %1232 = vadd.xlane.f32.xlu0 %v1231
        %v1233 = vpop.xlane.xlu0 %1232
        %v1234 = vsel %vm555, %v1225, 0.0
        %1235 = vadd.xlane.f32.xlu0 %v1234
        %v1236 = vpop.xlane.xlu0 %1235
        %v1237 = vsel %vm555, %v1227, 0.0
        %1238 = vadd.xlane.f32.xlu0 %v1237
        %v1239 = vpop.xlane.xlu0 %1238
        %v1240 = vrcp.pop %v1230
        %v1241 = vmul.f32 1.0, %v1240
        %v1242 = vrcp.pop %v1233
        %v1243 = vmul.f32 1.0, %v1242
        %v1244 = vrcp.pop %v1236
        %v1245 = vmul.f32 1.0, %v1244
        %v1246 = vrcp.pop %v1239
        %v1247 = vmul.f32 1.0, %v1246
        %v1248 = vmul.f32 %v1221, %v1241
        %v1249 = vmul.f32 %v1223, %v1243
        %v1250 = vmul.f32 %v1225, %v1245
        %v1251 = vmul.f32 %v1227, %v1247
        %v1252 = vpack.c.bf16 %v1249, %v1248
        %v1253 = vpack.c.bf16 %v1251, %v1250
        %1254 = vrot.lane.b32.xlu0 %v622, 32
        %v1255 = vpop.permute.xlu0 %1254
        %1256 = vrot.lane.b32.xlu0 %v623, 32
        %v1257 = vpop.permute.xlu0 %1256
        %1258 = vrot.lane.b32.xlu0 %v624, 32
        %v1259 = vpop.permute.xlu0 %1258
        %1260 = vrot.lane.b32.xlu0 %v625, 32
        %v1261 = vpop.permute.xlu0 %1260
        %v1267 = vsel %vm555, %v1252, 0
        %v1270 = vsel %vm555, %v1253, 0
        %1272 = vmatprep.subr.bf16.mxu0 0
        %1273 = vmatpush1.bf16.msra.mxu0 %v1255
        %1274 = vmatprep.subr.bf16.mxu0 0
        %1275 = vmatpush1.bf16.msra.mxu0 %v1257
        %1276 = vmatprep.subr.bf16.mxu0 0
        %1277 = vmatpush1.bf16.msra.mxu0 %v1259
        %1278 = vmatprep.subr.bf16.mxu0 0
        %1279 = vmatpush1.bf16.msra.mxu0 %v1261
        %1280 = vmatprep.subr.bf16.mxu0 0
        %1281 = vmatpush1.bf16.msra.mxu0 0
        %1282 = vmatprep.subr.bf16.mxu0 0
        %1283 = vmatpush1.bf16.msra.mxu0 0
        %1284 = vmatprep.subr.bf16.mxu0 0
        %1285 = vmatpush1.bf16.msra.mxu0 0
        %1286 = vmatprep.subr.bf16.mxu0 0
        %1287 = vmatpush1.bf16.msra.mxu0 0
        %1288 = vmatprep.subr.bf16.mxu0 0
        %1289 = vmatpush1.bf16.msra.mxu0 0
        %1290 = vmatprep.subr.bf16.mxu0 0
        %1291 = vmatpush1.bf16.msra.mxu0 0
        %1292 = vmatprep.subr.bf16.mxu0 0
        %1293 = vmatpush1.bf16.msra.mxu0 0
        %1294 = vmatprep.subr.bf16.mxu0 0
        %1295 = vmatpush1.bf16.msra.mxu0 0
        %1296 = vmatprep.subr.bf16.mxu0 0
        %1297 = vmatpush1.bf16.msra.mxu0 0
        %1298 = vmatprep.subr.bf16.mxu0 0
        %1299 = vmatpush1.bf16.msra.mxu0 0
        %1300 = vmatprep.subr.bf16.mxu0 0
        %1301 = vmatpush1.bf16.msra.mxu0 0
        %1302 = vmatprep.subr.bf16.mxu0 0
        %1303 = vmatpush1.bf16.msra.mxu0 0
        %1304 = vmatprep.mubr.bf16.mxu0 0
        %1305 = vmatmul.mubr.bf16.gmra.mrb[0].mxu0 %v1267
        %v1306 = vpop.f32.mrb[0].mxu0
        %v1307 = vadd.f32 0.0, %v1306
        %v1308 = vpop.f32.mrb[0].mxu0
        %v1309 = vpop.f32.mrb[0].mxu0
        %v1310 = vadd.f32 0.0, %v1309
        %v1311 = vpop.f32.mrb[0].mxu0
        %1312 = vmatprep.mubr.bf16.mxu0 0
        %1313 = vmatmul.mubr.bf16.gmra.mrb[0].mxu0 %v1270
        %v1314 = vpop.f32.mrb[0].mxu0
        %v1315 = vadd.f32 0.0, %v1314
        %v1316 = vpop.f32.mrb[0].mxu0
        %v1317 = vpop.f32.mrb[0].mxu0
        %v1318 = vadd.f32 0.0, %v1317
        %v1319 = vpop.f32.mrb[0].mxu0
        %1320 = vdwg.mxu0
        %1325 = vrot.lane.b32.xlu0 %v1307, 96
        %v1326 = vpop.permute.xlu0 %1325
        %1327 = vrot.lane.b32.xlu0 %v1310, 96
        %v1328 = vpop.permute.xlu0 %1327
        %1329 = vrot.lane.b32.xlu0 %v1315, 96
        %v1330 = vpop.permute.xlu0 %1329
        %1331 = vrot.lane.b32.xlu0 %v1318, 96
        %v1332 = vpop.permute.xlu0 %1331
        %vm1337 = vcmask 1048320
        %1338 = vst.msk [vmem:[#allocation2] sm:$0xff] %vm1337, %v1326
        %1339 = vst.msk [vmem:[#allocation2 + $0x8] sm:$0xff] %vm1337, %v1328
        %1340 = vst.msk [vmem:[#allocation2 + $0x10] sm:$0xff] %vm1337, %v1330
        %1341 = vst.msk [vmem:[#allocation2 + $0x18] sm:$0xff] %vm1337, %v1332
        %v1342 = vld [vmem:[#allocation2] sm:$0xff]
        %v1343 = vld [vmem:[#allocation2 + $0x8] sm:$0xff]
        %v1344 = vld [vmem:[#allocation2 + $0x10] sm:$0xff]
        %v1345 = vld [vmem:[#allocation2 + $0x18] sm:$0xff]
        %v1346 = vpack.c.bf16 %v1343, %v1342
        %v1347 = vpack.c.bf16 %v1345, %v1344
        %v1350 = vunpack.c.l.b16 %v1346
        %v1351 = vunpack.c.h.b16 %v1346
        %v1352 = vunpack.c.l.b16 %v1347
        %v1353 = vunpack.c.h.b16 %v1347
        %v1354 = vpack.c.b16 %v1350, %v1350
        %v1355 = vpack.c.b16 %v1351, %v1351
        %v1356 = vpack.c.b16 %v1352, %v1352
        %v1357 = vpack.c.b16 %v1353, %v1353
        %1362 = vst [vmem:[%s434] sm:$0xf] %v1354
        %1363 = vst [vmem:[%s434 + $0x4] sm:$0xf] %v1355
        %1364 = vst [vmem:[%s434 + $0x8] sm:$0xf] %v1356
        %1365 = vst [vmem:[%s434 + $0xc] sm:$0xf] %v1357
        %s1366 = smul.u32 4, %s19
        %p1367 = scmp.lt.s32.totalorder %s18, 1
        %s1368 = scalar_select %p1367, %s18, 1
        %p1369 = scmp.lt.s32.totalorder %s1366, 7
        %s1370 = scalar_select %p1369, %s1366, 7
        %s1371 = smul.addr %s1368, 8
        %s1372 = sadd.s32 %s1370, %s1371
        %s1373 = smul.addr %s1372, 4
        %s1374 = scalar_lea.vmem %s3, %s1373
        // Predicated region
        $region156: #{encode_graph.10} parent=142 // pred_check
          %p1375 = pneg %p126
        $region157: #{encode_graph.10} parent=142 // pred_check_branch
          %1377 = sbr.rel (%p1375) target = $region159
        $region158: #{encode_graph.10} parent=142 // pred_region
          %s1378 = smul.u32 4, %s19
        $region159: #{encode_graph.10} parent=142 // pred_fallthru
          _
      $region143: #{encode_graph.10} parent=5 // pred_fallthru
        _
      %p1379 = scmp.le.s32.totalorder 2, %s9
      // Predicated region
      $region160: #{encode_graph.10} parent=5 // pred_check
        %p1380 = pneg %p1379
      $region161: #{encode_graph.10} parent=5 // pred_check_branch
        %1382 = sbr.rel (%p1380) target = $region163
      $region162: #{encode_graph.10} parent=5 // pred_region
        %s1383 = ssub.s32 %s9, 2
        // Predicated region
        $region164: #{encode_graph.10} parent=162 // pred_check
          %p1384 = pneg %p132
        $region165: #{encode_graph.10} parent=162 // pred_check_branch
          %1386 = sbr.rel (%p1384) target = $region167
        $region166: #{encode_graph.10} parent=162 // pred_region
          %s1387 = smul.u32 4, %s21
          %p1388 = scmp.lt.s32.totalorder %s20, 1
          %s1389 = scalar_select %p1388, %s20, 1
          %p1390 = scmp.lt.s32.totalorder %s1387, 7
          %s1391 = scalar_select %p1390, %s1387, 7
          %s1392 = smul.addr %s1389, 8
          %s1393 = sadd.s32 %s1391, %s1392
          %s1394 = smul.addr %s1393, 4
          %s1395 = scalar_lea.vmem %s3, %s1394
        $region167: #{encode_graph.10} parent=162 // pred_fallthru
          _
      $region163: #{encode_graph.10} parent=5 // pred_fallthru
        _
    $region6: #{encode_graph.10} parent=1 // loop_footer
      %s13 = sadd.s32 1, %s9
    $region7: #{encode_graph.10} parent=1 // loop_footer_branch
      %8 = sbr.rel target = $region3
    $region8: #{encode_graph.10} parent=1 // loop_exit
      _

// kernel: encode_graph.11
$region0: #{encode_graph.11}
  #allocation0 [shape = 'u32[]', space=smem, size = 0x4, offset = 0x4, fixed_abs, tag = 'smem constant byte address 0x4 - core index']
  #allocation1 [shape = 'u32[144,128]{1,0:T(1,128)}', space=vmem, size = 0x12000, scoped, tag = 'internal scratch']
  %s0 = inlined_call_operand.vmem [shape: bf16[128,128], index: 0, kind: input, shape index: {}]
  %s1 = inlined_call_operand.vmem [shape: bf16[128,128], index: 1, kind: input, shape index: {}]
  %s2 = inlined_call_operand.vmem [shape: f32[1,128], index: 2, kind: input, shape index: {}]
  %s3 = inlined_call_operand.vmem [shape: bf16[128,128], index: 3, kind: input, shape index: {}]
  %s4 = inlined_call_operand.vmem [shape: f32[1,128], index: 4, kind: input, shape index: {}]
  %s5 = inlined_call_operand.vmem [shape: f32[1,128], index: 5, kind: input, shape index: {}]
  %s6 = inlined_call_operand.vmem [shape: bf16[128,512], index: 6, kind: input, shape index: {}]
  %s7 = inlined_call_operand.vmem [shape: f32[1,512], index: 7, kind: input, shape index: {}]
  %s8 = inlined_call_operand.vmem [shape: bf16[512,128], index: 8, kind: input, shape index: {}]
  %s9 = inlined_call_operand.vmem [shape: f32[1,128], index: 9, kind: input, shape index: {}]
  %s10 = inlined_call_operand.vmem [shape: bf16[128,128], index: 10, kind: output, shape index: {}]
  %s11 = sld [smem:[#allocation0]]
  $region73: #{encode_graph.11} parent=0
    _
  %s13 = ssub.s32 1, %s11
  %s14 = scalar_select 0, %s13, %s11
  loop: start=0, step=1, limit=4
  $region2: #{encode_graph.11} parent=0 // loop_pre_header
    _
  $region3: #{encode_graph.11} parent=0 // loop_header
    %s16 = sphi 0, %s20
    %p17 = scmp.ge.s32.totalorder %s16, 4
    %s26 = sphi 0, %s28
    %s29 = sphi 0, %s26
    %s30 = sphi 0, %s29
    %s46 = sphi 0, %s30
    %s50 = sphi 0, %s50
    %s52 = sphi 0, %s50
    %s53 = sphi 0, %s52
    %s67 = sphi 0, %s53
    %s71 = sphi 0, %s71
    %s73 = sphi 0, %s71
    %s74 = sphi 0, %s73
    %s88 = sphi 0, %s74
    %s94 = sphi 0, %s96
    %s97 = sphi 0, %s94
    %s98 = sphi 0, %s97
    %s114 = sphi 0, %s98
    %s118 = sphi 0, %s118
    %s120 = sphi 0, %s118
    %s121 = sphi 0, %s120
    %s135 = sphi 0, %s121
    %s139 = sphi 0, %s139
    %s141 = sphi 0, %s139
    %s142 = sphi 0, %s141
    %s156 = sphi 0, %s142
    %s160 = sphi 0, %s160
    %s162 = sphi 0, %s160
    %s163 = sphi 0, %s162
    %s177 = sphi 0, %s163
    %s181 = sphi 0, %s181
    %s183 = sphi 0, %s181
    %s184 = sphi 0, %s183
    %s198 = sphi 0, %s184
    %s202 = sphi 0, %s202
    %s204 = sphi 0, %s202
    %s205 = sphi 0, %s204
    %s219 = sphi 0, %s205
    %s223 = sphi 0, %s223
    %s225 = sphi 0, %s223
    %s226 = sphi 0, %s225
    %s240 = sphi 0, %s226
    %s246 = sphi 0, %s248
    %s249 = sphi 0, %s246
    %s250 = sphi 0, %s249
    %s266 = sphi 0, %s250
  $region4: #{encode_graph.11} parent=0 // loop_header_branch
    %19 = sbr.rel (%p17) target = $region8
  $region5: #{encode_graph.11} parent=0 // loop_body
    %s21 = ssub.s32 %s16, 1
    %s22 = ssub.s32 %s16, 2
    %s23 = sadd.s32 %s16, 1
    %s24 = ssub.s32 %s16, %s23
    %p25 = scmp.eq.s32.totalorder %s24, 0
    %s27 = sadd.s32 %s26, 1
    %s28 = scalar_select %p25, %s26, %s27
    %p31 = pneg %p25
    %p32 = scmp.eq.s32.totalorder %s16, 1
    %p33 = por %p31, %p32
    %p34 = scmp.ne.s32.totalorder %s26, %s29
    %p35 = scmp.eq.s32.totalorder %s16, 0
    %p36 = por %p34, %p35
    %p37 = scmp.ne.s32.totalorder %s26, %s29
    %p38 = scmp.eq.s32.totalorder %s21, 1
    %p39 = por %p37, %p38
    %p40 = scmp.ne.s32.totalorder %s29, %s30
    %p41 = scmp.eq.s32.totalorder %s21, 0
    %p42 = por %p40, %p41
    %p43 = scmp.ne.s32.totalorder %s29, %s30
    %p44 = scmp.eq.s32.totalorder %s22, 1
    %p45 = por %p43, %p44
    %p47 = scmp.ne.s32.totalorder %s30, %s46
    %p48 = scmp.eq.s32.totalorder %s22, 0
    %p49 = por %p47, %p48
    %s51 = sadd.s32 %s50, 1
    %p54 = scmp.eq.s32.totalorder %s16, 1
    %p55 = scmp.ne.s32.totalorder %s50, %s52
    %p56 = scmp.eq.s32.totalorder %s16, 0
    %p57 = por %p55, %p56
    %p58 = scmp.ne.s32.totalorder %s50, %s52
    %p59 = scmp.eq.s32.totalorder %s21, 1
    %p60 = por %p58, %p59
    %p61 = scmp.ne.s32.totalorder %s52, %s53
    %p62 = scmp.eq.s32.totalorder %s21, 0
    %p63 = por %p61, %p62
    %p64 = scmp.ne.s32.totalorder %s52, %s53
    %p65 = scmp.eq.s32.totalorder %s22, 1
    %p66 = por %p64, %p65
    %p68 = scmp.ne.s32.totalorder %s53, %s67
    %p69 = scmp.eq.s32.totalorder %s22, 0
    %p70 = por %p68, %p69
    %s72 = sadd.s32 %s71, 1
    %p75 = scmp.eq.s32.totalorder %s16, 1
    %p76 = scmp.ne.s32.totalorder %s71, %s73
    %p77 = scmp.eq.s32.totalorder %s16, 0
    %p78 = por %p76, %p77
    %p79 = scmp.ne.s32.totalorder %s71, %s73
    %p80 = scmp.eq.s32.totalorder %s21, 1
    %p81 = por %p79, %p80
    %p82 = scmp.ne.s32.totalorder %s73, %s74
    %p83 = scmp.eq.s32.totalorder %s21, 0
    %p84 = por %p82, %p83
    %p85 = scmp.ne.s32.totalorder %s73, %s74
    %p86 = scmp.eq.s32.totalorder %s22, 1
    %p87 = por %p85, %p86
    %p89 = scmp.ne.s32.totalorder %s74, %s88
    %p90 = scmp.eq.s32.totalorder %s22, 0
    %p91 = por %p89, %p90
    %s92 = ssub.s32 %s16, %s23
    %p93 = scmp.eq.s32.totalorder %s92, 0
    %s95 = sadd.s32 %s94, 1
    %s96 = scalar_select %p93, %s94, %s95
    %p99 = pneg %p93
    %p100 = scmp.eq.s32.totalorder %s16, 1
    %p101 = por %p99, %p100
    %p102 = scmp.ne.s32.totalorder %s94, %s97
    %p103 = scmp.eq.s32.totalorder %s16, 0
    %p104 = por %p102, %p103
    %p105 = scmp.ne.s32.totalorder %s94, %s97
    %p106 = scmp.eq.s32.totalorder %s21, 1
    %p107 = por %p105, %p106
    %p108 = scmp.ne.s32.totalorder %s97, %s98
    %p109 = scmp.eq.s32.totalorder %s21, 0
    %p110 = por %p108, %p109
    %p111 = scmp.ne.s32.totalorder %s97, %s98
    %p112 = scmp.eq.s32.totalorder %s22, 1
    %p113 = por %p111, %p112
    %p115 = scmp.ne.s32.totalorder %s98, %s114
    %p116 = scmp.eq.s32.totalorder %s22, 0
    %p117 = por %p115, %p116
    %s119 = sadd.s32 %s118, 1
    %p122 = scmp.eq.s32.totalorder %s16, 1
    %p123 = scmp.ne.s32.totalorder %s118, %s120
    %p124 = scmp.eq.s32.totalorder %s16, 0
    %p125 = por %p123, %p124
    %p126 = scmp.ne.s32.totalorder %s118, %s120
    %p127 = scmp.eq.s32.totalorder %s21, 1
    %p128 = por %p126, %p127
    %p129 = scmp.ne.s32.totalorder %s120, %s121
    %p130 = scmp.eq.s32.totalorder %s21, 0
    %p131 = por %p129, %p130
    %p132 = scmp.ne.s32.totalorder %s120, %s121
    %p133 = scmp.eq.s32.totalorder %s22, 1
    %p134 = por %p132, %p133
    %p136 = scmp.ne.s32.totalorder %s121, %s135
    %p137 = scmp.eq.s32.totalorder %s22, 0
    %p138 = por %p136, %p137
    %s140 = sadd.s32 %s139, 1
    %p143 = scmp.eq.s32.totalorder %s16, 1
    %p144 = scmp.ne.s32.totalorder %s139, %s141
    %p145 = scmp.eq.s32.totalorder %s16, 0
    %p146 = por %p144, %p145
    %p147 = scmp.ne.s32.totalorder %s139, %s141
    %p148 = scmp.eq.s32.totalorder %s21, 1
    %p149 = por %p147, %p148
    %p150 = scmp.ne.s32.totalorder %s141, %s142
    %p151 = scmp.eq.s32.totalorder %s21, 0
    %p152 = por %p150, %p151
    %p153 = scmp.ne.s32.totalorder %s141, %s142
    %p154 = scmp.eq.s32.totalorder %s22, 1
    %p155 = por %p153, %p154
    %p157 = scmp.ne.s32.totalorder %s142, %s156
    %p158 = scmp.eq.s32.totalorder %s22, 0
    %p159 = por %p157, %p158
    %s161 = sadd.s32 %s160, 1
    %p164 = scmp.eq.s32.totalorder %s16, 1
    %p165 = scmp.ne.s32.totalorder %s160, %s162
    %p166 = scmp.eq.s32.totalorder %s16, 0
    %p167 = por %p165, %p166
    %p168 = scmp.ne.s32.totalorder %s160, %s162
    %p169 = scmp.eq.s32.totalorder %s21, 1
    %p170 = por %p168, %p169
    %p171 = scmp.ne.s32.totalorder %s162, %s163
    %p172 = scmp.eq.s32.totalorder %s21, 0
    %p173 = por %p171, %p172
    %p174 = scmp.ne.s32.totalorder %s162, %s163
    %p175 = scmp.eq.s32.totalorder %s22, 1
    %p176 = por %p174, %p175
    %p178 = scmp.ne.s32.totalorder %s163, %s177
    %p179 = scmp.eq.s32.totalorder %s22, 0
    %p180 = por %p178, %p179
    %s182 = sadd.s32 %s181, 1
    %p185 = scmp.eq.s32.totalorder %s16, 1
    %p186 = scmp.ne.s32.totalorder %s181, %s183
    %p187 = scmp.eq.s32.totalorder %s16, 0
    %p188 = por %p186, %p187
    %p189 = scmp.ne.s32.totalorder %s181, %s183
    %p190 = scmp.eq.s32.totalorder %s21, 1
    %p191 = por %p189, %p190
    %p192 = scmp.ne.s32.totalorder %s183, %s184
    %p193 = scmp.eq.s32.totalorder %s21, 0
    %p194 = por %p192, %p193
    %p195 = scmp.ne.s32.totalorder %s183, %s184
    %p196 = scmp.eq.s32.totalorder %s22, 1
    %p197 = por %p195, %p196
    %p199 = scmp.ne.s32.totalorder %s184, %s198
    %p200 = scmp.eq.s32.totalorder %s22, 0
    %p201 = por %p199, %p200
    %s203 = sadd.s32 %s202, 1
    %p206 = scmp.eq.s32.totalorder %s16, 1
    %p207 = scmp.ne.s32.totalorder %s202, %s204
    %p208 = scmp.eq.s32.totalorder %s16, 0
    %p209 = por %p207, %p208
    %p210 = scmp.ne.s32.totalorder %s202, %s204
    %p211 = scmp.eq.s32.totalorder %s21, 1
    %p212 = por %p210, %p211
    %p213 = scmp.ne.s32.totalorder %s204, %s205
    %p214 = scmp.eq.s32.totalorder %s21, 0
    %p215 = por %p213, %p214
    %p216 = scmp.ne.s32.totalorder %s204, %s205
    %p217 = scmp.eq.s32.totalorder %s22, 1
    %p218 = por %p216, %p217
    %p220 = scmp.ne.s32.totalorder %s205, %s219
    %p221 = scmp.eq.s32.totalorder %s22, 0
    %p222 = por %p220, %p221
    %s224 = sadd.s32 %s223, 1
    %p227 = scmp.eq.s32.totalorder %s16, 1
    %p228 = scmp.ne.s32.totalorder %s223, %s225
    %p229 = scmp.eq.s32.totalorder %s16, 0
    %p230 = por %p228, %p229
    %p231 = scmp.ne.s32.totalorder %s223, %s225
    %p232 = scmp.eq.s32.totalorder %s21, 1
    %p233 = por %p231, %p232
    %p234 = scmp.ne.s32.totalorder %s225, %s226
    %p235 = scmp.eq.s32.totalorder %s21, 0
    %p236 = por %p234, %p235
    %p237 = scmp.ne.s32.totalorder %s225, %s226
    %p238 = scmp.eq.s32.totalorder %s22, 1
    %p239 = por %p237, %p238
    %p241 = scmp.ne.s32.totalorder %s226, %s240
    %p242 = scmp.eq.s32.totalorder %s22, 0
    %p243 = por %p241, %p242
    %s244 = ssub.s32 %s16, %s23
    %p245 = scmp.eq.s32.totalorder %s244, 0
    %s247 = sadd.s32 %s246, 1
    %s248 = scalar_select %p245, %s246, %s247
    %p251 = pneg %p245
    %p252 = scmp.eq.s32.totalorder %s16, 1
    %p253 = por %p251, %p252
    %p254 = scmp.ne.s32.totalorder %s246, %s249
    %p255 = scmp.eq.s32.totalorder %s16, 0
    %p256 = por %p254, %p255
    %p257 = scmp.ne.s32.totalorder %s246, %s249
    %p258 = scmp.eq.s32.totalorder %s21, 1
    %p259 = por %p257, %p258
    %p260 = scmp.ne.s32.totalorder %s249, %s250
    %p261 = scmp.eq.s32.totalorder %s21, 0
    %p262 = por %p260, %p261
    %p263 = scmp.ne.s32.totalorder %s249, %s250
    %p264 = scmp.eq.s32.totalorder %s22, 1
    %p265 = por %p263, %p264
    %p267 = scmp.ne.s32.totalorder %s250, %s266
    %p268 = scmp.eq.s32.totalorder %s22, 0
    %p269 = por %p267, %p268
    %p270 = scmp.le.s32.totalorder 1, %s16
    %p271 = scmp.lt.s32.totalorder %s16, 3
    %p272 = pnand %p270, %p271
    %p273 = pneg %p272
    // Predicated region
    $region9: #{encode_graph.11} parent=5 // pred_check
      _
    $region10: #{encode_graph.11} parent=5 // pred_check_branch
      %275 = sbr.rel (%p272) target = $region12
    $region11: #{encode_graph.11} parent=5 // pred_region
      %s276 = ssub.s32 %s16, 1
      // Predicated region
      $region13: #{encode_graph.11} parent=11 // pred_check
        %p277 = pneg %p63
      $region14: #{encode_graph.11} parent=11 // pred_check_branch
        %279 = sbr.rel (%p277) target = $region16
      $region15: #{encode_graph.11} parent=11 // pred_region
        _
      $region16: #{encode_graph.11} parent=11 // pred_fallthru
        _
      // Predicated region
      $region17: #{encode_graph.11} parent=11 // pred_check
        %p280 = pneg %p84
      $region18: #{encode_graph.11} parent=11 // pred_check_branch
        %282 = sbr.rel (%p280) target = $region20
      $region19: #{encode_graph.11} parent=11 // pred_region
        _
      $region20: #{encode_graph.11} parent=11 // pred_fallthru
        _
      // Predicated region
      $region21: #{encode_graph.11} parent=11 // pred_check
        %p283 = pneg %p131
      $region22: #{encode_graph.11} parent=11 // pred_check_branch
        %285 = sbr.rel (%p283) target = $region24
      $region23: #{encode_graph.11} parent=11 // pred_region
        _
      $region24: #{encode_graph.11} parent=11 // pred_fallthru
        _
      // Predicated region
      $region25: #{encode_graph.11} parent=11 // pred_check
        %p286 = pneg %p152
      $region26: #{encode_graph.11} parent=11 // pred_check_branch
        %288 = sbr.rel (%p286) target = $region28
      $region27: #{encode_graph.11} parent=11 // pred_region
        _
      $region28: #{encode_graph.11} parent=11 // pred_fallthru
        _
      // Predicated region
      $region29: #{encode_graph.11} parent=11 // pred_check
        %p289 = pneg %p173
      $region30: #{encode_graph.11} parent=11 // pred_check_branch
        %291 = sbr.rel (%p289) target = $region32
      $region31: #{encode_graph.11} parent=11 // pred_region
        _
      $region32: #{encode_graph.11} parent=11 // pred_fallthru
        _
      // Predicated region
      $region33: #{encode_graph.11} parent=11 // pred_check
        %p292 = pneg %p194
      $region34: #{encode_graph.11} parent=11 // pred_check_branch
        %294 = sbr.rel (%p292) target = $region36
      $region35: #{encode_graph.11} parent=11 // pred_region
        _
      $region36: #{encode_graph.11} parent=11 // pred_fallthru
        _
      // Predicated region
      $region37: #{encode_graph.11} parent=11 // pred_check
        %p295 = pneg %p215
      $region38: #{encode_graph.11} parent=11 // pred_check_branch
        %297 = sbr.rel (%p295) target = $region40
      $region39: #{encode_graph.11} parent=11 // pred_region
        _
      $region40: #{encode_graph.11} parent=11 // pred_fallthru
        _
      // Predicated region
      $region41: #{encode_graph.11} parent=11 // pred_check
        %p298 = pneg %p236
      $region42: #{encode_graph.11} parent=11 // pred_check_branch
        %300 = sbr.rel (%p298) target = $region44
      $region43: #{encode_graph.11} parent=11 // pred_region
        _
      $region44: #{encode_graph.11} parent=11 // pred_fallthru
        _
    $region12: #{encode_graph.11} parent=5 // pred_fallthru
      _
    %p301 = scmp.lt.s32.totalorder %s16, 2
    // Predicated region
    $region45: #{encode_graph.11} parent=5 // pred_check
      %p302 = pneg %p301
    $region46: #{encode_graph.11} parent=5 // pred_check_branch
      %304 = sbr.rel (%p302) target = $region48
    $region47: #{encode_graph.11} parent=5 // pred_region
      // Predicated region
      $region49: #{encode_graph.11} parent=47 // pred_check
        %p305 = pneg %p36
      $region50: #{encode_graph.11} parent=47 // pred_check_branch
        %307 = sbr.rel (%p305) target = $region52
      $region51: #{encode_graph.11} parent=47 // pred_region
        %s308 = smul.u32 8, %s16
        %p309 = scmp.lt.s32.totalorder %s308, 15
        %s310 = scalar_select %p309, %s308, 15
        %s311 = smul.addr %s310, 4
        %s312 = scalar_lea.vmem %s0, %s311
        %s313 = smul.u32 8, %s16
      $region52: #{encode_graph.11} parent=47 // pred_fallthru
        _
      // Predicated region
      $region53: #{encode_graph.11} parent=47 // pred_check
        %p314 = pneg %p104
      $region54: #{encode_graph.11} parent=47 // pred_check_branch
        %316 = sbr.rel (%p314) target = $region56
      $region55: #{encode_graph.11} parent=47 // pred_region
        %s317 = smul.u32 8, %s16
        %p318 = scmp.lt.s32.totalorder %s317, 15
        %s319 = scalar_select %p318, %s317, 15
        %s320 = smul.addr %s319, 4
        %s321 = scalar_lea.vmem %s3, %s320
        %s322 = smul.u32 8, %s16
      $region56: #{encode_graph.11} parent=47 // pred_fallthru
        _
    $region48: #{encode_graph.11} parent=5 // pred_fallthru
      _
    %p323 = scmp.le.s32.totalorder 1, %s16
    %p324 = scmp.lt.s32.totalorder %s16, 3
    %p325 = pnand %p323, %p324
    %p326 = pneg %p325
    // Predicated region
    $region57: #{encode_graph.11} parent=5 // pred_check
      _
    $region58: #{encode_graph.11} parent=5 // pred_check_branch
      %328 = sbr.rel (%p325) target = $region60
    $region59: #{encode_graph.11} parent=5 // pred_region
      %s329 = ssub.s32 %s16, 1
      %s330 = smul.u32 8, %s21
      %p331 = scmp.lt.s32.totalorder %s330, 15
      %s332 = scalar_select %p331, %s330, 15
      %s333 = smul.addr %s332, 4
      %s334 = scalar_lea.vmem %s0, %s333
      %p335 = pneg %p42
      %p336 = pneg %p39
      %p337 = pneg %p63
      %p338 = pneg %p60
      %p339 = pneg %p84
      %p340 = pneg %p81
      %s341 = smul.u32 8, %s21
      %p342 = scmp.lt.s32.totalorder %s341, 15
      %s343 = scalar_select %p342, %s341, 15
      %s344 = smul.addr %s343, 4
      %s345 = scalar_lea.vmem %s3, %s344
      %p346 = pneg %p110
      %p347 = pneg %p107
      %p348 = pneg %p131
      %p349 = pneg %p128
      %p350 = pneg %p152
      %p351 = pneg %p149
      %p352 = pneg %p173
      %p353 = pneg %p170
      %p354 = pneg %p194
      %p355 = pneg %p191
      %p356 = pneg %p215
      %p357 = pneg %p212
      %p358 = pneg %p236
      %p359 = pneg %p233
      %p360 = pneg %p262
      %p361 = pneg %p259
      %s362 = smul.u32 8, %s21
      %p363 = scmp.lt.s32.totalorder %s362, 15
      %s364 = scalar_select %p363, %s362, 15
      %s365 = smul.addr %s364, 4
      %s366 = scalar_lea.vmem %s10, %s365
      %s367 = smul.u32 8, %s21
      %p368 = scmp.lt.s32.totalorder %s367, 15
      %s369 = scalar_select %p368, %s367, 15
      %s370 = smul.addr %s369, 4
      %s371 = scalar_lea.vmem %s0, %s370
      %s372 = smul.u32 8, %s21
      %s373 = smul.u32 8, %s21
      %p374 = scmp.lt.s32.totalorder %s373, 15
      %s375 = scalar_select %p374, %s373, 15
      %s376 = smul.addr %s375, 4
      %s377 = scalar_lea.vmem %s3, %s376
      %s378 = smul.u32 8, %s21
      %s379 = smul.u32 8, %s21
      %p380 = scmp.lt.s32.totalorder %s379, 15
      %s381 = scalar_select %p380, %s379, 15
      %s382 = smul.addr %s381, 4
      %s383 = scalar_lea.vmem %s10, %s382
      %s384 = smul.u32 8, %s21
      %v386 = vld [vmem:[%s371] sm:$0xf]
      %v387 = vld [vmem:[%s371 + $0x4] sm:$0xf]
      %v388 = vld [vmem:[%s371 + $0x8] sm:$0xf]
      %v389 = vld [vmem:[%s371 + $0xc] sm:$0xf]
      %v390 = vld [vmem:[%s371 + $0x10] sm:$0xf]
      %v391 = vld [vmem:[%s371 + $0x14] sm:$0xf]
      %v392 = vld [vmem:[%s371 + $0x18] sm:$0xf]
      %v393 = vld [vmem:[%s371 + $0x1c] sm:$0xf]
      %v394 = vld [vmem:[%s1] sm:$0xf]
      %v395 = vld [vmem:[%s1 + $0x4] sm:$0xf]
      %v396 = vld [vmem:[%s1 + $0x8] sm:$0xf]
      %v397 = vld [vmem:[%s1 + $0xc] sm:$0xf]
      %v398 = vld [vmem:[%s1 + $0x10] sm:$0xf]
      %v399 = vld [vmem:[%s1 + $0x14] sm:$0xf]
      %v400 = vld [vmem:[%s1 + $0x18] sm:$0xf]
      %v401 = vld [vmem:[%s1 + $0x1c] sm:$0xf]
      %v402 = vld [vmem:[%s1 + $0x20] sm:$0xf]
      %v403 = vld [vmem:[%s1 + $0x24] sm:$0xf]
      %v404 = vld [vmem:[%s1 + $0x28] sm:$0xf]
      %v405 = vld [vmem:[%s1 + $0x2c] sm:$0xf]
      %v406 = vld [vmem:[%s1 + $0x30] sm:$0xf]
      %v407 = vld [vmem:[%s1 + $0x34] sm:$0xf]
      %v408 = vld [vmem:[%s1 + $0x38] sm:$0xf]
      %v409 = vld [vmem:[%s1 + $0x3c] sm:$0xf]
      %v410 = vld [vmem:[%s2] sm:$0x1]
      %v412 = vlaneseq
      %v413 = vshrl.u32 %v412, 7
      %v414 = vsub.s32 0, %v413
      %v415 = vrot.slane %v410, %v414
      %v425 = vunpack.c.l.b16 %v386
      %v426 = vunpack.c.l.b16 %v387
      %v427 = vunpack.c.l.b16 %v388
      %v428 = vunpack.c.l.b16 %v389
      %v429 = vunpack.c.l.b16 %v390
      %v430 = vunpack.c.l.b16 %v391
      %v431 = vunpack.c.l.b16 %v392
      %v432 = vunpack.c.l.b16 %v393
      %v433 = vpack.c.b16 %v426, %v425
      %v434 = vpack.c.b16 %v428, %v427
      %v435 = vpack.c.b16 %v430, %v429
      %v436 = vpack.c.b16 %v432, %v431
      %v457 = vunpack.c.l.b16 %v394
      %v458 = vunpack.c.l.b16 %v395
      %v459 = vunpack.c.l.b16 %v396
      %v460 = vunpack.c.l.b16 %v397
      %v461 = vunpack.c.l.b16 %v398
      %v462 = vunpack.c.l.b16 %v399
      %v463 = vunpack.c.l.b16 %v400
      %v464 = vunpack.c.l.b16 %v401
      %v465 = vunpack.c.l.b16 %v402
      %v466 = vunpack.c.l.b16 %v403
      %v467 = vunpack.c.l.b16 %v404
      %v468 = vunpack.c.l.b16 %v405
      %v469 = vunpack.c.l.b16 %v406
      %v470 = vunpack.c.l.b16 %v407
      %v471 = vunpack.c.l.b16 %v408
      %v472 = vunpack.c.l.b16 %v409
      %v473 = vpack.c.b16 %v458, %v457
      %v474 = vpack.c.b16 %v460, %v459
      %v475 = vpack.c.b16 %v462, %v461
      %v476 = vpack.c.b16 %v464, %v463
      %v477 = vpack.c.b16 %v466, %v465
      %v478 = vpack.c.b16 %v468, %v467
      %v479 = vpack.c.b16 %v470, %v469
      %v480 = vpack.c.b16 %v472, %v471
      %489 = vmatprep.subr.bf16.mxu0 0
      %490 = vmatpush1.bf16.msra.mxu0 %v473
      %491 = vmatprep.subr.bf16.mxu0 0
      %492 = vmatpush1.bf16.msra.mxu0 %v474
      %493 = vmatprep.subr.bf16.mxu0 0
      %494 = vmatpush1.bf16.msra.mxu0 %v475
      %495 = vmatprep.subr.bf16.mxu0 0
      %496 = vmatpush1.bf16.msra.mxu0 %v476
      %497 = vmatprep.subr.bf16.mxu0 0
      %498 = vmatpush1.bf16.msra.mxu0 %v477
      %499 = vmatprep.subr.bf16.mxu0 0
      %500 = vmatpush1.bf16.msra.mxu0 %v478
      %501 = vmatprep.subr.bf16.mxu0 0
      %502 = vmatpush1.bf16.msra.mxu0 %v479
      %503 = vmatprep.subr.bf16.mxu0 0
      %504 = vmatpush1.bf16.msra.mxu0 %v480
      %505 = vmatprep.subr.bf16.mxu0 0
      %506 = vmatpush1.bf16.msra.mxu0 0
      %507 = vmatprep.subr.bf16.mxu0 0
      %508 = vmatpush1.bf16.msra.mxu0 0
      %509 = vmatprep.subr.bf16.mxu0 0
      %510 = vmatpush1.bf16.msra.mxu0 0
      %511 = vmatprep.subr.bf16.mxu0 0
      %512 = vmatpush1.bf16.msra.mxu0 0
      %513 = vmatprep.subr.bf16.mxu0 0
      %514 = vmatpush1.bf16.msra.mxu0 0
      %515 = vmatprep.subr.bf16.mxu0 0
      %516 = vmatpush1.bf16.msra.mxu0 0
      %517 = vmatprep.subr.bf16.mxu0 0
      %518 = vmatpush1.bf16.msra.mxu0 0
      %519 = vmatprep.subr.bf16.mxu0 0
      %520 = vmatpush1.bf16.msra.mxu0 0
      %521 = vmatprep.mubr.bf16.mxu0 0
      %522 = vmatmul.mubr.bf16.gmra.mrb[0].mxu0 %v433
      %v523 = vpop.f32.mrb[0].mxu0
      %v524 = vadd.f32 %v415, %v523
      %v525 = vpop.f32.mrb[0].mxu0
      %v526 = vpop.f32.mrb[0].mxu0
      %v527 = vadd.f32 %v415, %v526
      %v528 = vpop.f32.mrb[0].mxu0
      %529 = vmatprep.mubr.bf16.mxu0 0
      %530 = vmatmul.mubr.bf16.gmra.mrb[0].mxu0 %v434
      %v531 = vpop.f32.mrb[0].mxu0
      %v532 = vadd.f32 %v415, %v531
      %v533 = vpop.f32.mrb[0].mxu0
      %v534 = vpop.f32.mrb[0].mxu0
      %v535 = vadd.f32 %v415, %v534
      %v536 = vpop.f32.mrb[0].mxu0
      %537 = vmatprep.mubr.bf16.mxu0 0
      %538 = vmatmul.mubr.bf16.gmra.mrb[0].mxu0 %v435
      %v539 = vpop.f32.mrb[0].mxu0
      %v540 = vadd.f32 %v415, %v539
      %v541 = vpop.f32.mrb[0].mxu0
      %v542 = vpop.f32.mrb[0].mxu0
      %v543 = vadd.f32 %v415, %v542
      %v544 = vpop.f32.mrb[0].mxu0
      %545 = vmatprep.mubr.bf16.mxu0 0
      %546 = vmatmul.mubr.bf16.gmra.mrb[0].mxu0 %v436
      %v547 = vpop.f32.mrb[0].mxu0
      %v548 = vadd.f32 %v415, %v547
      %v549 = vpop.f32.mrb[0].mxu0
      %v550 = vpop.f32.mrb[0].mxu0
      %v551 = vadd.f32 %v415, %v550
      %v552 = vpop.f32.mrb[0].mxu0
      %553 = vdwg.mxu0
      %v554 = vld [vmem:[%s377] sm:$0xf]
      %v555 = vld [vmem:[%s377 + $0x4] sm:$0xf]
      %v556 = vld [vmem:[%s377 + $0x8] sm:$0xf]
      %v557 = vld [vmem:[%s377 + $0xc] sm:$0xf]
      %v558 = vld [vmem:[%s377 + $0x10] sm:$0xf]
      %v559 = vld [vmem:[%s377 + $0x14] sm:$0xf]
      %v560 = vld [vmem:[%s377 + $0x18] sm:$0xf]
      %v561 = vld [vmem:[%s377 + $0x1c] sm:$0xf]
      %v562 = vunpack.c.l.bf16 %v554
      %v563 = vunpack.c.l.bf16 %v555
      %v564 = vunpack.c.l.bf16 %v556
      %v565 = vunpack.c.l.bf16 %v557
      %v566 = vunpack.c.l.bf16 %v558
      %v567 = vunpack.c.l.bf16 %v559
      %v568 = vunpack.c.l.bf16 %v560
      %v569 = vunpack.c.l.bf16 %v561
      %v570 = vadd.f32 %v524, %v562
      %v571 = vadd.f32 %v527, %v563
      %v572 = vadd.f32 %v532, %v564
      %v573 = vadd.f32 %v535, %v565
      %v574 = vadd.f32 %v540, %v566
      %v575 = vadd.f32 %v543, %v567
      %v576 = vadd.f32 %v548, %v568
      %v577 = vadd.f32 %v551, %v569
      %v578 = vld [vmem:[%s4] sm:$0x1]
      %v579 = vld [vmem:[%s5] sm:$0x1]
      %580 = vadd.xlane.f32.xlu0 %v570
      %v581 = vpop.xlane.xlu0 %580
      %582 = vadd.xlane.f32.xlu0 %v571
      %v583 = vpop.xlane.xlu0 %582
      %584 = vadd.xlane.f32.xlu0 %v572
      %v585 = vpop.xlane.xlu0 %584
      %586 = vadd.xlane.f32.xlu0 %v573
      %v587 = vpop.xlane.xlu0 %586
      %588 = vadd.xlane.f32.xlu0 %v574
      %v589 = vpop.xlane.xlu0 %588
      %590 = vadd.xlane.f32.xlu0 %v575
      %v591 = vpop.xlane.xlu0 %590
      %592 = vadd.xlane.f32.xlu0 %v576
      %v593 = vpop.xlane.xlu0 %592
      %594 = vadd.xlane.f32.xlu0 %v577
      %v595 = vpop.xlane.xlu0 %594
      %v596 = vrcp.pop 128.0
      %v597 = vmul.f32 %v581, %v596
      %v598 = vmul.f32 %v583, %v596
      %v599 = vmul.f32 %v585, %v596
      %v600 = vmul.f32 %v587, %v596
      %v601 = vmul.f32 %v589, %v596
      %v602 = vmul.f32 %v591, %v596
      %v603 = vmul.f32 %v593, %v596
      %v604 = vmul.f32 %v595, %v596
      %v605 = vsub.f32 %v570, %v597
      %v606 = vsub.f32 %v571, %v598
      %v607 = vsub.f32 %v572, %v599
      %v608 = vsub.f32 %v573, %v600
      %v609 = vsub.f32 %v574, %v601
      %v610 = vsub.f32 %v575, %v602
      %v611 = vsub.f32 %v576, %v603
      %v612 = vsub.f32 %v577, %v604
      %v613 = vmul.f32 %v605, %v605
      %v614 = vmul.f32 %v606, %v606
      %v615 = vmul.f32 %v607, %v607
      %v616 = vmul.f32 %v608, %v608
      %v617 = vmul.f32 %v609, %v609
      %v618 = vmul.f32 %v610, %v610
      %v619 = vmul.f32 %v611, %v611
      %v620 = vmul.f32 %v612, %v612
      %621 = vadd.xlane.f32.xlu0 %v613
      %v622 = vpop.xlane.xlu0 %621
      %623 = vadd.xlane.f32.xlu0 %v614
      %v624 = vpop.xlane.xlu0 %623
      %625 = vadd.xlane.f32.xlu0 %v615
      %v626 = vpop.xlane.xlu0 %625
      %627 = vadd.xlane.f32.xlu0 %v616
      %v628 = vpop.xlane.xlu0 %627
      %629 = vadd.xlane.f32.xlu0 %v617
      %v630 = vpop.xlane.xlu0 %629
      %631 = vadd.xlane.f32.xlu0 %v618
      %v632 = vpop.xlane.xlu0 %631
      %633 = vadd.xlane.f32.xlu0 %v619
      %v634 = vpop.xlane.xlu0 %633
      %635 = vadd.xlane.f32.xlu0 %v620
      %v636 = vpop.xlane.xlu0 %635
      %v637 = vmul.f32 %v622, %v596
      %v638 = vmul.f32 %v624, %v596
      %v639 = vmul.f32 %v626, %v596
      %v640 = vmul.f32 %v628, %v596
      %v641 = vmul.f32 %v630, %v596
      %v642 = vmul.f32 %v632, %v596
      %v643 = vmul.f32 %v634, %v596
      %v644 = vmul.f32 %v636, %v596
      %v645 = vadd.f32 %v637, 1e-05
      %v646 = vadd.f32 %v638, 1e-05
      %v647 = vadd.f32 %v639, 1e-05
      %v648 = vadd.f32 %v640, 1e-05
      %v649 = vadd.f32 %v641, 1e-05
      %v650 = vadd.f32 %v642, 1e-05
      %v651 = vadd.f32 %v643, 1e-05
      %v652 = vadd.f32 %v644, 1e-05
      %v653 = vrsqrt.pop %v645
      %v654 = vrsqrt.pop %v646
      %v655 = vrsqrt.pop %v647
      %v656 = vrsqrt.pop %v648
      %v657 = vrsqrt.pop %v649
      %v658 = vrsqrt.pop %v650
      %v659 = vrsqrt.pop %v651
      %v660 = vrsqrt.pop %v652
      %v661 = vmul.f32 %v605, %v653
      %v662 = vmul.f32 %v606, %v654
      %v663 = vmul.f32 %v607, %v655
      %v664 = vmul.f32 %v608, %v656
      %v665 = vmul.f32 %v609, %v657
      %v666 = vmul.f32 %v610, %v658
      %v667 = vmul.f32 %v611, %v659
      %v668 = vmul.f32 %v612, %v660
      %v670 = vlaneseq
      %v671 = vshrl.u32 %v670, 7
      %v672 = vsub.s32 0, %v671
      %v673 = vrot.slane %v578, %v672
      %v675 = vmul.f32 %v661, %v673
      %v676 = vmul.f32 %v662, %v673
      %v677 = vmul.f32 %v663, %v673
      %v678 = vmul.f32 %v664, %v673
      %v679 = vmul.f32 %v665, %v673
      %v680 = vmul.f32 %v666, %v673
      %v681 = vmul.f32 %v667, %v673
      %v682 = vmul.f32 %v668, %v673
      %v684 = vlaneseq
      %v685 = vshrl.u32 %v684, 7
      %v686 = vsub.s32 0, %v685
      %v687 = vrot.slane %v579, %v686
      %v689 = vadd.f32 %v675, %v687
      %v690 = vadd.f32 %v676, %v687
      %v691 = vadd.f32 %v677, %v687
      %v692 = vadd.f32 %v678, %v687
      %v693 = vadd.f32 %v679, %v687
      %v694 = vadd.f32 %v680, %v687
      %v695 = vadd.f32 %v681, %v687
      %v696 = vadd.f32 %v682, %v687
      %v697 = vpack.c.bf16 %v690, %v689
      %v698 = vpack.c.bf16 %v692, %v691
      %v699 = vpack.c.bf16 %v694, %v693
      %v700 = vpack.c.bf16 %v696, %v695
      %v701 = vld [vmem:[%s6] sm:$0xff]
      %v702 = vld [vmem:[%s6 + $0x8] sm:$0xff]
      %v703 = vld [vmem:[%s6 + $0x10] sm:$0xff]
      %v704 = vld [vmem:[%s6 + $0x18] sm:$0xff]
      %v705 = vld [vmem:[%s6 + $0x20] sm:$0xff]
      %v706 = vld [vmem:[%s6 + $0x28] sm:$0xff]
      %v707 = vld [vmem:[%s6 + $0x30] sm:$0xff]
      %v708 = vld [vmem:[%s6 + $0x38] sm:$0xff]
      %v709 = vld [vmem:[%s6 + $0x40] sm:$0xff]
      %v710 = vld [vmem:[%s6 + $0x48] sm:$0xff]
      %v711 = vld [vmem:[%s6 + $0x50] sm:$0xff]
      %v712 = vld [vmem:[%s6 + $0x58] sm:$0xff]
      %v713 = vld [vmem:[%s6 + $0x60] sm:$0xff]
      %v714 = vld [vmem:[%s6 + $0x68] sm:$0xff]
      %v715 = vld [vmem:[%s6 + $0x70] sm:$0xff]
      %v716 = vld [vmem:[%s6 + $0x78] sm:$0xff]
      %v717 = vld [vmem:[%s6 + $0x80] sm:$0xff]
      %v718 = vld [vmem:[%s6 + $0x88] sm:$0xff]
      %v719 = vld [vmem:[%s6 + $0x90] sm:$0xff]
      %v720 = vld [vmem:[%s6 + $0x98] sm:$0xff]
      %v721 = vld [vmem:[%s6 + $0xa0] sm:$0xff]
      %v722 = vld [vmem:[%s6 + $0xa8] sm:$0xff]
      %v723 = vld [vmem:[%s6 + $0xb0] sm:$0xff]
      %v724 = vld [vmem:[%s6 + $0xb8] sm:$0xff]
      %v725 = vld [vmem:[%s6 + $0xc0] sm:$0xff]
      %v726 = vld [vmem:[%s6 + $0xc8] sm:$0xff]
      %v727 = vld [vmem:[%s6 + $0xd0] sm:$0xff]
      %v728 = vld [vmem:[%s6 + $0xd8] sm:$0xff]
      %v729 = vld [vmem:[%s6 + $0xe0] sm:$0xff]
      %v730 = vld [vmem:[%s6 + $0xe8] sm:$0xff]
      %v731 = vld [vmem:[%s6 + $0xf0] sm:$0xff]
      %v732 = vld [vmem:[%s6 + $0xf8] sm:$0xff]
      %v733 = vld [vmem:[%s7] sm:$0xf]
      %v735 = vlaneseq
      %v736 = vshrl.u32 %v735, 7
      %v737 = vsub.s32 0, %v736
      %v738 = vrot.slane %v733, %v737
      %v739 = vlaneseq
      %v740 = vshrl.u32 %v739, 7
      %v741 = vsub.s32 1, %v740
      %v742 = vrot.slane %v733, %v741
      %v743 = vlaneseq
      %v744 = vshrl.u32 %v743, 7
      %v745 = vsub.s32 2, %v744
      %v746 = vrot.slane %v733, %v745
      %v747 = vlaneseq
      %v748 = vshrl.u32 %v747, 7
      %v749 = vsub.s32 3, %v748
      %v750 = vrot.slane %v733, %v749
      %v787 = vunpack.c.l.b16 %v701
      %v788 = vunpack.c.h.b16 %v701
      %v789 = vunpack.c.l.b16 %v702
      %v790 = vunpack.c.h.b16 %v702
      %v791 = vunpack.c.l.b16 %v703
      %v792 = vunpack.c.h.b16 %v703
      %v793 = vunpack.c.l.b16 %v704
      %v794 = vunpack.c.h.b16 %v704
      %v795 = vunpack.c.l.b16 %v705
      %v796 = vunpack.c.h.b16 %v705
      %v797 = vunpack.c.l.b16 %v706
      %v798 = vunpack.c.h.b16 %v706
      %v799 = vunpack.c.l.b16 %v707
      %v800 = vunpack.c.h.b16 %v707
      %v801 = vunpack.c.l.b16 %v708
      %v802 = vunpack.c.h.b16 %v708
      %v803 = vunpack.c.l.b16 %v709
      %v804 = vunpack.c.h.b16 %v709
      %v805 = vunpack.c.l.b16 %v710
      %v806 = vunpack.c.h.b16 %v710
      %v807 = vunpack.c.l.b16 %v711
      %v808 = vunpack.c.h.b16 %v711
      %v809 = vunpack.c.l.b16 %v712
      %v810 = vunpack.c.h.b16 %v712
      %v811 = vunpack.c.l.b16 %v713
      %v812 = vunpack.c.h.b16 %v713
      %v813 = vunpack.c.l.b16 %v714
      %v814 = vunpack.c.h.b16 %v714
      %v815 = vunpack.c.l.b16 %v715
      %v816 = vunpack.c.h.b16 %v715
      %v817 = vunpack.c.l.b16 %v716
      %v818 = vunpack.c.h.b16 %v716
      %v819 = vunpack.c.l.b16 %v717
      %v820 = vunpack.c.h.b16 %v717
      %v821 = vunpack.c.l.b16 %v718
      %v822 = vunpack.c.h.b16 %v718
      %v823 = vunpack.c.l.b16 %v719
      %v824 = vunpack.c.h.b16 %v719
      %v825 = vunpack.c.l.b16 %v720
      %v826 = vunpack.c.h.b16 %v720
      %v827 = vunpack.c.l.b16 %v721
      %v828 = vunpack.c.h.b16 %v721
      %v829 = vunpack.c.l.b16 %v722
      %v830 = vunpack.c.h.b16 %v722
      %v831 = vunpack.c.l.b16 %v723
      %v832 = vunpack.c.h.b16 %v723
      %v833 = vunpack.c.l.b16 %v724
      %v834 = vunpack.c.h.b16 %v724
      %v835 = vunpack.c.l.b16 %v725
      %v836 = vunpack.c.h.b16 %v725
      %v837 = vunpack.c.l.b16 %v726
      %v838 = vunpack.c.h.b16 %v726
      %v839 = vunpack.c.l.b16 %v727
      %v840 = vunpack.c.h.b16 %v727
      %v841 = vunpack.c.l.b16 %v728
      %v842 = vunpack.c.h.b16 %v728
      %v843 = vunpack.c.l.b16 %v729
      %v844 = vunpack.c.h.b16 %v729
      %v845 = vunpack.c.l.b16 %v730
      %v846 = vunpack.c.h.b16 %v730
      %v847 = vunpack.c.l.b16 %v731
      %v848 = vunpack.c.h.b16 %v731
      %v849 = vunpack.c.l.b16 %v732
      %v850 = vunpack.c.h.b16 %v732
      %v851 = vpack.c.b16 %v791, %v787
      %v852 = vpack.c.b16 %v792, %v788
      %v853 = vpack.c.b16 %v793, %v789
      %v854 = vpack.c.b16 %v794, %v790
      %v855 = vpack.c.b16 %v799, %v795
      %v856 = vpack.c.b16 %v800, %v796
      %v857 = vpack.c.b16 %v801, %v797
      %v858 = vpack.c.b16 %v802, %v798
      %v859 = vpack.c.b16 %v807, %v803
      %v860 = vpack.c.b16 %v808, %v804
      %v861 = vpack.c.b16 %v809, %v805
      %v862 = vpack.c.b16 %v810, %v806
      %v863 = vpack.c.b16 %v815, %v811
      %v864 = vpack.c.b16 %v816, %v812
      %v865 = vpack.c.b16 %v817, %v813
      %v866 = vpack.c.b16 %v818, %v814
      %v867 = vpack.c.b16 %v823, %v819
      %v868 = vpack.c.b16 %v824, %v820
      %v869 = vpack.c.b16 %v825, %v821
      %v870 = vpack.c.b16 %v826, %v822
      %v871 = vpack.c.b16 %v831, %v827
      %v872 = vpack.c.b16 %v832, %v828
      %v873 = vpack.c.b16 %v833, %v829
      %v874 = vpack.c.b16 %v834, %v830
      %v875 = vpack.c.b16 %v839, %v835
      %v876 = vpack.c.b16 %v840, %v836
      %v877 = vpack.c.b16 %v841, %v837
      %v878 = vpack.c.b16 %v842, %v838
      %v879 = vpack.c.b16 %v847, %v843
      %v880 = vpack.c.b16 %v848, %v844
      %v881 = vpack.c.b16 %v849, %v845
      %v882 = vpack.c.b16 %v850, %v846
      %915 = vmatprep.subr.bf16.mxu0 %v852
      %916 = vmatpush1.bf16.msra.mxu0 %v851
      %917 = vmatprep.subr.bf16.mxu0 %v856
      %918 = vmatpush1.bf16.msra.mxu0 %v855
      %919 = vmatprep.subr.bf16.mxu0 %v860
      %920 = vmatpush1.bf16.msra.mxu0 %v859
      %921 = vmatprep.subr.bf16.mxu0 %v864
      %922 = vmatpush1.bf16.msra.mxu0 %v863
      %923 = vmatprep.subr.bf16.mxu0 %v868
      %924 = vmatpush1.bf16.msra.mxu0 %v867
      %925 = vmatprep.subr.bf16.mxu0 %v872
      %926 = vmatpush1.bf16.msra.mxu0 %v871
      %927 = vmatprep.subr.bf16.mxu0 %v876
      %928 = vmatpush1.bf16.msra.mxu0 %v875
      %929 = vmatprep.subr.bf16.mxu0 %v880
      %930 = vmatpush1.bf16.msra.mxu0 %v879
      %931 = vmatprep.subr.bf16.mxu0 0
      %932 = vmatpush1.bf16.msra.mxu0 0
      %933 = vmatprep.subr.bf16.mxu0 0
      %934 = vmatpush1.bf16.msra.mxu0 0
      %935 = vmatprep.subr.bf16.mxu0 0
      %936 = vmatpush1.bf16.msra.mxu0 0
      %937 = vmatprep.subr.bf16.mxu0 0
      %938 = vmatpush1.bf16.msra.mxu0 0
      %939 = vmatprep.subr.bf16.mxu0 0
      %940 = vmatpush1.bf16.msra.mxu0 0
      %941 = vmatprep.subr.bf16.mxu0 0
      %942 = vmatpush1.bf16.msra.mxu0 0
      %943 = vmatprep.subr.bf16.mxu0 0
      %944 = vmatpush1.bf16.msra.mxu0 0
      %945 = vmatprep.subr.bf16.mxu0 0
      %946 = vmatpush1.bf16.msra.mxu0 0
      %947 = vmatprep.mubr.bf16.mxu0 0
      %948 = vmatmul.mubr.bf16.gmra.mrb[0].mxu0 %v697
      %v949 = vpop.f32.mrb[0].mxu0
      %v950 = vadd.f32 %v738, %v949
      %v951 = vpop.f32.mrb[0].mxu0
      %v952 = vadd.f32 %v742, %v951
      %v953 = vpop.f32.mrb[0].mxu0
      %v954 = vadd.f32 %v738, %v953
      %v955 = vpop.f32.mrb[0].mxu0
      %v956 = vadd.f32 %v742, %v955
      %957 = vmatprep.mubr.bf16.mxu0 0
      %958 = vmatmul.mubr.bf16.gmra.mrb[0].mxu0 %v698
      %v959 = vpop.f32.mrb[0].mxu0
      %v960 = vadd.f32 %v738, %v959
      %v961 = vpop.f32.mrb[0].mxu0
      %v962 = vadd.f32 %v742, %v961
      %v963 = vpop.f32.mrb[0].mxu0
      %v964 = vadd.f32 %v738, %v963
      %v965 = vpop.f32.mrb[0].mxu0
      %v966 = vadd.f32 %v742, %v965
      %967 = vmatprep.mubr.bf16.mxu0 0
      %968 = vmatmul.mubr.bf16.gmra.mrb[0].mxu0 %v699
      %v969 = vpop.f32.mrb[0].mxu0
      %v970 = vadd.f32 %v738, %v969
      %v971 = vpop.f32.mrb[0].mxu0
      %v972 = vadd.f32 %v742, %v971
      %v973 = vpop.f32.mrb[0].mxu0
      %v974 = vadd.f32 %v738, %v973
      %v975 = vpop.f32.mrb[0].mxu0
      %v976 = vadd.f32 %v742, %v975
      %977 = vmatprep.mubr.bf16.mxu0 0
      %978 = vmatmul.mubr.bf16.gmra.mrb[0].mxu0 %v700
      %v979 = vpop.f32.mrb[0].mxu0
      %v980 = vadd.f32 %v738, %v979
      %v981 = vpop.f32.mrb[0].mxu0
      %v982 = vadd.f32 %v742, %v981
      %v983 = vpop.f32.mrb[0].mxu0
      %v984 = vadd.f32 %v738, %v983
      %v985 = vpop.f32.mrb[0].mxu0
      %v986 = vadd.f32 %v742, %v985
      %987 = vdwg.mxu0
      %988 = vmatprep.subr.bf16.mxu0 %v854
      %989 = vmatpush1.bf16.msra.mxu0 %v853
      %990 = vmatprep.subr.bf16.mxu0 %v858
      %991 = vmatpush1.bf16.msra.mxu0 %v857
      %992 = vmatprep.subr.bf16.mxu0 %v862
      %993 = vmatpush1.bf16.msra.mxu0 %v861
      %994 = vmatprep.subr.bf16.mxu0 %v866
      %995 = vmatpush1.bf16.msra.mxu0 %v865
      %996 = vmatprep.subr.bf16.mxu0 %v870
      %997 = vmatpush1.bf16.msra.mxu0 %v869
      %998 = vmatprep.subr.bf16.mxu0 %v874
      %999 = vmatpush1.bf16.msra.mxu0 %v873
      %1000 = vmatprep.subr.bf16.mxu0 %v878
      %1001 = vmatpush1.bf16.msra.mxu0 %v877
      %1002 = vmatprep.subr.bf16.mxu0 %v882
      %1003 = vmatpush1.bf16.msra.mxu0 %v881
      %1004 = vmatprep.subr.bf16.mxu0 0
      %1005 = vmatpush1.bf16.msra.mxu0 0
      %1006 = vmatprep.subr.bf16.mxu0 0
      %1007 = vmatpush1.bf16.msra.mxu0 0
      %1008 = vmatprep.subr.bf16.mxu0 0
      %1009 = vmatpush1.bf16.msra.mxu0 0
      %1010 = vmatprep.subr.bf16.mxu0 0
      %1011 = vmatpush1.bf16.msra.mxu0 0
      %1012 = vmatprep.subr.bf16.mxu0 0
      %1013 = vmatpush1.bf16.msra.mxu0 0
      %1014 = vmatprep.subr.bf16.mxu0 0
      %1015 = vmatpush1.bf16.msra.mxu0 0
      %1016 = vmatprep.subr.bf16.mxu0 0
      %1017 = vmatpush1.bf16.msra.mxu0 0
      %1018 = vmatprep.subr.bf16.mxu0 0
      %1019 = vmatpush1.bf16.msra.mxu0 0
      %1020 = vmatprep.mubr.bf16.mxu0 0
      %1021 = vmatmul.mubr.bf16.gmra.mrb[0].mxu0 %v697
      %v1022 = vpop.f32.mrb[0].mxu0
      %v1023 = vadd.f32 %v746, %v1022
      %v1024 = vpop.f32.mrb[0].mxu0
      %v1025 = vadd.f32 %v750, %v1024
      %v1026 = vpop.f32.mrb[0].mxu0
      %v1027 = vadd.f32 %v746, %v1026
      %v1028 = vpop.f32.mrb[0].mxu0
      %v1029 = vadd.f32 %v750, %v1028
      %1030 = vmatprep.mubr.bf16.mxu0 0
      %1031 = vmatmul.mubr.bf16.gmra.mrb[0].mxu0 %v698
      %v1032 = vpop.f32.mrb[0].mxu0
      %v1033 = vadd.f32 %v746, %v1032
      %v1034 = vpop.f32.mrb[0].mxu0
      %v1035 = vadd.f32 %v750, %v1034
      %v1036 = vpop.f32.mrb[0].mxu0
      %v1037 = vadd.f32 %v746, %v1036
      %v1038 = vpop.f32.mrb[0].mxu0
      %v1039 = vadd.f32 %v750, %v1038
      %1040 = vmatprep.mubr.bf16.mxu0 0
      %1041 = vmatmul.mubr.bf16.gmra.mrb[0].mxu0 %v699
      %v1042 = vpop.f32.mrb[0].mxu0
      %v1043 = vadd.f32 %v746, %v1042
      %v1044 = vpop.f32.mrb[0].mxu0
      %v1045 = vadd.f32 %v750, %v1044
      %v1046 = vpop.f32.mrb[0].mxu0
      %v1047 = vadd.f32 %v746, %v1046
      %v1048 = vpop.f32.mrb[0].mxu0
      %v1049 = vadd.f32 %v750, %v1048
      %1050 = vmatprep.mubr.bf16.mxu0 0
      %1051 = vmatmul.mubr.bf16.gmra.mrb[0].mxu0 %v700
      %v1052 = vpop.f32.mrb[0].mxu0
      %v1053 = vadd.f32 %v746, %v1052
      %v1054 = vpop.f32.mrb[0].mxu0
      %v1055 = vadd.f32 %v750, %v1054
      %v1056 = vpop.f32.mrb[0].mxu0
      %v1057 = vadd.f32 %v746, %v1056
      %v1058 = vpop.f32.mrb[0].mxu0
      %v1059 = vadd.f32 %v750, %v1058
      %1060 = vdwg.mxu0
      %v1061 = vmul.f32 %v950, %v950
      %v1062 = vmul.f32 %v952, %v952
      %v1063 = vmul.f32 %v1023, %v1023
      %v1064 = vmul.f32 %v1025, %v1025
      %v1065 = vmul.f32 %v954, %v954
      %v1066 = vmul.f32 %v956, %v956
      %v1067 = vmul.f32 %v1027, %v1027
      %v1068 = vmul.f32 %v1029, %v1029
      %v1069 = vmul.f32 %v960, %v960
      %v1070 = vmul.f32 %v962, %v962
      %v1071 = vmul.f32 %v1033, %v1033
      %v1072 = vmul.f32 %v1035, %v1035
      %v1073 = vmul.f32 %v964, %v964
      %v1074 = vmul.f32 %v966, %v966
      %v1075 = vmul.f32 %v1037, %v1037
      %v1076 = vmul.f32 %v1039, %v1039
      %v1077 = vmul.f32 %v970, %v970
      %v1078 = vmul.f32 %v972, %v972
      %v1079 = vmul.f32 %v1043, %v1043
      %v1080 = vmul.f32 %v1045, %v1045
      %v1081 = vmul.f32 %v974, %v974
      %v1082 = vmul.f32 %v976, %v976
      %v1083 = vmul.f32 %v1047, %v1047
      %v1084 = vmul.f32 %v1049, %v1049
      %v1085 = vmul.f32 %v980, %v980
      %v1086 = vmul.f32 %v982, %v982
      %v1087 = vmul.f32 %v1053, %v1053
      %v1088 = vmul.f32 %v1055, %v1055
      %v1089 = vmul.f32 %v984, %v984
      %v1090 = vmul.f32 %v986, %v986
      %v1091 = vmul.f32 %v1057, %v1057
      %v1092 = vmul.f32 %v1059, %v1059
      %v1093 = vmul.f32 %v950, %v1061
      %v1094 = vmul.f32 %v952, %v1062
      %v1095 = vmul.f32 %v1023, %v1063
      %v1096 = vmul.f32 %v1025, %v1064
      %v1097 = vmul.f32 %v954, %v1065
      %v1098 = vmul.f32 %v956, %v1066
      %v1099 = vmul.f32 %v1027, %v1067
      %v1100 = vmul.f32 %v1029, %v1068
      %v1101 = vmul.f32 %v960, %v1069
      %v1102 = vmul.f32 %v962, %v1070
      %v1103 = vmul.f32 %v1033, %v1071
      %v1104 = vmul.f32 %v1035, %v1072
      %v1105 = vmul.f32 %v964, %v1073
      %v1106 = vmul.f32 %v966, %v1074
      %v1107 = vmul.f32 %v1037, %v1075
      %v1108 = vmul.f32 %v1039, %v1076
      %v1109 = vmul.f32 %v970, %v1077
      %v1110 = vmul.f32 %v972, %v1078
      %v1111 = vmul.f32 %v1043, %v1079
      %v1112 = vmul.f32 %v1045, %v1080
      %v1113 = vmul.f32 %v974, %v1081
      %v1114 = vmul.f32 %v976, %v1082
      %v1115 = vmul.f32 %v1047, %v1083
      %v1116 = vmul.f32 %v1049, %v1084
      %v1117 = vmul.f32 %v980, %v1085
      %v1118 = vmul.f32 %v982, %v1086
      %v1119 = vmul.f32 %v1053, %v1087
      %v1120 = vmul.f32 %v1055, %v1088
      %v1121 = vmul.f32 %v984, %v1089
      %v1122 = vmul.f32 %v986, %v1090
      %v1123 = vmul.f32 %v1057, %v1091
      %v1124 = vmul.f32 %v1059, %v1092
      %v1125 = vmul.f32 %v1093, 0.044715
      %v1126 = vmul.f32 %v1094, 0.044715
      %v1127 = vmul.f32 %v1095, 0.044715
      %v1128 = vmul.f32 %v1096, 0.044715
      %v1129 = vmul.f32 %v1097, 0.044715
      %v1130 = vmul.f32 %v1098, 0.044715
      %v1131 = vmul.f32 %v1099, 0.044715
      %v1132 = vmul.f32 %v1100, 0.044715
      %v1133 = vmul.f32 %v1101, 0.044715
      %v1134 = vmul.f32 %v1102, 0.044715
      %v1135 = vmul.f32 %v1103, 0.044715
      %v1136 = vmul.f32 %v1104, 0.044715
      %v1137 = vmul.f32 %v1105, 0.044715
      %v1138 = vmul.f32 %v1106, 0.044715
      %v1139 = vmul.f32 %v1107, 0.044715
      %v1140 = vmul.f32 %v1108, 0.044715
      %v1141 = vmul.f32 %v1109, 0.044715
      %v1142 = vmul.f32 %v1110, 0.044715
      %v1143 = vmul.f32 %v1111, 0.044715
      %v1144 = vmul.f32 %v1112, 0.044715
      %v1145 = vmul.f32 %v1113, 0.044715
      %v1146 = vmul.f32 %v1114, 0.044715
      %v1147 = vmul.f32 %v1115, 0.044715
      %v1148 = vmul.f32 %v1116, 0.044715
      %v1149 = vmul.f32 %v1117, 0.044715
      %v1150 = vmul.f32 %v1118, 0.044715
      %v1151 = vmul.f32 %v1119, 0.044715
      %v1152 = vmul.f32 %v1120, 0.044715
      %v1153 = vmul.f32 %v1121, 0.044715
      %v1154 = vmul.f32 %v1122, 0.044715
      %v1155 = vmul.f32 %v1123, 0.044715
      %v1156 = vmul.f32 %v1124, 0.044715
      %v1157 = vadd.f32 %v950, %v1125
      %v1158 = vadd.f32 %v952, %v1126
      %v1159 = vadd.f32 %v1023, %v1127
      %v1160 = vadd.f32 %v1025, %v1128
      %v1161 = vadd.f32 %v954, %v1129
      %v1162 = vadd.f32 %v956, %v1130
      %v1163 = vadd.f32 %v1027, %v1131
      %v1164 = vadd.f32 %v1029, %v1132
      %v1165 = vadd.f32 %v960, %v1133
      %v1166 = vadd.f32 %v962, %v1134
      %v1167 = vadd.f32 %v1033, %v1135
      %v1168 = vadd.f32 %v1035, %v1136
      %v1169 = vadd.f32 %v964, %v1137
      %v1170 = vadd.f32 %v966, %v1138
      %v1171 = vadd.f32 %v1037, %v1139
      %v1172 = vadd.f32 %v1039, %v1140
      %v1173 = vadd.f32 %v970, %v1141
      %v1174 = vadd.f32 %v972, %v1142
      %v1175 = vadd.f32 %v1043, %v1143
      %v1176 = vadd.f32 %v1045, %v1144
      %v1177 = vadd.f32 %v974, %v1145
      %v1178 = vadd.f32 %v976, %v1146
      %v1179 = vadd.f32 %v1047, %v1147
      %v1180 = vadd.f32 %v1049, %v1148
      %v1181 = vadd.f32 %v980, %v1149
      %v1182 = vadd.f32 %v982, %v1150
      %v1183 = vadd.f32 %v1053, %v1151
      %v1184 = vadd.f32 %v1055, %v1152
      %v1185 = vadd.f32 %v984, %v1153
      %v1186 = vadd.f32 %v986, %v1154
      %v1187 = vadd.f32 %v1057, %v1155
      %v1188 = vadd.f32 %v1059, %v1156
      %v1189 = vmul.f32 %v1157, 0.7978846
      %v1190 = vmul.f32 %v1158, 0.7978846
      %v1191 = vmul.f32 %v1159, 0.7978846
      %v1192 = vmul.f32 %v1160, 0.7978846
      %v1193 = vmul.f32 %v1161, 0.7978846
      %v1194 = vmul.f32 %v1162, 0.7978846
      %v1195 = vmul.f32 %v1163, 0.7978846
      %v1196 = vmul.f32 %v1164, 0.7978846
      %v1197 = vmul.f32 %v1165, 0.7978846
      %v1198 = vmul.f32 %v1166, 0.7978846
      %v1199 = vmul.f32 %v1167, 0.7978846
      %v1200 = vmul.f32 %v1168, 0.7978846
      %v1201 = vmul.f32 %v1169, 0.7978846
      %v1202 = vmul.f32 %v1170, 0.7978846
      %v1203 = vmul.f32 %v1171, 0.7978846
      %v1204 = vmul.f32 %v1172, 0.7978846
      %v1205 = vmul.f32 %v1173, 0.7978846
      %v1206 = vmul.f32 %v1174, 0.7978846
      %v1207 = vmul.f32 %v1175, 0.7978846
      %v1208 = vmul.f32 %v1176, 0.7978846
      %v1209 = vmul.f32 %v1177, 0.7978846
      %v1210 = vmul.f32 %v1178, 0.7978846
      %v1211 = vmul.f32 %v1179, 0.7978846
      %v1212 = vmul.f32 %v1180, 0.7978846
      %v1213 = vmul.f32 %v1181, 0.7978846
      %v1214 = vmul.f32 %v1182, 0.7978846
      %v1215 = vmul.f32 %v1183, 0.7978846
      %v1216 = vmul.f32 %v1184, 0.7978846
      %v1217 = vmul.f32 %v1185, 0.7978846
      %v1218 = vmul.f32 %v1186, 0.7978846
      %v1219 = vmul.f32 %v1187, 0.7978846
      %v1220 = vmul.f32 %v1188, 0.7978846
      %v1221 = vtanh.pop %v1189
      %v1222 = vtanh.pop %v1190
      %v1223 = vtanh.pop %v1191
      %v1224 = vtanh.pop %v1192
      %v1225 = vtanh.pop %v1193
      %v1226 = vtanh.pop %v1194
      %v1227 = vtanh.pop %v1195
      %v1228 = vtanh.pop %v1196
      %v1229 = vtanh.pop %v1197
      %v1230 = vtanh.pop %v1198
      %v1231 = vtanh.pop %v1199
      %v1232 = vtanh.pop %v1200
      %v1233 = vtanh.pop %v1201
      %v1234 = vtanh.pop %v1202
      %v1235 = vtanh.pop %v1203
      %v1236 = vtanh.pop %v1204
      %v1237 = vtanh.pop %v1205
      %v1238 = vtanh.pop %v1206
      %v1239 = vtanh.pop %v1207
      %v1240 = vtanh.pop %v1208
      %v1241 = vtanh.pop %v1209
      %v1242 = vtanh.pop %v1210
      %v1243 = vtanh.pop %v1211
      %v1244 = vtanh.pop %v1212
      %v1245 = vtanh.pop %v1213
      %v1246 = vtanh.pop %v1214
      %v1247 = vtanh.pop %v1215
      %v1248 = vtanh.pop %v1216
      %v1249 = vtanh.pop %v1217
      %v1250 = vtanh.pop %v1218
      %v1251 = vtanh.pop %v1219
      %v1252 = vtanh.pop %v1220
      %v1253 = vadd.f32 %v1221, 1.0
      %v1254 = vadd.f32 %v1222, 1.0
      %v1255 = vadd.f32 %v1223, 1.0
      %v1256 = vadd.f32 %v1224, 1.0
      %v1257 = vadd.f32 %v1225, 1.0
      %v1258 = vadd.f32 %v1226, 1.0
      %v1259 = vadd.f32 %v1227, 1.0
      %v1260 = vadd.f32 %v1228, 1.0
      %v1261 = vadd.f32 %v1229, 1.0
      %v1262 = vadd.f32 %v1230, 1.0
      %v1263 = vadd.f32 %v1231, 1.0
      %v1264 = vadd.f32 %v1232, 1.0
      %v1265 = vadd.f32 %v1233, 1.0
      %v1266 = vadd.f32 %v1234, 1.0
      %v1267 = vadd.f32 %v1235, 1.0
      %v1268 = vadd.f32 %v1236, 1.0
      %v1269 = vadd.f32 %v1237, 1.0
      %v1270 = vadd.f32 %v1238, 1.0
      %v1271 = vadd.f32 %v1239, 1.0
      %v1272 = vadd.f32 %v1240, 1.0
      %v1273 = vadd.f32 %v1241, 1.0
      %v1274 = vadd.f32 %v1242, 1.0
      %v1275 = vadd.f32 %v1243, 1.0
      %v1276 = vadd.f32 %v1244, 1.0
      %v1277 = vadd.f32 %v1245, 1.0
      %v1278 = vadd.f32 %v1246, 1.0
      %v1279 = vadd.f32 %v1247, 1.0
      %v1280 = vadd.f32 %v1248, 1.0
      %v1281 = vadd.f32 %v1249, 1.0
      %v1282 = vadd.f32 %v1250, 1.0
      %v1283 = vadd.f32 %v1251, 1.0
      %v1284 = vadd.f32 %v1252, 1.0
      %v1285 = vmul.f32 %v1253, 0.5
      %v1286 = vmul.f32 %v1254, 0.5
      %v1287 = vmul.f32 %v1255, 0.5
      %v1288 = vmul.f32 %v1256, 0.5
      %v1289 = vmul.f32 %v1257, 0.5
      %v1290 = vmul.f32 %v1258, 0.5
      %v1291 = vmul.f32 %v1259, 0.5
      %v1292 = vmul.f32 %v1260, 0.5
      %v1293 = vmul.f32 %v1261, 0.5
      %v1294 = vmul.f32 %v1262, 0.5
      %v1295 = vmul.f32 %v1263, 0.5
      %v1296 = vmul.f32 %v1264, 0.5
      %v1297 = vmul.f32 %v1265, 0.5
      %v1298 = vmul.f32 %v1266, 0.5
      %v1299 = vmul.f32 %v1267, 0.5
      %v1300 = vmul.f32 %v1268, 0.5
      %v1301 = vmul.f32 %v1269, 0.5
      %v1302 = vmul.f32 %v1270, 0.5
      %v1303 = vmul.f32 %v1271, 0.5
      %v1304 = vmul.f32 %v1272, 0.5
      %v1305 = vmul.f32 %v1273, 0.5
      %v1306 = vmul.f32 %v1274, 0.5
      %v1307 = vmul.f32 %v1275, 0.5
      %v1308 = vmul.f32 %v1276, 0.5
      %v1309 = vmul.f32 %v1277, 0.5
      %v1310 = vmul.f32 %v1278, 0.5
      %v1311 = vmul.f32 %v1279, 0.5
      %v1312 = vmul.f32 %v1280, 0.5
      %v1313 = vmul.f32 %v1281, 0.5
      %v1314 = vmul.f32 %v1282, 0.5
      %v1315 = vmul.f32 %v1283, 0.5
      %v1316 = vmul.f32 %v1284, 0.5
      %v1317 = vmul.f32 %v950, %v1285
      %v1318 = vmul.f32 %v952, %v1286
      %v1319 = vmul.f32 %v1023, %v1287
      %v1320 = vmul.f32 %v1025, %v1288
      %v1321 = vmul.f32 %v954, %v1289
      %v1322 = vmul.f32 %v956, %v1290
      %v1323 = vmul.f32 %v1027, %v1291
      %v1324 = vmul.f32 %v1029, %v1292
      %v1325 = vmul.f32 %v960, %v1293
      %v1326 = vmul.f32 %v962, %v1294
      %v1327 = vmul.f32 %v1033, %v1295
      %v1328 = vmul.f32 %v1035, %v1296
      %v1329 = vmul.f32 %v964, %v1297
      %v1330 = vmul.f32 %v966, %v1298
      %v1331 = vmul.f32 %v1037, %v1299
      %v1332 = vmul.f32 %v1039, %v1300
      %v1333 = vmul.f32 %v970, %v1301
      %v1334 = vmul.f32 %v972, %v1302
      %v1335 = vmul.f32 %v1043, %v1303
      %v1336 = vmul.f32 %v1045, %v1304
      %v1337 = vmul.f32 %v974, %v1305
      %v1338 = vmul.f32 %v976, %v1306
      %v1339 = vmul.f32 %v1047, %v1307
      %v1340 = vmul.f32 %v1049, %v1308
      %v1341 = vmul.f32 %v980, %v1309
      %v1342 = vmul.f32 %v982, %v1310
      %v1343 = vmul.f32 %v1053, %v1311
      %v1344 = vmul.f32 %v1055, %v1312
      %v1345 = vmul.f32 %v984, %v1313
      %v1346 = vmul.f32 %v986, %v1314
      %v1347 = vmul.f32 %v1057, %v1315
      %v1348 = vmul.f32 %v1059, %v1316
      %v1349 = vpack.c.bf16 %v1321, %v1317
      %v1350 = vpack.c.bf16 %v1322, %v1318
      %v1351 = vpack.c.bf16 %v1323, %v1319
      %v1352 = vpack.c.bf16 %v1324, %v1320
      %v1353 = vpack.c.bf16 %v1329, %v1325
      %v1354 = vpack.c.bf16 %v1330, %v1326
      %v1355 = vpack.c.bf16 %v1331, %v1327
      %v1356 = vpack.c.bf16 %v1332, %v1328
      %v1357 = vpack.c.bf16 %v1337, %v1333
      %v1358 = vpack.c.bf16 %v1338, %v1334
      %v1359 = vpack.c.bf16 %v1339, %v1335
      %v1360 = vpack.c.bf16 %v1340, %v1336
      %v1361 = vpack.c.bf16 %v1345, %v1341
      %v1362 = vpack.c.bf16 %v1346, %v1342
      %v1363 = vpack.c.bf16 %v1347, %v1343
      %v1364 = vpack.c.bf16 %v1348, %v1344
      %v1365 = vld [vmem:[%s8] sm:$0xf]
      %v1366 = vld [vmem:[%s8 + $0x4] sm:$0xf]
      %v1367 = vld [vmem:[%s8 + $0x8] sm:$0xf]
      %v1368 = vld [vmem:[%s8 + $0xc] sm:$0xf]
      %v1369 = vld [vmem:[%s8 + $0x10] sm:$0xf]
      %v1370 = vld [vmem:[%s8 + $0x14] sm:$0xf]
      %v1371 = vld [vmem:[%s8 + $0x18] sm:$0xf]
      %v1372 = vld [vmem:[%s8 + $0x1c] sm:$0xf]
      %v1373 = vld [vmem:[%s8 + $0x20] sm:$0xf]
      %v1374 = vld [vmem:[%s8 + $0x24] sm:$0xf]
      %v1375 = vld [vmem:[%s8 + $0x28] sm:$0xf]
      %v1376 = vld [vmem:[%s8 + $0x2c] sm:$0xf]
      %v1377 = vld [vmem:[%s8 + $0x30] sm:$0xf]
      %v1378 = vld [vmem:[%s8 + $0x34] sm:$0xf]
      %v1379 = vld [vmem:[%s8 + $0x38] sm:$0xf]
      %v1380 = vld [vmem:[%s8 + $0x3c] sm:$0xf]
      %v1381 = vld [vmem:[%s8 + $0x40] sm:$0xf]
      %v1382 = vld [vmem:[%s8 + $0x44] sm:$0xf]
      %v1383 = vld [vmem:[%s8 + $0x48] sm:$0xf]
      %v1384 = vld [vmem:[%s8 + $0x4c] sm:$0xf]
      %v1385 = vld [vmem:[%s8 + $0x50] sm:$0xf]
      %v1386 = vld [vmem:[%s8 + $0x54] sm:$0xf]
      %v1387 = vld [vmem:[%s8 + $0x58] sm:$0xf]
      %v1388 = vld [vmem:[%s8 + $0x5c] sm:$0xf]
      %v1389 = vld [vmem:[%s8 + $0x60] sm:$0xf]
      %v1390 = vld [vmem:[%s8 + $0x64] sm:$0xf]
      %v1391 = vld [vmem:[%s8 + $0x68] sm:$0xf]
      %v1392 = vld [vmem:[%s8 + $0x6c] sm:$0xf]
      %v1393 = vld [vmem:[%s8 + $0x70] sm:$0xf]
      %v1394 = vld [vmem:[%s8 + $0x74] sm:$0xf]
      %v1395 = vld [vmem:[%s8 + $0x78] sm:$0xf]
      %v1396 = vld [vmem:[%s8 + $0x7c] sm:$0xf]
      %v1397 = vld [vmem:[%s8 + $0x80] sm:$0xf]
      %v1398 = vld [vmem:[%s8 + $0x84] sm:$0xf]
      %v1399 = vld [vmem:[%s8 + $0x88] sm:$0xf]
      %v1400 = vld [vmem:[%s8 + $0x8c] sm:$0xf]
      %v1401 = vld [vmem:[%s8 + $0x90] sm:$0xf]
      %v1402 = vld [vmem:[%s8 + $0x94] sm:$0xf]
      %v1403 = vld [vmem:[%s8 + $0x98] sm:$0xf]
      %v1404 = vld [vmem:[%s8 + $0x9c] sm:$0xf]
      %v1405 = vld [vmem:[%s8 + $0xa0] sm:$0xf]
      %v1406 = vld [vmem:[%s8 + $0xa4] sm:$0xf]
      %v1407 = vld [vmem:[%s8 + $0xa8] sm:$0xf]
      %v1408 = vld [vmem:[%s8 + $0xac] sm:$0xf]
      %v1409 = vld [vmem:[%s8 + $0xb0] sm:$0xf]
      %v1410 = vld [vmem:[%s8 + $0xb4] sm:$0xf]
      %v1411 = vld [vmem:[%s8 + $0xb8] sm:$0xf]
      %v1412 = vld [vmem:[%s8 + $0xbc] sm:$0xf]
      %v1413 = vld [vmem:[%s8 + $0xc0] sm:$0xf]
      %v1414 = vld [vmem:[%s8 + $0xc4] sm:$0xf]
      %v1415 = vld [vmem:[%s8 + $0xc8] sm:$0xf]
      %v1416 = vld [vmem:[%s8 + $0xcc] sm:$0xf]
      %v1417 = vld [vmem:[%s8 + $0xd0] sm:$0xf]
      %v1418 = vld [vmem:[%s8 + $0xd4] sm:$0xf]
      %v1419 = vld [vmem:[%s8 + $0xd8] sm:$0xf]
      %v1420 = vld [vmem:[%s8 + $0xdc] sm:$0xf]
      %v1421 = vld [vmem:[%s8 + $0xe0] sm:$0xf]
      %v1422 = vld [vmem:[%s8 + $0xe4] sm:$0xf]
      %v1423 = vld [vmem:[%s8 + $0xe8] sm:$0xf]
      %v1424 = vld [vmem:[%s8 + $0xec] sm:$0xf]
      %v1425 = vld [vmem:[%s8 + $0xf0] sm:$0xf]
      %v1426 = vld [vmem:[%s8 + $0xf4] sm:$0xf]
      %v1427 = vld [vmem:[%s8 + $0xf8] sm:$0xf]
      %v1428 = vld [vmem:[%s8 + $0xfc] sm:$0xf]
      %v1493 = vunpack.c.l.b16 %v1365
      %v1494 = vunpack.c.l.b16 %v1366
      %v1495 = vunpack.c.l.b16 %v1367
      %v1496 = vunpack.c.l.b16 %v1368
      %v1497 = vunpack.c.l.b16 %v1369
      %v1498 = vunpack.c.l.b16 %v1370
      %v1499 = vunpack.c.l.b16 %v1371
      %v1500 = vunpack.c.l.b16 %v1372
      %v1501 = vunpack.c.l.b16 %v1373
      %v1502 = vunpack.c.l.b16 %v1374
      %v1503 = vunpack.c.l.b16 %v1375
      %v1504 = vunpack.c.l.b16 %v1376
      %v1505 = vunpack.c.l.b16 %v1377
      %v1506 = vunpack.c.l.b16 %v1378
      %v1507 = vunpack.c.l.b16 %v1379
      %v1508 = vunpack.c.l.b16 %v1380
      %v1509 = vunpack.c.l.b16 %v1381
      %v1510 = vunpack.c.l.b16 %v1382
      %v1511 = vunpack.c.l.b16 %v1383
      %v1512 = vunpack.c.l.b16 %v1384
      %v1513 = vunpack.c.l.b16 %v1385
      %v1514 = vunpack.c.l.b16 %v1386
      %v1515 = vunpack.c.l.b16 %v1387
      %v1516 = vunpack.c.l.b16 %v1388
      %v1517 = vunpack.c.l.b16 %v1389
      %v1518 = vunpack.c.l.b16 %v1390
      %v1519 = vunpack.c.l.b16 %v1391
      %v1520 = vunpack.c.l.b16 %v1392
      %v1521 = vunpack.c.l.b16 %v1393
      %v1522 = vunpack.c.l.b16 %v1394
      %v1523 = vunpack.c.l.b16 %v1395
      %v1524 = vunpack.c.l.b16 %v1396
      %v1525 = vunpack.c.l.b16 %v1397
      %v1526 = vunpack.c.l.b16 %v1398
      %v1527 = vunpack.c.l.b16 %v1399
      %v1528 = vunpack.c.l.b16 %v1400
      %v1529 = vunpack.c.l.b16 %v1401
      %v1530 = vunpack.c.l.b16 %v1402
      %v1531 = vunpack.c.l.b16 %v1403
      %v1532 = vunpack.c.l.b16 %v1404
      %v1533 = vunpack.c.l.b16 %v1405
      %v1534 = vunpack.c.l.b16 %v1406
      %v1535 = vunpack.c.l.b16 %v1407
      %v1536 = vunpack.c.l.b16 %v1408
      %v1537 = vunpack.c.l.b16 %v1409
      %v1538 = vunpack.c.l.b16 %v1410
      %v1539 = vunpack.c.l.b16 %v1411
      %v1540 = vunpack.c.l.b16 %v1412
      %v1541 = vunpack.c.l.b16 %v1413
      %v1542 = vunpack.c.l.b16 %v1414
      %v1543 = vunpack.c.l.b16 %v1415
      %v1544 = vunpack.c.l.b16 %v1416
      %v1545 = vunpack.c.l.b16 %v1417
      %v1546 = vunpack.c.l.b16 %v1418
      %v1547 = vunpack.c.l.b16 %v1419
      %v1548 = vunpack.c.l.b16 %v1420
      %v1549 = vunpack.c.l.b16 %v1421
      %v1550 = vunpack.c.l.b16 %v1422
      %v1551 = vunpack.c.l.b16 %v1423
      %v1552 = vunpack.c.l.b16 %v1424
      %v1553 = vunpack.c.l.b16 %v1425
      %v1554 = vunpack.c.l.b16 %v1426
      %v1555 = vunpack.c.l.b16 %v1427
      %v1556 = vunpack.c.l.b16 %v1428
      %v1557 = vpack.c.b16 %v1494, %v1493
      %v1558 = vpack.c.b16 %v1496, %v1495
      %v1559 = vpack.c.b16 %v1498, %v1497
      %v1560 = vpack.c.b16 %v1500, %v1499
      %v1561 = vpack.c.b16 %v1502, %v1501
      %v1562 = vpack.c.b16 %v1504, %v1503
      %v1563 = vpack.c.b16 %v1506, %v1505
      %v1564 = vpack.c.b16 %v1508, %v1507
      %v1565 = vpack.c.b16 %v1510, %v1509
      %v1566 = vpack.c.b16 %v1512, %v1511
      %v1567 = vpack.c.b16 %v1514, %v1513
      %v1568 = vpack.c.b16 %v1516, %v1515
      %v1569 = vpack.c.b16 %v1518, %v1517
      %v1570 = vpack.c.b16 %v1520, %v1519
      %v1571 = vpack.c.b16 %v1522, %v1521
      %v1572 = vpack.c.b16 %v1524, %v1523
      %v1573 = vpack.c.b16 %v1526, %v1525
      %v1574 = vpack.c.b16 %v1528, %v1527
      %v1575 = vpack.c.b16 %v1530, %v1529
      %v1576 = vpack.c.b16 %v1532, %v1531
      %v1577 = vpack.c.b16 %v1534, %v1533
      %v1578 = vpack.c.b16 %v1536, %v1535
      %v1579 = vpack.c.b16 %v1538, %v1537
      %v1580 = vpack.c.b16 %v1540, %v1539
      %v1581 = vpack.c.b16 %v1542, %v1541
      %v1582 = vpack.c.b16 %v1544, %v1543
      %v1583 = vpack.c.b16 %v1546, %v1545
      %v1584 = vpack.c.b16 %v1548, %v1547
      %v1585 = vpack.c.b16 %v1550, %v1549
      %v1586 = vpack.c.b16 %v1552, %v1551
      %v1587 = vpack.c.b16 %v1554, %v1553
      %v1588 = vpack.c.b16 %v1556, %v1555
      %1621 = vmatprep.subr.bf16.mxu0 0
      %1622 = vmatpush1.bf16.msra.mxu0 %v1557
      %1623 = vmatprep.subr.bf16.mxu0 0
      %1624 = vmatpush1.bf16.msra.mxu0 %v1558
      %1625 = vmatprep.subr.bf16.mxu0 0
      %1626 = vmatpush1.bf16.msra.mxu0 %v1559
      %1627 = vmatprep.subr.bf16.mxu0 0
      %1628 = vmatpush1.bf16.msra.mxu0 %v1560
      %1629 = vmatprep.subr.bf16.mxu0 0
      %1630 = vmatpush1.bf16.msra.mxu0 %v1561
      %1631 = vmatprep.subr.bf16.mxu0 0
      %1632 = vmatpush1.bf16.msra.mxu0 %v1562
      %1633 = vmatprep.subr.bf16.mxu0 0
      %1634 = vmatpush1.bf16.msra.mxu0 %v1563
      %1635 = vmatprep.subr.bf16.mxu0 0
      %1636 = vmatpush1.bf16.msra.mxu0 %v1564
      %1637 = vmatprep.subr.bf16.mxu0 0
      %1638 = vmatpush1.bf16.msra.mxu0 %v1565
      %1639 = vmatprep.subr.bf16.mxu0 0
      %1640 = vmatpush1.bf16.msra.mxu0 %v1566
      %1641 = vmatprep.subr.bf16.mxu0 0
      %1642 = vmatpush1.bf16.msra.mxu0 %v1567
      %1643 = vmatprep.subr.bf16.mxu0 0
      %1644 = vmatpush1.bf16.msra.mxu0 %v1568
      %1645 = vmatprep.subr.bf16.mxu0 0
      %1646 = vmatpush1.bf16.msra.mxu0 %v1569
      %1647 = vmatprep.subr.bf16.mxu0 0
      %1648 = vmatpush1.bf16.msra.mxu0 %v1570
      %1649 = vmatprep.subr.bf16.mxu0 0
      %1650 = vmatpush1.bf16.msra.mxu0 %v1571
      %1651 = vmatprep.subr.bf16.mxu0 0
      %1652 = vmatpush1.bf16.msra.mxu0 %v1572
      %1653 = vmatprep.mubr.bf16.mxu0 %v1350
      %1654 = vmatmul.mubr.bf16.gmra.mrb[0].mxu0 %v1349
      %v1655 = vpop.f32.mrb[0].mxu0
      %v1656 = vadd.f32 0.0, %v1655
      %v1657 = vpop.f32.mrb[0].mxu0
      %v1658 = vpop.f32.mrb[0].mxu0
      %v1659 = vadd.f32 0.0, %v1658
      %v1660 = vpop.f32.mrb[0].mxu0
      %1661 = vmatprep.mubr.bf16.mxu0 %v1354
      %1662 = vmatmul.mubr.bf16.gmra.mrb[0].mxu0 %v1353
      %v1663 = vpop.f32.mrb[0].mxu0
      %v1664 = vadd.f32 0.0, %v1663
      %v1665 = vpop.f32.mrb[0].mxu0
      %v1666 = vpop.f32.mrb[0].mxu0
      %v1667 = vadd.f32 0.0, %v1666
      %v1668 = vpop.f32.mrb[0].mxu0
      %1669 = vmatprep.mubr.bf16.mxu0 %v1358
      %1670 = vmatmul.mubr.bf16.gmra.mrb[0].mxu0 %v1357
      %v1671 = vpop.f32.mrb[0].mxu0
      %v1672 = vadd.f32 0.0, %v1671
      %v1673 = vpop.f32.mrb[0].mxu0
      %v1674 = vpop.f32.mrb[0].mxu0
      %v1675 = vadd.f32 0.0, %v1674
      %v1676 = vpop.f32.mrb[0].mxu0
      %1677 = vmatprep.mubr.bf16.mxu0 %v1362
      %1678 = vmatmul.mubr.bf16.gmra.mrb[0].mxu0 %v1361
      %v1679 = vpop.f32.mrb[0].mxu0
      %v1680 = vadd.f32 0.0, %v1679
      %v1681 = vpop.f32.mrb[0].mxu0
      %v1682 = vpop.f32.mrb[0].mxu0
      %v1683 = vadd.f32 0.0, %v1682
      %v1684 = vpop.f32.mrb[0].mxu0
      %1685 = vdwg.mxu0
      %1686 = vmatprep.subr.bf16.mxu0 0
      %1687 = vmatpush1.bf16.msra.mxu0 %v1573
      %1688 = vmatprep.subr.bf16.mxu0 0
      %1689 = vmatpush1.bf16.msra.mxu0 %v1574
      %1690 = vmatprep.subr.bf16.mxu0 0
      %1691 = vmatpush1.bf16.msra.mxu0 %v1575
      %1692 = vmatprep.subr.bf16.mxu0 0
      %1693 = vmatpush1.bf16.msra.mxu0 %v1576
      %1694 = vmatprep.subr.bf16.mxu0 0
      %1695 = vmatpush1.bf16.msra.mxu0 %v1577
      %1696 = vmatprep.subr.bf16.mxu0 0
      %1697 = vmatpush1.bf16.msra.mxu0 %v1578
      %1698 = vmatprep.subr.bf16.mxu0 0
      %1699 = vmatpush1.bf16.msra.mxu0 %v1579
      %1700 = vmatprep.subr.bf16.mxu0 0
      %1701 = vmatpush1.bf16.msra.mxu0 %v1580
      %1702 = vmatprep.subr.bf16.mxu0 0
      %1703 = vmatpush1.bf16.msra.mxu0 %v1581
      %1704 = vmatprep.subr.bf16.mxu0 0
      %1705 = vmatpush1.bf16.msra.mxu0 %v1582
      %1706 = vmatprep.subr.bf16.mxu0 0
      %1707 = vmatpush1.bf16.msra.mxu0 %v1583
      %1708 = vmatprep.subr.bf16.mxu0 0
      %1709 = vmatpush1.bf16.msra.mxu0 %v1584
      %1710 = vmatprep.subr.bf16.mxu0 0
      %1711 = vmatpush1.bf16.msra.mxu0 %v1585
      %1712 = vmatprep.subr.bf16.mxu0 0
      %1713 = vmatpush1.bf16.msra.mxu0 %v1586
      %1714 = vmatprep.subr.bf16.mxu0 0
      %1715 = vmatpush1.bf16.msra.mxu0 %v1587
      %1716 = vmatprep.subr.bf16.mxu0 0
      %1717 = vmatpush1.bf16.msra.mxu0 %v1588
      %1718 = vmatprep.mubr.bf16.mxu0 %v1352
      %1719 = vmatmul.mubr.bf16.gmra.mrb[0].mxu0 %v1351
      %v1720 = vpop.f32.mrb[0].mxu0
      %v1721 = vadd.f32 %v1656, %v1720
      %v1722 = vpop.f32.mrb[0].mxu0
      %v1723 = vpop.f32.mrb[0].mxu0
      %v1724 = vadd.f32 %v1659, %v1723
      %v1725 = vpop.f32.mrb[0].mxu0
      %1726 = vmatprep.mubr.bf16.mxu0 %v1356
      %1727 = vmatmul.mubr.bf16.gmra.mrb[0].mxu0 %v1355
      %v1728 = vpop.f32.mrb[0].mxu0
      %v1729 = vadd.f32 %v1664, %v1728
      %v1730 = vpop.f32.mrb[0].mxu0
      %v1731 = vpop.f32.mrb[0].mxu0
      %v1732 = vadd.f32 %v1667, %v1731
      %v1733 = vpop.f32.mrb[0].mxu0
      %1734 = vmatprep.mubr.bf16.mxu0 %v1360
      %1735 = vmatmul.mubr.bf16.gmra.mrb[0].mxu0 %v1359
      %v1736 = vpop.f32.mrb[0].mxu0
      %v1737 = vadd.f32 %v1672, %v1736
      %v1738 = vpop.f32.mrb[0].mxu0
      %v1739 = vpop.f32.mrb[0].mxu0
      %v1740 = vadd.f32 %v1675, %v1739
      %v1741 = vpop.f32.mrb[0].mxu0
      %1742 = vmatprep.mubr.bf16.mxu0 %v1364
      %1743 = vmatmul.mubr.bf16.gmra.mrb[0].mxu0 %v1363
      %v1744 = vpop.f32.mrb[0].mxu0
      %v1745 = vadd.f32 %v1680, %v1744
      %v1746 = vpop.f32.mrb[0].mxu0
      %v1747 = vpop.f32.mrb[0].mxu0
      %v1748 = vadd.f32 %v1683, %v1747
      %v1749 = vpop.f32.mrb[0].mxu0
      %1750 = vdwg.mxu0
      %v1751 = vadd.f32 %v570, %v1721
      %v1752 = vadd.f32 %v571, %v1724
      %v1753 = vadd.f32 %v572, %v1729
      %v1754 = vadd.f32 %v573, %v1732
      %v1755 = vadd.f32 %v574, %v1737
      %v1756 = vadd.f32 %v575, %v1740
      %v1757 = vadd.f32 %v576, %v1745
      %v1758 = vadd.f32 %v577, %v1748
      %v1759 = vld [vmem:[%s9] sm:$0x1]
      %v1761 = vlaneseq
      %v1762 = vshrl.u32 %v1761, 7
      %v1763 = vsub.s32 0, %v1762
      %v1764 = vrot.slane %v1759, %v1763
      %v1766 = vadd.f32 %v1751, %v1764
      %v1767 = vadd.f32 %v1752, %v1764
      %v1768 = vadd.f32 %v1753, %v1764
      %v1769 = vadd.f32 %v1754, %v1764
      %v1770 = vadd.f32 %v1755, %v1764
      %v1771 = vadd.f32 %v1756, %v1764
      %v1772 = vadd.f32 %v1757, %v1764
      %v1773 = vadd.f32 %v1758, %v1764
      %v1774 = vpack.c.bf16 %v1767, %v1766
      %v1775 = vpack.c.bf16 %v1769, %v1768
      %v1776 = vpack.c.bf16 %v1771, %v1770
      %v1777 = vpack.c.bf16 %v1773, %v1772
      %v1782 = vunpack.c.l.b16 %v1774
      %v1783 = vunpack.c.h.b16 %v1774
      %v1784 = vunpack.c.l.b16 %v1775
      %v1785 = vunpack.c.h.b16 %v1775
      %v1786 = vunpack.c.l.b16 %v1776
      %v1787 = vunpack.c.h.b16 %v1776
      %v1788 = vunpack.c.l.b16 %v1777
      %v1789 = vunpack.c.h.b16 %v1777
      %v1790 = vpack.c.b16 %v1782, %v1782
      %v1791 = vpack.c.b16 %v1783, %v1783
      %v1792 = vpack.c.b16 %v1784, %v1784
      %v1793 = vpack.c.b16 %v1785, %v1785
      %v1794 = vpack.c.b16 %v1786, %v1786
      %v1795 = vpack.c.b16 %v1787, %v1787
      %v1796 = vpack.c.b16 %v1788, %v1788
      %v1797 = vpack.c.b16 %v1789, %v1789
      %1806 = vst [vmem:[%s383] sm:$0xf] %v1790
      %1807 = vst [vmem:[%s383 + $0x4] sm:$0xf] %v1791
      %1808 = vst [vmem:[%s383 + $0x8] sm:$0xf] %v1792
      %1809 = vst [vmem:[%s383 + $0xc] sm:$0xf] %v1793
      %1810 = vst [vmem:[%s383 + $0x10] sm:$0xf] %v1794
      %1811 = vst [vmem:[%s383 + $0x14] sm:$0xf] %v1795
      %1812 = vst [vmem:[%s383 + $0x18] sm:$0xf] %v1796
      %1813 = vst [vmem:[%s383 + $0x1c] sm:$0xf] %v1797
      %s1814 = smul.u32 8, %s21
      %p1815 = scmp.lt.s32.totalorder %s1814, 15
      %s1816 = scalar_select %p1815, %s1814, 15
      %s1817 = smul.addr %s1816, 4
      %s1818 = scalar_lea.vmem %s10, %s1817
      // Predicated region
      $region61: #{encode_graph.11} parent=59 // pred_check
        %p1819 = pneg %p259
      $region62: #{encode_graph.11} parent=59 // pred_check_branch
        %1821 = sbr.rel (%p1819) target = $region64
      $region63: #{encode_graph.11} parent=59 // pred_region
        %s1822 = smul.u32 8, %s21
      $region64: #{encode_graph.11} parent=59 // pred_fallthru
        _
    $region60: #{encode_graph.11} parent=5 // pred_fallthru
      _
    %p1823 = scmp.le.s32.totalorder 2, %s16
    // Predicated region
    $region65: #{encode_graph.11} parent=5 // pred_check
      %p1824 = pneg %p1823
    $region66: #{encode_graph.11} parent=5 // pred_check_branch
      %1826 = sbr.rel (%p1824) target = $region68
    $region67: #{encode_graph.11} parent=5 // pred_region
      %s1827 = ssub.s32 %s16, 2
      // Predicated region
      $region69: #{encode_graph.11} parent=67 // pred_check
        %p1828 = pneg %p265
      $region70: #{encode_graph.11} parent=67 // pred_check_branch
        %1830 = sbr.rel (%p1828) target = $region72
      $region71: #{encode_graph.11} parent=67 // pred_region
        %s1831 = smul.u32 8, %s22
        %p1832 = scmp.lt.s32.totalorder %s1831, 15
        %s1833 = scalar_select %p1832, %s1831, 15
        %s1834 = smul.addr %s1833, 4
        %s1835 = scalar_lea.vmem %s10, %s1834
      $region72: #{encode_graph.11} parent=67 // pred_fallthru
        _
    $region68: #{encode_graph.11} parent=5 // pred_fallthru
      _
  $region6: #{encode_graph.11} parent=0 // loop_footer
    %s20 = sadd.s32 1, %s16
  $region7: #{encode_graph.11} parent=0 // loop_footer_branch
    %15 = sbr.rel target = $region3
  $region8: #{encode_graph.11} parent=0 // loop_exit
    _

// kernel: encode_graph.15
$region0: #{encode_graph.15}
  #allocation0 [shape = 'u32[]', space=smem, size = 0x4, offset = 0x4, fixed_abs, tag = 'smem constant byte address 0x4 - core index']
  #allocation1 [shape = 'u32[144,128]{1,0:T(1,128)}', space=vmem, size = 0x12000, scoped, tag = 'internal scratch']
  %s0 = inlined_call_operand.vmem [shape: bf16[2,64,128], index: 0, kind: input, shape index: {}]
  %s1 = inlined_call_operand.vmem [shape: f32[1,128], index: 1, kind: input, shape index: {}]
  %s2 = inlined_call_operand.vmem [shape: f32[1,128], index: 2, kind: input, shape index: {}]
  %s3 = inlined_call_operand.vmem [shape: bf16[128,256], index: 3, kind: input, shape index: {}]
  %s4 = inlined_call_operand.vmem [shape: f32[1,256], index: 4, kind: input, shape index: {}]
  %s5 = inlined_call_operand.vmem [shape: f32[2,1,256], index: 5, kind: output, shape index: {}]
  %s6 = sld [smem:[#allocation0]]
  $region53: #{encode_graph.15} parent=0
    _
  %s8 = ssub.s32 1, %s6
  %s9 = scalar_select 0, %s8, %s6
  loop: start=0, step=1, limit=4
  $region2: #{encode_graph.15} parent=0 // loop_pre_header
    _
  $region3: #{encode_graph.15} parent=0 // loop_header
    %s11 = sphi 0, %s15
    %p12 = scmp.ge.s32.totalorder %s11, 4
    %s21 = sphi 0, %s23
    %s24 = sphi 0, %s21
    %s25 = sphi 0, %s24
    %s41 = sphi 0, %s25
    %s45 = sphi 0, %s45
    %s47 = sphi 0, %s45
    %s48 = sphi 0, %s47
    %s62 = sphi 0, %s48
    %s66 = sphi 0, %s66
    %s68 = sphi 0, %s66
    %s69 = sphi 0, %s68
    %s83 = sphi 0, %s69
    %s87 = sphi 0, %s87
    %s89 = sphi 0, %s87
    %s90 = sphi 0, %s89
    %s104 = sphi 0, %s90
    %s108 = sphi 0, %s108
    %s110 = sphi 0, %s108
    %s111 = sphi 0, %s110
    %s125 = sphi 0, %s111
    %s131 = sphi 0, %s133
    %s134 = sphi 0, %s131
    %s135 = sphi 0, %s134
    %s151 = sphi 0, %s135
  $region4: #{encode_graph.15} parent=0 // loop_header_branch
    %14 = sbr.rel (%p12) target = $region8
  $region5: #{encode_graph.15} parent=0 // loop_body
    %s16 = ssub.s32 %s11, 1
    %s17 = ssub.s32 %s11, 2
    %s18 = sadd.s32 %s11, 1
    %s19 = ssub.s32 %s11, %s18
    %p20 = scmp.eq.s32.totalorder %s19, 0
    %s22 = sadd.s32 %s21, 1
    %s23 = scalar_select %p20, %s21, %s22
    %p26 = pneg %p20
    %p27 = scmp.eq.s32.totalorder %s11, 1
    %p28 = por %p26, %p27
    %p29 = scmp.ne.s32.totalorder %s21, %s24
    %p30 = scmp.eq.s32.totalorder %s11, 0
    %p31 = por %p29, %p30
    %p32 = scmp.ne.s32.totalorder %s21, %s24
    %p33 = scmp.eq.s32.totalorder %s16, 1
    %p34 = por %p32, %p33
    %p35 = scmp.ne.s32.totalorder %s24, %s25
    %p36 = scmp.eq.s32.totalorder %s16, 0
    %p37 = por %p35, %p36
    %p38 = scmp.ne.s32.totalorder %s24, %s25
    %p39 = scmp.eq.s32.totalorder %s17, 1
    %p40 = por %p38, %p39
    %p42 = scmp.ne.s32.totalorder %s25, %s41
    %p43 = scmp.eq.s32.totalorder %s17, 0
    %p44 = por %p42, %p43
    %s46 = sadd.s32 %s45, 1
    %p49 = scmp.eq.s32.totalorder %s11, 1
    %p50 = scmp.ne.s32.totalorder %s45, %s47
    %p51 = scmp.eq.s32.totalorder %s11, 0
    %p52 = por %p50, %p51
    %p53 = scmp.ne.s32.totalorder %s45, %s47
    %p54 = scmp.eq.s32.totalorder %s16, 1
    %p55 = por %p53, %p54
    %p56 = scmp.ne.s32.totalorder %s47, %s48
    %p57 = scmp.eq.s32.totalorder %s16, 0
    %p58 = por %p56, %p57
    %p59 = scmp.ne.s32.totalorder %s47, %s48
    %p60 = scmp.eq.s32.totalorder %s17, 1
    %p61 = por %p59, %p60
    %p63 = scmp.ne.s32.totalorder %s48, %s62
    %p64 = scmp.eq.s32.totalorder %s17, 0
    %p65 = por %p63, %p64
    %s67 = sadd.s32 %s66, 1
    %p70 = scmp.eq.s32.totalorder %s11, 1
    %p71 = scmp.ne.s32.totalorder %s66, %s68
    %p72 = scmp.eq.s32.totalorder %s11, 0
    %p73 = por %p71, %p72
    %p74 = scmp.ne.s32.totalorder %s66, %s68
    %p75 = scmp.eq.s32.totalorder %s16, 1
    %p76 = por %p74, %p75
    %p77 = scmp.ne.s32.totalorder %s68, %s69
    %p78 = scmp.eq.s32.totalorder %s16, 0
    %p79 = por %p77, %p78
    %p80 = scmp.ne.s32.totalorder %s68, %s69
    %p81 = scmp.eq.s32.totalorder %s17, 1
    %p82 = por %p80, %p81
    %p84 = scmp.ne.s32.totalorder %s69, %s83
    %p85 = scmp.eq.s32.totalorder %s17, 0
    %p86 = por %p84, %p85
    %s88 = sadd.s32 %s87, 1
    %p91 = scmp.eq.s32.totalorder %s11, 1
    %p92 = scmp.ne.s32.totalorder %s87, %s89
    %p93 = scmp.eq.s32.totalorder %s11, 0
    %p94 = por %p92, %p93
    %p95 = scmp.ne.s32.totalorder %s87, %s89
    %p96 = scmp.eq.s32.totalorder %s16, 1
    %p97 = por %p95, %p96
    %p98 = scmp.ne.s32.totalorder %s89, %s90
    %p99 = scmp.eq.s32.totalorder %s16, 0
    %p100 = por %p98, %p99
    %p101 = scmp.ne.s32.totalorder %s89, %s90
    %p102 = scmp.eq.s32.totalorder %s17, 1
    %p103 = por %p101, %p102
    %p105 = scmp.ne.s32.totalorder %s90, %s104
    %p106 = scmp.eq.s32.totalorder %s17, 0
    %p107 = por %p105, %p106
    %s109 = sadd.s32 %s108, 1
    %p112 = scmp.eq.s32.totalorder %s11, 1
    %p113 = scmp.ne.s32.totalorder %s108, %s110
    %p114 = scmp.eq.s32.totalorder %s11, 0
    %p115 = por %p113, %p114
    %p116 = scmp.ne.s32.totalorder %s108, %s110
    %p117 = scmp.eq.s32.totalorder %s16, 1
    %p118 = por %p116, %p117
    %p119 = scmp.ne.s32.totalorder %s110, %s111
    %p120 = scmp.eq.s32.totalorder %s16, 0
    %p121 = por %p119, %p120
    %p122 = scmp.ne.s32.totalorder %s110, %s111
    %p123 = scmp.eq.s32.totalorder %s17, 1
    %p124 = por %p122, %p123
    %p126 = scmp.ne.s32.totalorder %s111, %s125
    %p127 = scmp.eq.s32.totalorder %s17, 0
    %p128 = por %p126, %p127
    %s129 = ssub.s32 %s11, %s18
    %p130 = scmp.eq.s32.totalorder %s129, 0
    %s132 = sadd.s32 %s131, 1
    %s133 = scalar_select %p130, %s131, %s132
    %p136 = pneg %p130
    %p137 = scmp.eq.s32.totalorder %s11, 1
    %p138 = por %p136, %p137
    %p139 = scmp.ne.s32.totalorder %s131, %s134
    %p140 = scmp.eq.s32.totalorder %s11, 0
    %p141 = por %p139, %p140
    %p142 = scmp.ne.s32.totalorder %s131, %s134
    %p143 = scmp.eq.s32.totalorder %s16, 1
    %p144 = por %p142, %p143
    %p145 = scmp.ne.s32.totalorder %s134, %s135
    %p146 = scmp.eq.s32.totalorder %s16, 0
    %p147 = por %p145, %p146
    %p148 = scmp.ne.s32.totalorder %s134, %s135
    %p149 = scmp.eq.s32.totalorder %s17, 1
    %p150 = por %p148, %p149
    %p152 = scmp.ne.s32.totalorder %s135, %s151
    %p153 = scmp.eq.s32.totalorder %s17, 0
    %p154 = por %p152, %p153
    %p155 = scmp.le.s32.totalorder 1, %s11
    %p156 = scmp.lt.s32.totalorder %s11, 3
    %p157 = pnand %p155, %p156
    %p158 = pneg %p157
    // Predicated region
    $region9: #{encode_graph.15} parent=5 // pred_check
      _
    $region10: #{encode_graph.15} parent=5 // pred_check_branch
      %160 = sbr.rel (%p157) target = $region12
    $region11: #{encode_graph.15} parent=5 // pred_region
      %s161 = ssub.s32 %s11, 1
      // Predicated region
      $region13: #{encode_graph.15} parent=11 // pred_check
        %p162 = pneg %p58
      $region14: #{encode_graph.15} parent=11 // pred_check_branch
        %164 = sbr.rel (%p162) target = $region16
      $region15: #{encode_graph.15} parent=11 // pred_region
        _
      $region16: #{encode_graph.15} parent=11 // pred_fallthru
        _
      // Predicated region
      $region17: #{encode_graph.15} parent=11 // pred_check
        %p165 = pneg %p79
      $region18: #{encode_graph.15} parent=11 // pred_check_branch
        %167 = sbr.rel (%p165) target = $region20
      $region19: #{encode_graph.15} parent=11 // pred_region
        _
      $region20: #{encode_graph.15} parent=11 // pred_fallthru
        _
      // Predicated region
      $region21: #{encode_graph.15} parent=11 // pred_check
        %p168 = pneg %p100
      $region22: #{encode_graph.15} parent=11 // pred_check_branch
        %170 = sbr.rel (%p168) target = $region24
      $region23: #{encode_graph.15} parent=11 // pred_region
        _
      $region24: #{encode_graph.15} parent=11 // pred_fallthru
        _
      // Predicated region
      $region25: #{encode_graph.15} parent=11 // pred_check
        %p171 = pneg %p121
      $region26: #{encode_graph.15} parent=11 // pred_check_branch
        %173 = sbr.rel (%p171) target = $region28
      $region27: #{encode_graph.15} parent=11 // pred_region
        _
      $region28: #{encode_graph.15} parent=11 // pred_fallthru
        _
    $region12: #{encode_graph.15} parent=5 // pred_fallthru
      _
    %p174 = scmp.lt.s32.totalorder %s11, 2
    // Predicated region
    $region29: #{encode_graph.15} parent=5 // pred_check
      %p175 = pneg %p174
    $region30: #{encode_graph.15} parent=5 // pred_check_branch
      %177 = sbr.rel (%p175) target = $region32
    $region31: #{encode_graph.15} parent=5 // pred_region
      // Predicated region
      $region33: #{encode_graph.15} parent=31 // pred_check
        %p178 = pneg %p31
      $region34: #{encode_graph.15} parent=31 // pred_check_branch
        %180 = sbr.rel (%p178) target = $region36
      $region35: #{encode_graph.15} parent=31 // pred_region
        %p181 = scmp.lt.s32.totalorder %s11, 1
        %s182 = scalar_select %p181, %s11, 1
        %s183 = smul.addr %s182, 8
        %s184 = smul.addr %s183, 4
        %s185 = scalar_lea.vmem %s0, %s184
      $region36: #{encode_graph.15} parent=31 // pred_fallthru
        _
    $region32: #{encode_graph.15} parent=5 // pred_fallthru
      _
    %p186 = scmp.le.s32.totalorder 1, %s11
    %p187 = scmp.lt.s32.totalorder %s11, 3
    %p188 = pnand %p186, %p187
    %p189 = pneg %p188
    // Predicated region
    $region37: #{encode_graph.15} parent=5 // pred_check
      _
    $region38: #{encode_graph.15} parent=5 // pred_check_branch
      %191 = sbr.rel (%p188) target = $region40
    $region39: #{encode_graph.15} parent=5 // pred_region
      %s192 = ssub.s32 %s11, 1
      %p193 = scmp.lt.s32.totalorder %s16, 1
      %s194 = scalar_select %p193, %s16, 1
      %s195 = smul.addr %s194, 8
      %s196 = smul.addr %s195, 4
      %s197 = scalar_lea.vmem %s0, %s196
      %p198 = pneg %p37
      %p199 = pneg %p34
      %p200 = pneg %p58
      %p201 = pneg %p55
      %p202 = pneg %p79
      %p203 = pneg %p76
      %p204 = pneg %p100
      %p205 = pneg %p97
      %p206 = pneg %p121
      %p207 = pneg %p118
      %p208 = pneg %p147
      %p209 = pneg %p144
      %p210 = scmp.lt.s32.totalorder %s16, 1
      %s211 = scalar_select %p210, %s16, 1
      %s212 = smul.addr %s211, 2
      %s213 = scalar_lea.vmem %s5, %s212
      %p214 = scmp.lt.s32.totalorder %s16, 1
      %s215 = scalar_select %p214, %s16, 1
      %s216 = smul.addr %s215, 8
      %s217 = smul.addr %s216, 4
      %s218 = scalar_lea.vmem %s0, %s217
      %p219 = scmp.lt.s32.totalorder %s16, 1
      %s220 = scalar_select %p219, %s16, 1
      %s221 = smul.addr %s220, 2
      %s222 = scalar_lea.vmem %s5, %s221
      %v224 = vld [vmem:[%s218] sm:$0xf]
      %v225 = vld [vmem:[%s218 + $0x4] sm:$0xf]
      %v226 = vld [vmem:[%s218 + $0x8] sm:$0xf]
      %v227 = vld [vmem:[%s218 + $0xc] sm:$0xf]
      %v228 = vld [vmem:[%s218 + $0x10] sm:$0xf]
      %v229 = vld [vmem:[%s218 + $0x14] sm:$0xf]
      %v230 = vld [vmem:[%s218 + $0x18] sm:$0xf]
      %v231 = vld [vmem:[%s218 + $0x1c] sm:$0xf]
      %v232 = vunpack.c.l.bf16 %v224
      %v233 = vunpack.c.l.bf16 %v225
      %v234 = vunpack.c.l.bf16 %v226
      %v235 = vunpack.c.l.bf16 %v227
      %v236 = vunpack.c.l.bf16 %v228
      %v237 = vunpack.c.l.bf16 %v229
      %v238 = vunpack.c.l.bf16 %v230
      %v239 = vunpack.c.l.bf16 %v231
      %v240 = vld [vmem:[%s1] sm:$0x1]
      %v241 = vld [vmem:[%s2] sm:$0x1]
      %242 = vadd.xlane.f32.xlu0 %v232
      %v243 = vpop.xlane.xlu0 %242
      %244 = vadd.xlane.f32.xlu0 %v233
      %v245 = vpop.xlane.xlu0 %244
      %246 = vadd.xlane.f32.xlu0 %v234
      %v247 = vpop.xlane.xlu0 %246
      %248 = vadd.xlane.f32.xlu0 %v235
      %v249 = vpop.xlane.xlu0 %248
      %250 = vadd.xlane.f32.xlu0 %v236
      %v251 = vpop.xlane.xlu0 %250
      %252 = vadd.xlane.f32.xlu0 %v237
      %v253 = vpop.xlane.xlu0 %252
      %254 = vadd.xlane.f32.xlu0 %v238
      %v255 = vpop.xlane.xlu0 %254
      %256 = vadd.xlane.f32.xlu0 %v239
      %v257 = vpop.xlane.xlu0 %256
      %v258 = vrcp.pop 128.0
      %v259 = vmul.f32 %v243, %v258
      %v260 = vmul.f32 %v245, %v258
      %v261 = vmul.f32 %v247, %v258
      %v262 = vmul.f32 %v249, %v258
      %v263 = vmul.f32 %v251, %v258
      %v264 = vmul.f32 %v253, %v258
      %v265 = vmul.f32 %v255, %v258
      %v266 = vmul.f32 %v257, %v258
      %v267 = vsub.f32 %v232, %v259
      %v268 = vsub.f32 %v233, %v260
      %v269 = vsub.f32 %v234, %v261
      %v270 = vsub.f32 %v235, %v262
      %v271 = vsub.f32 %v236, %v263
      %v272 = vsub.f32 %v237, %v264
      %v273 = vsub.f32 %v238, %v265
      %v274 = vsub.f32 %v239, %v266
      %v275 = vmul.f32 %v267, %v267
      %v276 = vmul.f32 %v268, %v268
      %v277 = vmul.f32 %v269, %v269
      %v278 = vmul.f32 %v270, %v270
      %v279 = vmul.f32 %v271, %v271
      %v280 = vmul.f32 %v272, %v272
      %v281 = vmul.f32 %v273, %v273
      %v282 = vmul.f32 %v274, %v274
      %283 = vadd.xlane.f32.xlu0 %v275
      %v284 = vpop.xlane.xlu0 %283
      %285 = vadd.xlane.f32.xlu0 %v276
      %v286 = vpop.xlane.xlu0 %285
      %287 = vadd.xlane.f32.xlu0 %v277
      %v288 = vpop.xlane.xlu0 %287
      %289 = vadd.xlane.f32.xlu0 %v278
      %v290 = vpop.xlane.xlu0 %289
      %291 = vadd.xlane.f32.xlu0 %v279
      %v292 = vpop.xlane.xlu0 %291
      %293 = vadd.xlane.f32.xlu0 %v280
      %v294 = vpop.xlane.xlu0 %293
      %295 = vadd.xlane.f32.xlu0 %v281
      %v296 = vpop.xlane.xlu0 %295
      %297 = vadd.xlane.f32.xlu0 %v282
      %v298 = vpop.xlane.xlu0 %297
      %v299 = vmul.f32 %v284, %v258
      %v300 = vmul.f32 %v286, %v258
      %v301 = vmul.f32 %v288, %v258
      %v302 = vmul.f32 %v290, %v258
      %v303 = vmul.f32 %v292, %v258
      %v304 = vmul.f32 %v294, %v258
      %v305 = vmul.f32 %v296, %v258
      %v306 = vmul.f32 %v298, %v258
      %v307 = vadd.f32 %v299, 1e-05
      %v308 = vadd.f32 %v300, 1e-05
      %v309 = vadd.f32 %v301, 1e-05
      %v310 = vadd.f32 %v302, 1e-05
      %v311 = vadd.f32 %v303, 1e-05
      %v312 = vadd.f32 %v304, 1e-05
      %v313 = vadd.f32 %v305, 1e-05
      %v314 = vadd.f32 %v306, 1e-05
      %v315 = vrsqrt.pop %v307
      %v316 = vrsqrt.pop %v308
      %v317 = vrsqrt.pop %v309
      %v318 = vrsqrt.pop %v310
      %v319 = vrsqrt.pop %v311
      %v320 = vrsqrt.pop %v312
      %v321 = vrsqrt.pop %v313
      %v322 = vrsqrt.pop %v314
      %v323 = vmul.f32 %v267, %v315
      %v324 = vmul.f32 %v268, %v316
      %v325 = vmul.f32 %v269, %v317
      %v326 = vmul.f32 %v270, %v318
      %v327 = vmul.f32 %v271, %v319
      %v328 = vmul.f32 %v272, %v320
      %v329 = vmul.f32 %v273, %v321
      %v330 = vmul.f32 %v274, %v322
      %v332 = vlaneseq
      %v333 = vshrl.u32 %v332, 7
      %v334 = vsub.s32 0, %v333
      %v335 = vrot.slane %v240, %v334
      %v337 = vmul.f32 %v323, %v335
      %v338 = vmul.f32 %v324, %v335
      %v339 = vmul.f32 %v325, %v335
      %v340 = vmul.f32 %v326, %v335
      %v341 = vmul.f32 %v327, %v335
      %v342 = vmul.f32 %v328, %v335
      %v343 = vmul.f32 %v329, %v335
      %v344 = vmul.f32 %v330, %v335
      %v346 = vlaneseq
      %v347 = vshrl.u32 %v346, 7
      %v348 = vsub.s32 0, %v347
      %v349 = vrot.slane %v241, %v348
      %v351 = vadd.f32 %v337, %v349
      %v352 = vadd.f32 %v338, %v349
      %v353 = vadd.f32 %v339, %v349
      %v354 = vadd.f32 %v340, %v349
      %v355 = vadd.f32 %v341, %v349
      %v356 = vadd.f32 %v342, %v349
      %v357 = vadd.f32 %v343, %v349
      %v358 = vadd.f32 %v344, %v349
      %v359 = vadd.f32 %v351, %v352
      %v360 = vadd.f32 %v359, %v353
      %v361 = vadd.f32 %v360, %v354
      %v362 = vadd.f32 %v361, %v355
      %v363 = vadd.f32 %v362, %v356
      %v364 = vadd.f32 %v363, %v357
      %v365 = vadd.f32 %v364, %v358
      %v366 = vrot.slane %v365, 4
      %v367 = vadd.f32 %v365, %v366
      %v368 = vrot.slane %v367, 2
      %v369 = vadd.f32 %v367, %v368
      %v370 = vrot.slane %v369, 1
      %v371 = vadd.f32 %v369, %v370
      %v372 = vrcp.pop 64.0
      %v373 = vmul.f32 %v371, %v372
      %v374 = vpack.c.bf16 %v373, %v373
      %v375 = vld [vmem:[%s3] sm:$0xff]
      %v376 = vld [vmem:[%s3 + $0x8] sm:$0xff]
      %v377 = vld [vmem:[%s3 + $0x10] sm:$0xff]
      %v378 = vld [vmem:[%s3 + $0x18] sm:$0xff]
      %v379 = vld [vmem:[%s3 + $0x20] sm:$0xff]
      %v380 = vld [vmem:[%s3 + $0x28] sm:$0xff]
      %v381 = vld [vmem:[%s3 + $0x30] sm:$0xff]
      %v382 = vld [vmem:[%s3 + $0x38] sm:$0xff]
      %v383 = vld [vmem:[%s3 + $0x40] sm:$0xff]
      %v384 = vld [vmem:[%s3 + $0x48] sm:$0xff]
      %v385 = vld [vmem:[%s3 + $0x50] sm:$0xff]
      %v386 = vld [vmem:[%s3 + $0x58] sm:$0xff]
      %v387 = vld [vmem:[%s3 + $0x60] sm:$0xff]
      %v388 = vld [vmem:[%s3 + $0x68] sm:$0xff]
      %v389 = vld [vmem:[%s3 + $0x70] sm:$0xff]
      %v390 = vld [vmem:[%s3 + $0x78] sm:$0xff]
      %v391 = vld [vmem:[%s4] sm:$0x3]
      %v408 = vunpack.c.l.b16 %v375
      %v409 = vunpack.c.h.b16 %v375
      %v410 = vunpack.c.l.b16 %v376
      %v411 = vunpack.c.h.b16 %v376
      %v412 = vunpack.c.l.b16 %v377
      %v413 = vunpack.c.h.b16 %v377
      %v414 = vunpack.c.l.b16 %v378
      %v415 = vunpack.c.h.b16 %v378
      %v416 = vunpack.c.l.b16 %v379
      %v417 = vunpack.c.h.b16 %v379
      %v418 = vunpack.c.l.b16 %v380
      %v419 = vunpack.c.h.b16 %v380
      %v420 = vunpack.c.l.b16 %v381
      %v421 = vunpack.c.h.b16 %v381
      %v422 = vunpack.c.l.b16 %v382
      %v423 = vunpack.c.h.b16 %v382
      %v424 = vunpack.c.l.b16 %v383
      %v425 = vunpack.c.h.b16 %v383
      %v426 = vunpack.c.l.b16 %v384
      %v427 = vunpack.c.h.b16 %v384
      %v428 = vunpack.c.l.b16 %v385
      %v429 = vunpack.c.h.b16 %v385
      %v430 = vunpack.c.l.b16 %v386
      %v431 = vunpack.c.h.b16 %v386
      %v432 = vunpack.c.l.b16 %v387
      %v433 = vunpack.c.h.b16 %v387
      %v434 = vunpack.c.l.b16 %v388
      %v435 = vunpack.c.h.b16 %v388
      %v436 = vunpack.c.l.b16 %v389
      %v437 = vunpack.c.h.b16 %v389
      %v438 = vunpack.c.l.b16 %v390
      %v439 = vunpack.c.h.b16 %v390
      %v440 = vpack.c.b16 %v410, %v408
      %v441 = vpack.c.b16 %v411, %v409
      %v442 = vpack.c.b16 %v414, %v412
      %v443 = vpack.c.b16 %v415, %v413
      %v444 = vpack.c.b16 %v418, %v416
      %v445 = vpack.c.b16 %v419, %v417
      %v446 = vpack.c.b16 %v422, %v420
      %v447 = vpack.c.b16 %v423, %v421
      %v448 = vpack.c.b16 %v426, %v424
      %v449 = vpack.c.b16 %v427, %v425
      %v450 = vpack.c.b16 %v430, %v428
      %v451 = vpack.c.b16 %v431, %v429
      %v452 = vpack.c.b16 %v434, %v432
      %v453 = vpack.c.b16 %v435, %v433
      %v454 = vpack.c.b16 %v438, %v436
      %v455 = vpack.c.b16 %v439, %v437
      %v473 = vlaneseq
      %v474 = vshrl.u32 %v473, 7
      %v475 = vsub.s32 0, %v474
      %v476 = vrot.slane %v391, %v475
      %v477 = vlaneseq
      %v478 = vshrl.u32 %v477, 7
      %v479 = vsub.s32 1, %v478
      %v480 = vrot.slane %v391, %v479
      %483 = vmatprep.subr.bf16.mxu0 %v441
      %484 = vmatpush1.bf16.msra.mxu0 %v440
      %485 = vmatprep.subr.bf16.mxu0 %v443
      %486 = vmatpush1.bf16.msra.mxu0 %v442
      %487 = vmatprep.subr.bf16.mxu0 %v445
      %488 = vmatpush1.bf16.msra.mxu0 %v444
      %489 = vmatprep.subr.bf16.mxu0 %v447
      %490 = vmatpush1.bf16.msra.mxu0 %v446
      %491 = vmatprep.subr.bf16.mxu0 %v449
      %492 = vmatpush1.bf16.msra.mxu0 %v448
      %493 = vmatprep.subr.bf16.mxu0 %v451
      %494 = vmatpush1.bf16.msra.mxu0 %v450
      %495 = vmatprep.subr.bf16.mxu0 %v453
      %496 = vmatpush1.bf16.msra.mxu0 %v452
      %497 = vmatprep.subr.bf16.mxu0 %v455
      %498 = vmatpush1.bf16.msra.mxu0 %v454
      %499 = vmatprep.subr.bf16.mxu0 0
      %500 = vmatpush1.bf16.msra.mxu0 0
      %501 = vmatprep.subr.bf16.mxu0 0
      %502 = vmatpush1.bf16.msra.mxu0 0
      %503 = vmatprep.subr.bf16.mxu0 0
      %504 = vmatpush1.bf16.msra.mxu0 0
      %505 = vmatprep.subr.bf16.mxu0 0
      %506 = vmatpush1.bf16.msra.mxu0 0
      %507 = vmatprep.subr.bf16.mxu0 0
      %508 = vmatpush1.bf16.msra.mxu0 0
      %509 = vmatprep.subr.bf16.mxu0 0
      %510 = vmatpush1.bf16.msra.mxu0 0
      %511 = vmatprep.subr.bf16.mxu0 0
      %512 = vmatpush1.bf16.msra.mxu0 0
      %513 = vmatprep.subr.bf16.mxu0 0
      %514 = vmatpush1.bf16.msra.mxu0 0
      %515 = vmatprep.mubr.bf16.mxu0 0
      %516 = vmatmul.mubr.bf16.gmra.mrb[0].mxu0 %v374
      %v517 = vpop.f32.mrb[0].mxu0
      %v518 = vadd.f32 %v476, %v517
      %v519 = vpop.f32.mrb[0].mxu0
      %v520 = vadd.f32 %v480, %v519
      %v521 = vpop.f32.mrb[0].mxu0
      %v522 = vpop.f32.mrb[0].mxu0
      %523 = vdwg.mxu0
      %v524 = vmul.f32 %v518, %v518
      %v525 = vmul.f32 %v520, %v520
      %vm526 = vcmask 1040384
      %v527 = vsel %vm526, %v524, 0.0
      %v528 = vsel %vm526, %v525, 0.0
      %v529 = vadd.f32 %v527, %v528
      %530 = vadd.xlane.f32.xlu0 %v529
      %v531 = vpop.xlane.xlu0 %530
      %v532 = vadd.f32 %v531, 1e-12
      %v533 = vrsqrt.pop %v532
      %v534 = vmul.f32 %v518, %v533
      %v535 = vmul.f32 %v520, %v533
      %v538 = vcombine.low %v534, %v535
      %v540 = vunpack.c.l.s4 1966171168
      %v541 = vunpack.c.0.s8 %v540
      %v542 = vlaneseq
      %v543 = vshrl.u32 %v542, 7
      %v544 = vsub.s32 %v541, %v543
      %v545 = vrot.slane %v538, %v544
      %v547 = vunpack.c.l.s4 1966171168
      %v548 = vunpack.c.0.s8 %v547
      %v549 = vlaneseq
      %v550 = vshrl.u32 %v549, 7
      %v551 = vsub.s32 %v548, %v550
      %v552 = vrot.slane %v545, %v551
      %v554 = vlaneseq
      %vm555 = vcmp.ge.s32.totalorder %v554, 0
      %vm556 = vcmp.lt.s32.totalorder %v554, 256
      %vm557 = vmand %vm555, %vm556
      %558 = vst.msk [vmem:[%s222] sm:$0x3] %vm557, %v552
      %p559 = scmp.lt.s32.totalorder %s16, 1
      %s560 = scalar_select %p559, %s16, 1
      %s561 = smul.addr %s560, 2
      %s562 = scalar_lea.vmem %s5, %s561
      // Predicated region
      $region41: #{encode_graph.15} parent=39 // pred_check
        %p563 = pneg %p144
      $region42: #{encode_graph.15} parent=39 // pred_check_branch
        %565 = sbr.rel (%p563) target = $region44
      $region43: #{encode_graph.15} parent=39 // pred_region
        _
      $region44: #{encode_graph.15} parent=39 // pred_fallthru
        _
    $region40: #{encode_graph.15} parent=5 // pred_fallthru
      _
    %p566 = scmp.le.s32.totalorder 2, %s11
    // Predicated region
    $region45: #{encode_graph.15} parent=5 // pred_check
      %p567 = pneg %p566
    $region46: #{encode_graph.15} parent=5 // pred_check_branch
      %569 = sbr.rel (%p567) target = $region48
    $region47: #{encode_graph.15} parent=5 // pred_region
      %s570 = ssub.s32 %s11, 2
      // Predicated region
      $region49: #{encode_graph.15} parent=47 // pred_check
        %p571 = pneg %p150
      $region50: #{encode_graph.15} parent=47 // pred_check_branch
        %573 = sbr.rel (%p571) target = $region52
      $region51: #{encode_graph.15} parent=47 // pred_region
        %p574 = scmp.lt.s32.totalorder %s17, 1
        %s575 = scalar_select %p574, %s17, 1
        %s576 = smul.addr %s575, 2
        %s577 = scalar_lea.vmem %s5, %s576
      $region52: #{encode_graph.15} parent=47 // pred_fallthru
        _
    $region48: #{encode_graph.15} parent=5 // pred_fallthru
      _
  $region6: #{encode_graph.15} parent=0 // loop_footer
    %s15 = sadd.s32 1, %s11
  $region7: #{encode_graph.15} parent=0 // loop_footer_branch
    %10 = sbr.rel target = $region3
  $region8: #{encode_graph.15} parent=0 // loop_exit
    _

</llo_original>
